<compile_context>
chip_gen: v7x
topology: tpu7x:2x2x1
jax: 0.10.0
libtpu: 0.0.40
codegen_flags: <defaults>
</compile_context>

<pallas_src>
import functools

import jax
import jax.numpy as jnp
from jax import lax
from jax.experimental import pallas as pl
from jax.experimental.pallas import tpu as pltpu

# ---------------- small, module-consistent config ----------------
DIM       = 16            # C (input channel dim of the module)
HEADS     = 2
DIM_HEAD  = 16
INNER     = HEADS * DIM_HEAD     # inner_dim = 32
SLICE_NUM = 8
H, W      = 8, 4
N         = H * W                # 32 tokens
KERNEL    = 3
BATCH     = 2
KKC       = KERNEL * KERNEL * DIM   # 144

# Mamba2 (hydra) hyperparameters: d_model=INNER, d_state=64, d_conv=3, expand=2, headdim=32
M_EXPAND  = 2
M_DSTATE  = 64
M_DCONV   = 3
M_HEADDIM = 32
M_DINNER  = M_EXPAND * INNER                    # 64
M_NHEADS  = M_DINNER // M_HEADDIM               # 2
M_CONVDIM = M_DINNER + 2 * M_DSTATE             # 192
M_DINPROJ = 2 * M_DINNER + 2 * M_DSTATE + M_NHEADS   # 258


# ---------------- fused Pallas kernel (one batch element per grid step) ------
def fused_kernel(patch_ref, wcat_ref, bcat_ref, wsl_ref, bsl_ref,
                 inproj_ref, dtbias_ref, convw_ref, convb_ref,
                 negA_ref, d_ref, normw_ref, outproj_ref,
                 wout_ref, bout_ref,
                 out_ref, inp_tok_ref, outp_tok_ref):
    f32 = jnp.float32
    G = SLICE_NUM

    # ---------- encode: fused fx / x projection (conv as im2col matmul) ------
    patches = patch_ref[0]                                        # (N, 144)
    proj = jnp.dot(patches, wcat_ref[...],
                   preferred_element_type=f32) + bcat_ref[...]    # (N, 64)
    fx = proj[:, :INNER]                                          # (N, 32)
    xm = proj[:, INNER:]                                          # (N, 32)

    # slice logits for BOTH heads from one block-diagonal matmul
    # (temperature 1/clamp(t) already folded into W and b at init)
    logits = jnp.dot(xm, wsl_ref[...],
                     preferred_element_type=f32) + bsl_ref[...]   # (N, 16)

    # per-head (segmented) softmax over lanes, no sub-vreg slicing
    col = lax.broadcasted_iota(jnp.int32, logits.shape, 1)
    head0 = col < G
    neg = jnp.full_like(logits, -1e30)
    m0 = jnp.max(jnp.where(head0, logits, neg), axis=-1, keepdims=True)
    m1 = jnp.max(jnp.where(head0, neg, logits), axis=-1, keepdims=True)
    e = jnp.exp(logits - jnp.where(head0, m0, m1))
    s0 = jnp.sum(jnp.where(head0, e, 0.0), axis=-1, keepdims=True)
    s1 = jnp.sum(jnp.where(head0, 0.0, e), axis=-1, keepdims=True)
    sw = e * pl.reciprocal(jnp.where(head0, s0, s1), approx=True)  # (N, 16)

    # slice tokens: tok_full[h*G+g, :] = sum_n sw[n, h*G+g] * fx[n, :]
    tok_full = lax.dot_general(sw, fx, (((0,), (0,)), ((), ())),
                               preferred_element_type=f32)         # (16, 32)
    # slice norm lands directly as a column (no transpose): sw^T @ ones
    norm_rep = lax.dot_general(sw, jnp.ones((sw.shape[0], G), f32),
                               (((0,), (0,)), ((), ())),
                               preferred_element_type=f32)         # (16, 8)
    inv_norm = pl.reciprocal(norm_rep[:, 0:1] + 1e-5, approx=True)  # (16, 1)
    tok_n = tok_full * inv_norm

    # lane-dense slice tokens: row g = [head0 chans | head1 chans]  -> (G, 32)
    lane_i = lax.broadcasted_iota(jnp.int32, (G, INNER), 1)
    tok_dense = jnp.where(lane_i < DIM_HEAD, tok_n[0:G, :], tok_n[G:2 * G, :])
    inp_tok_ref[0] = tok_dense

    # ---------- Mamba2 (hydra) over the 8 slice tokens (quadratic SSD) -------
    zxbcdt = jnp.dot(tok_dense, inproj_ref[...],
                     preferred_element_type=f32)                   # (G, 258)
    z = zxbcdt[:, :M_DINNER]                                       # (G, 64)
    xbc = zxbcdt[:, M_DINNER:M_DINNER + M_CONVDIM]                 # (G, 192)
    dt_raw = zxbcdt[:, M_DINNER + M_CONVDIM:]                      # (G, 2)
    dtb = dt_raw + dtbias_ref[...]
    dt = jnp.maximum(dtb, 0.0) + jnp.log(1.0 + jnp.exp(-jnp.abs(dtb)))  # softplus

    # causal depthwise conv1d over the token axis via shift matrices (MXU)
    ri = lax.broadcasted_iota(jnp.int32, (G, G), 0)
    ci = lax.broadcasted_iota(jnp.int32, (G, G), 1)
    s1m = (ci == ri - 1).astype(f32)
    s2m = (ci == ri - 2).astype(f32)
    cw = convw_ref[...]                                            # (3, 192)
    conv = (xbc * cw[2:3, :]
            + jnp.dot(s1m, xbc, preferred_element_type=f32) * cw[1:2, :]
            + jnp.dot(s2m, xbc, preferred_element_type=f32) * cw[0:1, :])
    xbc_a = conv + convb_ref[...]
    xbc_a = xbc_a * (1.0 / (1.0 + jnp.exp(-xbc_a)))                # SiLU

    xin = xbc_a[:, :M_DINNER]                                      # (G, 64)
    b_mat = xbc_a[:, M_DINNER:M_DINNER + M_DSTATE]                 # (G, 64)
    c_mat = xbc_a[:, M_DINNER + M_DSTATE:]                         # (G, 64)

    lt = ci <= ri
    ltf = lt.astype(f32)                                           # lower-tri ones
    utf = (ri <= ci).astype(f32)                                   # upper-tri ones
    gmat = lax.dot_general(c_mat, b_mat, (((1,), (1,)), ((), ())),
                           preferred_element_type=f32)             # (G, G) C_t.B_s

    negA = negA_ref[...]                                           # (1, 2)
    dvec = d_ref[...]                                              # (1, 2)
    normw = normw_ref[...]                                         # (1, 64)
    outproj = outproj_ref[...]                                     # (64, 32)

    gated = []
    ss = jnp.zeros((G, 1), f32)
    for h in range(M_NHEADS):                                      # static unroll (2)
        dt_h = dt[:, h:h + 1]                                      # (G, 1)
        a_t = dt_h * negA[:, h:h + 1]                              # (G, 1) = dt_t * A_h
        a_rep = jnp.broadcast_to(a_t, (G, G))                      # (G, G)
        ca_col = jnp.dot(ltf, a_rep, preferred_element_type=f32)   # cA[t] per row
        ca_row = lax.dot_general(a_rep, utf, (((0,), (0,)), ((), ())),
                                 preferred_element_type=f32)       # cA[s] per lane
        ldec = jnp.exp(jnp.where(lt, ca_col - ca_row, -1e30))      # decay L[t,s]
        x_h = xin[:, h * M_HEADDIM:(h + 1) * M_HEADDIM]            # (G, 32)
        y_h = jnp.dot(gmat * ldec, x_h * dt_h,
                      preferred_element_type=f32)                  # (G, 32)
        y_h = y_h + dvec[:, h:h + 1] * x_h                         # + D * x
        z_h = z[:, h * M_HEADDIM:(h + 1) * M_HEADDIM]
        g_h = y_h * (z_h * (1.0 / (1.0 + jnp.exp(-z_h))))          # y * silu(z)
        gated.append(g_h)
        ss = ss + jnp.sum(g_h * g_h, axis=-1, keepdims=True)

    # gated RMSNorm over the full d_inner, then output projection (64 -> 32)
    scale = lax.rsqrt(ss * (1.0 / M_DINNER) + 1e-5)                # (G, 1)
    out_seq = jnp.zeros((G, INNER), f32)
    for h in range(M_NHEADS):
        yn_h = gated[h] * scale * normw[:, h * M_HEADDIM:(h + 1) * M_HEADDIM]
        out_seq = out_seq + jnp.dot(
            yn_h, outproj[h * M_HEADDIM:(h + 1) * M_HEADDIM, :],
            preferred_element_type=f32)                            # (G, 32)
    outp_tok_ref[0] = out_seq

    # ---------- decode: de-slice per head + fused output Linear --------------
    blk_top = jnp.where(lane_i < DIM_HEAD, out_seq, 0.0)           # head-0 chans
    blk_bot = jnp.where(lane_i < DIM_HEAD, 0.0, out_seq)           # head-1 chans
    outx = (jnp.dot(sw[:, :G], blk_top, preferred_element_type=f32)
            + jnp.dot(sw[:, G:], blk_bot, preferred_element_type=f32))  # (N, 32)
    out = jnp.dot(outx, wout_ref[...],
                  preferred_element_type=f32) + bout_ref[...]      # (N, 16)
    out_ref[0] = out.astype(out_ref.dtype)


# ---------------- pallas_call wrapper ----------------
def fused_forward_call(patches, p):
    b = patches.shape[0]
    kc = patches.shape[2]

    def rep2(i):
        return (0, 0)

    in_specs = [
        pl.BlockSpec((1, N, kc), lambda i: (i, 0, 0)),
        pl.BlockSpec((kc, 2 * INNER), rep2),
        pl.BlockSpec((1, 2 * INNER), rep2),
        pl.BlockSpec((INNER, HEADS * SLICE_NUM), rep2),
        pl.BlockSpec((1, HEADS * SLICE_NUM), rep2),
        pl.BlockSpec((INNER, M_DINPROJ), rep2),
        pl.BlockSpec((1, M_NHEADS), rep2),
        pl.BlockSpec((M_DCONV, M_CONVDIM), rep2),
        pl.BlockSpec((1, M_CONVDIM), rep2),
        pl.BlockSpec((1, M_NHEADS), rep2),
        pl.BlockSpec((1, M_NHEADS), rep2),
        pl.BlockSpec((1, M_DINNER), rep2),
        pl.BlockSpec((M_DINNER, INNER), rep2),
        pl.BlockSpec((INNER, DIM), rep2),
        pl.BlockSpec((1, DIM), rep2),
    ]
    out_specs = (
        pl.BlockSpec((1, N, DIM), lambda i: (i, 0, 0)),
        pl.BlockSpec((1, SLICE_NUM, INNER), lambda i: (i, 0, 0)),
        pl.BlockSpec((1, SLICE_NUM, INNER), lambda i: (i, 0, 0)),
    )
    out_shape = (
        jax.ShapeDtypeStruct((b, N, DIM), jnp.float32),
        jax.ShapeDtypeStruct((b, SLICE_NUM, INNER), jnp.float32),
        jax.ShapeDtypeStruct((b, SLICE_NUM, INNER), jnp.float32),
    )
    return pl.pallas_call(
        fused_kernel,
        out_shape=out_shape,
        grid_spec=pltpu.PrefetchScalarGridSpec(
            num_scalar_prefetch=0, grid=(b,),
            in_specs=in_specs, out_specs=out_specs),
        compiler_params=pltpu.CompilerParams(
            dimension_semantics=("parallel",)),
    )(patches, p['wcat'], p['bcat'], p['wsl_blk'], p['bsl_cat'],
      p['m_inproj'], p['m_dtbias'], p['m_convw'], p['m_convb'],
      p['m_negA'], p['m_D'], p['m_normw'], p['m_outproj'],
      p['wout'], p['bout'])


# ---------------- glue: im2col (host-side data movement only) ----------------
def im2col(x_bhwc, k):
    b, h, w, c = x_bhwc.shape
    pad = k // 2
    xp = jnp.pad(x_bhwc, ((0, 0), (pad, pad), (pad, pad), (0, 0)))
    cols = []
    for kh in range(k):
        for kw in range(k):
            cols.append(xp[:, kh:kh + h, kw:kw + w, :])
    patches = jnp.stack(cols, axis=3)                  # (B, H, W, k*k, C)
    return patches.reshape(b, h * w, k * k * c)


# ---------------- full forward ----------------
def latent_ssm_forward(params, x):
    b, n, c = x.shape
    x_img = x.reshape(b, H, W, c)                      # NHWC
    patches = im2col(x_img, KERNEL)                    # (B, N, K*K*C)

    out, inp_dense, outp_dense = fused_forward_call(patches, params)

    # (B, G, (h c)) -> (B, h, G, c), matching the module's returned tensors
    inp_tok = inp_dense.reshape(b, SLICE_NUM, HEADS, DIM_HEAD).transpose(0, 2, 1, 3)
    outp_tok = outp_dense.reshape(b, SLICE_NUM, HEADS, DIM_HEAD).transpose(0, 2, 1, 3)
    return out, inp_tok, outp_tok


# ---------------- deterministic parameter init ----------------
def init_params(key):
    ks = jax.random.split(key, 13)

    def nrm(k, shape, s):
        return jax.random.normal(k, shape, jnp.float32) * s

    # conv weights in torch layout (O, I, kh, kw), biases (O,)
    wfx = nrm(ks[0], (INNER, DIM, KERNEL, KERNEL), 0.1)
    bfx = nrm(ks[1], (INNER,), 0.02)
    wx = nrm(ks[2], (INNER, DIM, KERNEL, KERNEL), 0.1)
    bx = nrm(ks[3], (INNER,), 0.02)

    # in_project_slice: orthogonal rows (torch.nn.init.orthogonal_), weight (G, dh)
    q, _ = jnp.linalg.qr(jax.random.normal(ks[4], (DIM_HEAD, SLICE_NUM), jnp.float32))
    wsl = q.T                                          # (G, dh), orthonormal rows
    bsl = nrm(ks[5], (SLICE_NUM,), 0.02)

    temperature = jnp.full((HEADS,), 0.5, jnp.float32)            # nn.Parameter init
    inv_temp = 1.0 / jnp.clip(temperature, 0.1, 5.0)              # clamp(min=0.1,max=5)

    wout = nrm(ks[6], (DIM, INNER), 0.05)              # to_out Linear (out, in)
    bout = nrm(ks[7], (DIM,), 0.02)

    # Mamba2 (hydra) raw parameters
    in_proj_w = nrm(ks[8], (M_DINPROJ, INNER), 0.05)
    conv_w = nrm(ks[9], (M_CONVDIM, M_DCONV), 0.1)
    conv_b = jnp.zeros((M_CONVDIM,), jnp.float32)
    dt_bias = jnp.log(jnp.expm1(jax.random.uniform(
        ks[10], (M_NHEADS,), minval=1e-3, maxval=0.1)))
    A_log = jnp.log(jax.random.uniform(ks[11], (M_NHEADS,), minval=1.0, maxval=16.0))
    Dp = jnp.ones((M_NHEADS,), jnp.float32)
    norm_w = jnp.ones((M_DINNER,), jnp.float32)
    out_proj_w = nrm(ks[12], (INNER, M_DINNER), 0.05)

    # ---- repack for the fused Pallas kernel ----
    # im2col row order is (kh, kw, cin)
    wfx_mat = wfx.transpose(2, 3, 1, 0).reshape(KKC, INNER)
    wx_mat = wx.transpose(2, 3, 1, 0).reshape(KKC, INNER)
    wcat = jnp.concatenate([wfx_mat, wx_mat], axis=1)              # (144, 64)
    bcat = jnp.concatenate([bfx, bx]).reshape(1, 2 * INNER)

    # block-diagonal slice projection; PyTorch divides (x W^T + b) by temp,
    # so both W and b are pre-scaled by 1/clamp(temperature) per head.
    wslT = wsl.T                                                   # (dh, G)
    wsl_blk = jnp.zeros((INNER, HEADS * SLICE_NUM), jnp.float32)
    bsl_cat = jnp.zeros((1, HEADS * SLICE_NUM), jnp.float32)
    for h in range(HEADS):
        wsl_blk = wsl_blk.at[h * DIM_HEAD:(h + 1) * DIM_HEAD,
                             h * SLICE_NUM:(h + 1) * SLICE_NUM].set(wslT * inv_temp[h])
        bsl_cat = bsl_cat.at[0, h * SLICE_NUM:(h + 1) * SLICE_NUM].set(bsl * inv_temp[h])

    return dict(
        wcat=wcat, bcat=bcat,
        wsl_blk=wsl_blk, bsl_cat=bsl_cat,
        m_inproj=in_proj_w.T,                       # (32, 258)
        m_dtbias=dt_bias.reshape(1, M_NHEADS),
        m_convw=conv_w.T,                           # (3, 192)
        m_convb=conv_b.reshape(1, M_CONVDIM),
        m_negA=(-jnp.exp(A_log)).reshape(1, M_NHEADS),
        m_D=Dp.reshape(1, M_NHEADS),
        m_normw=norm_w.reshape(1, M_DINNER),
        m_outproj=out_proj_w.T,                     # (64, 32)
        wout=wout.T, bout=bout.reshape(1, DIM),
    )


if __name__ == "__main__":
    key = jax.random.PRNGKey(0)
    pkey, xkey = jax.random.split(key)
    params = init_params(pkey)
    x = jax.random.normal(xkey, (BATCH, N, DIM), jnp.float32)   # (B, N=H*W, C)

    fwd = jax.jit(functools.partial(latent_ssm_forward, params))
    out, inp_tok, outp_tok = fwd(x)
    jax.block_until_ready((out, inp_tok, outp_tok))

    assert out.shape == (BATCH, N, DIM)
    assert inp_tok.shape == (BATCH, HEADS, SLICE_NUM, DIM_HEAD)
    assert outp_tok.shape == (BATCH, HEADS, SLICE_NUM, DIM_HEAD)
    assert bool(jnp.all(jnp.isfinite(out)))
    print("KERNEL_OK")
</pallas_src>

<mosaic_0001>
module attributes {stable_mosaic.version = 11 : i64} {
  func.func @fused_kernel(%arg0: i32, %arg1: memref<1x32x144xf32, #tpu.memory_space<vmem>>, %arg2: memref<144x64xf32, #tpu.memory_space<vmem>>, %arg3: memref<1x64xf32, #tpu.memory_space<vmem>>, %arg4: memref<32x16xf32, #tpu.memory_space<vmem>>, %arg5: memref<1x16xf32, #tpu.memory_space<vmem>>, %arg6: memref<32x258xf32, #tpu.memory_space<vmem>>, %arg7: memref<1x2xf32, #tpu.memory_space<vmem>>, %arg8: memref<3x192xf32, #tpu.memory_space<vmem>>, %arg9: memref<1x192xf32, #tpu.memory_space<vmem>>, %arg10: memref<1x2xf32, #tpu.memory_space<vmem>>, %arg11: memref<1x2xf32, #tpu.memory_space<vmem>>, %arg12: memref<1x64xf32, #tpu.memory_space<vmem>>, %arg13: memref<64x32xf32, #tpu.memory_space<vmem>>, %arg14: memref<32x16xf32, #tpu.memory_space<vmem>>, %arg15: memref<1x16xf32, #tpu.memory_space<vmem>>, %arg16: memref<1x32x16xf32, #tpu.memory_space<vmem>>, %arg17: memref<1x8x32xf32, #tpu.memory_space<vmem>>, %arg18: memref<1x8x32xf32, #tpu.memory_space<vmem>>) attributes {dimension_semantics = [#tpu.dimension_semantics<parallel>], iteration_bounds = array<i64: 2>, scalar_prefetch = 0 : i64, scratch_operands = 0 : i64, tpu.core_type = #tpu.core_type<tc>, window_params = [{transform_indices = @transform_0, window_bounds = array<i64: 1, 32, 144>}, {pipeline_mode = #tpu.pipeline_mode<synchronous>, transform_indices = @transform_1, window_bounds = array<i64: 144, 64>}, {pipeline_mode = #tpu.pipeline_mode<synchronous>, transform_indices = @transform_2, window_bounds = array<i64: 1, 64>}, {pipeline_mode = #tpu.pipeline_mode<synchronous>, transform_indices = @transform_3, window_bounds = array<i64: 32, 16>}, {pipeline_mode = #tpu.pipeline_mode<synchronous>, transform_indices = @transform_4, window_bounds = array<i64: 1, 16>}, {pipeline_mode = #tpu.pipeline_mode<synchronous>, transform_indices = @transform_5, window_bounds = array<i64: 32, 258>}, {pipeline_mode = #tpu.pipeline_mode<synchronous>, transform_indices = @transform_6, window_bounds = array<i64: 1, 2>}, {pipeline_mode = #tpu.pipeline_mode<synchronous>, transform_indices = @transform_7, window_bounds = array<i64: 3, 192>}, {pipeline_mode = #tpu.pipeline_mode<synchronous>, transform_indices = @transform_8, window_bounds = array<i64: 1, 192>}, {pipeline_mode = #tpu.pipeline_mode<synchronous>, transform_indices = @transform_9, window_bounds = array<i64: 1, 2>}, {pipeline_mode = #tpu.pipeline_mode<synchronous>, transform_indices = @transform_10, window_bounds = array<i64: 1, 2>}, {pipeline_mode = #tpu.pipeline_mode<synchronous>, transform_indices = @transform_11, window_bounds = array<i64: 1, 64>}, {pipeline_mode = #tpu.pipeline_mode<synchronous>, transform_indices = @transform_12, window_bounds = array<i64: 64, 32>}, {pipeline_mode = #tpu.pipeline_mode<synchronous>, transform_indices = @transform_13, window_bounds = array<i64: 32, 16>}, {pipeline_mode = #tpu.pipeline_mode<synchronous>, transform_indices = @transform_14, window_bounds = array<i64: 1, 16>}, {transform_indices = @transform_15, window_bounds = array<i64: 1, 32, 16>}, {transform_indices = @transform_16, window_bounds = array<i64: 1, 8, 32>}, {transform_indices = @transform_17, window_bounds = array<i64: 1, 8, 32>}]} {
    %c0 = arith.constant 0 : index
    %c0_0 = arith.constant 0 : index
    %c0_1 = arith.constant 0 : index
    %0 = vector.load %arg1[%c0, %c0_0, %c0_1] : memref<1x32x144xf32, #tpu.memory_space<vmem>>, vector<1x32x144xf32>
    %1 = vector.shape_cast %0 : vector<1x32x144xf32> to vector<32x144xf32>
    %c0_2 = arith.constant 0 : index
    %c0_3 = arith.constant 0 : index
    %2 = vector.load %arg2[%c0_2, %c0_3] : memref<144x64xf32, #tpu.memory_space<vmem>>, vector<144x64xf32>
    %cst = arith.constant dense<0.000000e+00> : vector<32x64xf32>
    %3 = tpu.matmul %1, %2, %cst {dimension_numbers = #tpu.dot_dimension_numbers<[1], [0], [0], [1], [0, 0, 1, 1], [], []>} : vector<32x144xf32>, vector<144x64xf32>, vector<32x64xf32> -> vector<32x64xf32>
    %c0_4 = arith.constant 0 : index
    %c0_5 = arith.constant 0 : index
    %4 = vector.load %arg3[%c0_4, %c0_5] : memref<1x64xf32, #tpu.memory_space<vmem>>, vector<1x64xf32>
    %5 = vector.broadcast %4 : vector<1x64xf32> to vector<32x64xf32>
    %6 = arith.addf %3, %5 : vector<32x64xf32>
    %7 = vector.extract_strided_slice %6 {offsets = [0, 0], sizes = [32, 32], strides = [1, 1]} : vector<32x64xf32> to vector<32x32xf32>
    %8 = vector.extract_strided_slice %6 {offsets = [0, 32], sizes = [32, 32], strides = [1, 1]} : vector<32x64xf32> to vector<32x32xf32>
    %c0_6 = arith.constant 0 : index
    %c0_7 = arith.constant 0 : index
    %9 = vector.load %arg4[%c0_6, %c0_7] : memref<32x16xf32, #tpu.memory_space<vmem>>, vector<32x16xf32>
    %cst_8 = arith.constant dense<0.000000e+00> : vector<32x16xf32>
    %10 = tpu.matmul %8, %9, %cst_8 {dimension_numbers = #tpu.dot_dimension_numbers<[1], [0], [0], [1], [0, 0, 1, 1], [], []>} : vector<32x32xf32>, vector<32x16xf32>, vector<32x16xf32> -> vector<32x16xf32>
    %c0_9 = arith.constant 0 : index
    %c0_10 = arith.constant 0 : index
    %11 = vector.load %arg5[%c0_9, %c0_10] : memref<1x16xf32, #tpu.memory_space<vmem>>, vector<1x16xf32>
    %12 = vector.broadcast %11 : vector<1x16xf32> to vector<32x16xf32>
    %13 = arith.addf %10, %12 : vector<32x16xf32>
    %14 = tpu.iota {dimensions = array<i32: 1>} : vector<32x16xi32>
    %c8_i32 = arith.constant 8 : i32
    %15 = vector.broadcast %c8_i32 : i32 to vector<32x16xi32>
    %16 = arith.cmpi slt, %14, %15 : vector<32x16xi32>
    %cst_11 = arith.constant -1.000000e+30 : f32
    %17 = vector.broadcast %cst_11 : f32 to vector<32x16xf32>
    %18 = arith.select %16, %13, %17 : vector<32x16xi1>, vector<32x16xf32>
    %cst_12 = arith.constant dense<0xFF800000> : vector<32xf32>
    %19 = vector.multi_reduction <maximumf>, %18, %cst_12 [1] : vector<32x16xf32> to vector<32xf32>
    %20 = vector.shape_cast %19 : vector<32xf32> to vector<32x1xf32>
    %21 = arith.select %16, %17, %13 : vector<32x16xi1>, vector<32x16xf32>
    %cst_13 = arith.constant dense<0xFF800000> : vector<32xf32>
    %22 = vector.multi_reduction <maximumf>, %21, %cst_13 [1] : vector<32x16xf32> to vector<32xf32>
    %23 = vector.shape_cast %22 : vector<32xf32> to vector<32x1xf32>
    %24 = vector.shape_cast %20 : vector<32x1xf32> to vector<32x1xf32>
    %25 = vector.broadcast %24 : vector<32x1xf32> to vector<32x16xf32>
    %26 = vector.shape_cast %23 : vector<32x1xf32> to vector<32x1xf32>
    %27 = vector.broadcast %26 : vector<32x1xf32> to vector<32x16xf32>
    %28 = arith.select %16, %25, %27 : vector<32x16xi1>, vector<32x16xf32>
    %29 = arith.subf %13, %28 : vector<32x16xf32>
    %30 = math.exp %29 : vector<32x16xf32>
    %cst_14 = arith.constant 0.000000e+00 : f32
    %31 = vector.broadcast %cst_14 : f32 to vector<32x16xf32>
    %32 = arith.select %16, %30, %31 : vector<32x16xi1>, vector<32x16xf32>
    %cst_15 = arith.constant dense<0.000000e+00> : vector<32xf32>
    %33 = vector.multi_reduction <add>, %32, %cst_15 [1] : vector<32x16xf32> to vector<32xf32>
    %34 = vector.shape_cast %33 : vector<32xf32> to vector<32x1xf32>
    %cst_16 = arith.constant 0.000000e+00 : f32
    %35 = vector.broadcast %cst_16 : f32 to vector<32x16xf32>
    %36 = arith.select %16, %35, %30 : vector<32x16xi1>, vector<32x16xf32>
    %cst_17 = arith.constant dense<0.000000e+00> : vector<32xf32>
    %37 = vector.multi_reduction <add>, %36, %cst_17 [1] : vector<32x16xf32> to vector<32xf32>
    %38 = vector.shape_cast %37 : vector<32xf32> to vector<32x1xf32>
    %39 = vector.shape_cast %34 : vector<32x1xf32> to vector<32x1xf32>
    %40 = vector.broadcast %39 : vector<32x1xf32> to vector<32x16xf32>
    %41 = vector.shape_cast %38 : vector<32x1xf32> to vector<32x1xf32>
    %42 = vector.broadcast %41 : vector<32x1xf32> to vector<32x16xf32>
    %43 = arith.select %16, %40, %42 : vector<32x16xi1>, vector<32x16xf32>
    %44 = tpu.reciprocal %43 {approx = true} : vector<32x16xf32> -> vector<32x16xf32>
    %45 = arith.mulf %30, %44 : vector<32x16xf32>
    %cst_18 = arith.constant dense<0.000000e+00> : vector<16x32xf32>
    %46 = tpu.matmul %45, %7, %cst_18 {dimension_numbers = #tpu.dot_dimension_numbers<[0], [0], [1], [1], [0, 1, 1, 1], [], []>} : vector<32x16xf32>, vector<32x32xf32>, vector<16x32xf32> -> vector<16x32xf32>
    %cst_19 = arith.constant 1.000000e+00 : f32
    %47 = vector.broadcast %cst_19 : f32 to vector<32x8xf32>
    %cst_20 = arith.constant dense<0.000000e+00> : vector<16x8xf32>
    %48 = tpu.matmul %45, %47, %cst_20 {dimension_numbers = #tpu.dot_dimension_numbers<[0], [0], [1], [1], [0, 1, 1, 1], [], []>} : vector<32x16xf32>, vector<32x8xf32>, vector<16x8xf32> -> vector<16x8xf32>
    %49 = vector.extract_strided_slice %48 {offsets = [0, 0], sizes = [16, 1], strides = [1, 1]} : vector<16x8xf32> to vector<16x1xf32>
    %cst_21 = arith.constant 9.99999974E-6 : f32
    %50 = vector.broadcast %cst_21 : f32 to vector<16x1xf32>
    %51 = arith.addf %49, %50 : vector<16x1xf32>
    %52 = tpu.reciprocal %51 {approx = true} : vector<16x1xf32> -> vector<16x1xf32>
    %53 = vector.broadcast %52 : vector<16x1xf32> to vector<16x32xf32>
    %54 = arith.mulf %46, %53 : vector<16x32xf32>
    %55 = tpu.iota {dimensions = array<i32: 1>} : vector<8x32xi32>
    %c16_i32 = arith.constant 16 : i32
    %56 = vector.broadcast %c16_i32 : i32 to vector<8x32xi32>
    %57 = arith.cmpi slt, %55, %56 : vector<8x32xi32>
    %58 = vector.extract_strided_slice %54 {offsets = [0, 0], sizes = [8, 32], strides = [1, 1]} : vector<16x32xf32> to vector<8x32xf32>
    %59 = vector.extract_strided_slice %54 {offsets = [8, 0], sizes = [8, 32], strides = [1, 1]} : vector<16x32xf32> to vector<8x32xf32>
    %60 = arith.select %57, %58, %59 : vector<8x32xi1>, vector<8x32xf32>
    %c0_22 = arith.constant 0 : index
    %c0_23 = arith.constant 0 : index
    %c0_24 = arith.constant 0 : index
    %61 = vector.load %arg17[%c0_22, %c0_23, %c0_24] : memref<1x8x32xf32, #tpu.memory_space<vmem>>, vector<1x8x32xf32>
    %62 = vector.shape_cast %61 : vector<1x8x32xf32> to vector<8x32xf32>
    %63 = vector.shape_cast %60 : vector<8x32xf32> to vector<1x8x32xf32>
    tpu.vector_store %arg17[%c0_22, %c0_23, %c0_24], %63 {strides = array<i32>} : memref<1x8x32xf32, #tpu.memory_space<vmem>>, vector<1x8x32xf32>,
    %c0_25 = arith.constant 0 : index
    %c0_26 = arith.constant 0 : index
    %64 = vector.load %arg6[%c0_25, %c0_26] : memref<32x258xf32, #tpu.memory_space<vmem>>, vector<32x258xf32>
    %cst_27 = arith.constant dense<0.000000e+00> : vector<8x258xf32>
    %65 = tpu.matmul %60, %64, %cst_27 {dimension_numbers = #tpu.dot_dimension_numbers<[1], [0], [0], [1], [0, 0, 1, 1], [], []>} : vector<8x32xf32>, vector<32x258xf32>, vector<8x258xf32> -> vector<8x258xf32>
    %66 = vector.extract_strided_slice %65 {offsets = [0, 0], sizes = [8, 64], strides = [1, 1]} : vector<8x258xf32> to vector<8x64xf32>
    %67 = vector.extract_strided_slice %65 {offsets = [0, 64], sizes = [8, 192], strides = [1, 1]} : vector<8x258xf32> to vector<8x192xf32>
    %68 = vector.extract_strided_slice %65 {offsets = [0, 256], sizes = [8, 2], strides = [1, 1]} : vector<8x258xf32> to vector<8x2xf32>
    %c0_28 = arith.constant 0 : index
    %c0_29 = arith.constant 0 : index
    %69 = vector.load %arg7[%c0_28, %c0_29] : memref<1x2xf32, #tpu.memory_space<vmem>>, vector<1x2xf32>
    %70 = vector.broadcast %69 : vector<1x2xf32> to vector<8x2xf32>
    %71 = arith.addf %68, %70 : vector<8x2xf32>
    %cst_30 = arith.constant 0.000000e+00 : f32
    %72 = vector.broadcast %cst_30 : f32 to vector<8x2xf32>
    %73 = arith.maximumf %71, %72 : vector<8x2xf32>
    %74 = math.absf %71 : vector<8x2xf32>
    %cst_31 = arith.constant 0.000000e+00 : f32
    %75 = vector.broadcast %cst_31 : f32 to vector<8x2xf32>
    %76 = arith.subf %75, %74 : vector<8x2xf32>
    %77 = math.exp %76 : vector<8x2xf32>
    %cst_32 = arith.constant 1.000000e+00 : f32
    %78 = vector.broadcast %cst_32 : f32 to vector<8x2xf32>
    %79 = arith.addf %78, %77 : vector<8x2xf32>
    %80 = math.log %79 : vector<8x2xf32>
    %81 = arith.addf %73, %80 : vector<8x2xf32>
    %82 = tpu.iota {dimensions = array<i32: 0>} : vector<8x8xi32>
    %83 = tpu.iota {dimensions = array<i32: 1>} : vector<8x8xi32>
    %c1_i32 = arith.constant 1 : i32
    %84 = vector.broadcast %c1_i32 : i32 to vector<8x8xi32>
    %85 = arith.subi %82, %84 : vector<8x8xi32>
    %86 = arith.cmpi eq, %83, %85 : vector<8x8xi32>
    %87 = arith.extui %86 : vector<8x8xi1> to vector<8x8xi32>
    %88 = arith.sitofp %87 : vector<8x8xi32> to vector<8x8xf32>
    %c2_i32 = arith.constant 2 : i32
    %89 = vector.broadcast %c2_i32 : i32 to vector<8x8xi32>
    %90 = arith.subi %82, %89 : vector<8x8xi32>
    %91 = arith.cmpi eq, %83, %90 : vector<8x8xi32>
    %92 = arith.extui %91 : vector<8x8xi1> to vector<8x8xi32>
    %93 = arith.sitofp %92 : vector<8x8xi32> to vector<8x8xf32>
    %c0_33 = arith.constant 0 : index
    %c0_34 = arith.constant 0 : index
    %94 = vector.load %arg8[%c0_33, %c0_34] : memref<3x192xf32, #tpu.memory_space<vmem>>, vector<3x192xf32>
    %95 = vector.extract_strided_slice %94 {offsets = [2, 0], sizes = [1, 192], strides = [1, 1]} : vector<3x192xf32> to vector<1x192xf32>
    %96 = vector.broadcast %95 : vector<1x192xf32> to vector<8x192xf32>
    %97 = arith.mulf %67, %96 : vector<8x192xf32>
    %cst_35 = arith.constant dense<0.000000e+00> : vector<8x192xf32>
    %98 = tpu.matmul %88, %67, %cst_35 {dimension_numbers = #tpu.dot_dimension_numbers<[1], [0], [0], [1], [0, 0, 1, 1], [], []>} : vector<8x8xf32>, vector<8x192xf32>, vector<8x192xf32> -> vector<8x192xf32>
    %99 = vector.extract_strided_slice %94 {offsets = [1, 0], sizes = [1, 192], strides = [1, 1]} : vector<3x192xf32> to vector<1x192xf32>
    %100 = vector.broadcast %99 : vector<1x192xf32> to vector<8x192xf32>
    %101 = arith.mulf %98, %100 : vector<8x192xf32>
    %102 = arith.addf %97, %101 : vector<8x192xf32>
    %cst_36 = arith.constant dense<0.000000e+00> : vector<8x192xf32>
    %103 = tpu.matmul %93, %67, %cst_36 {dimension_numbers = #tpu.dot_dimension_numbers<[1], [0], [0], [1], [0, 0, 1, 1], [], []>} : vector<8x8xf32>, vector<8x192xf32>, vector<8x192xf32> -> vector<8x192xf32>
    %104 = vector.extract_strided_slice %94 {offsets = [0, 0], sizes = [1, 192], strides = [1, 1]} : vector<3x192xf32> to vector<1x192xf32>
    %105 = vector.broadcast %104 : vector<1x192xf32> to vector<8x192xf32>
    %106 = arith.mulf %103, %105 : vector<8x192xf32>
    %107 = arith.addf %102, %106 : vector<8x192xf32>
    %c0_37 = arith.constant 0 : index
    %c0_38 = arith.constant 0 : index
    %108 = vector.load %arg9[%c0_37, %c0_38] : memref<1x192xf32, #tpu.memory_space<vmem>>, vector<1x192xf32>
    %109 = vector.broadcast %108 : vector<1x192xf32> to vector<8x192xf32>
    %110 = arith.addf %107, %109 : vector<8x192xf32>
    %cst_39 = arith.constant 0.000000e+00 : f32
    %111 = vector.broadcast %cst_39 : f32 to vector<8x192xf32>
    %112 = arith.subf %111, %110 : vector<8x192xf32>
    %113 = math.exp %112 : vector<8x192xf32>
    %cst_40 = arith.constant 1.000000e+00 : f32
    %114 = vector.broadcast %cst_40 : f32 to vector<8x192xf32>
    %115 = arith.addf %114, %113 : vector<8x192xf32>
    %cst_41 = arith.constant 1.000000e+00 : f32
    %116 = vector.broadcast %cst_41 : f32 to vector<8x192xf32>
    %117 = arith.divf %116, %115 : vector<8x192xf32>
    %118 = arith.mulf %110, %117 : vector<8x192xf32>
    %119 = vector.extract_strided_slice %118 {offsets = [0, 0], sizes = [8, 64], strides = [1, 1]} : vector<8x192xf32> to vector<8x64xf32>
    %120 = vector.extract_strided_slice %118 {offsets = [0, 64], sizes = [8, 64], strides = [1, 1]} : vector<8x192xf32> to vector<8x64xf32>
    %121 = vector.extract_strided_slice %118 {offsets = [0, 128], sizes = [8, 64], strides = [1, 1]} : vector<8x192xf32> to vector<8x64xf32>
    %122 = arith.cmpi sle, %83, %82 : vector<8x8xi32>
    %123 = arith.extui %122 : vector<8x8xi1> to vector<8x8xi32>
    %124 = arith.sitofp %123 : vector<8x8xi32> to vector<8x8xf32>
    %125 = arith.cmpi sle, %82, %83 : vector<8x8xi32>
    %126 = arith.extui %125 : vector<8x8xi1> to vector<8x8xi32>
    %127 = arith.sitofp %126 : vector<8x8xi32> to vector<8x8xf32>
    %cst_42 = arith.constant dense<0.000000e+00> : vector<8x8xf32>
    %128 = tpu.matmul %121, %120, %cst_42 {dimension_numbers = #tpu.dot_dimension_numbers<[1], [1], [0], [0], [0, 0, 1, 0], [], []>} : vector<8x64xf32>, vector<8x64xf32>, vector<8x8xf32> -> vector<8x8xf32>
    %c0_43 = arith.constant 0 : index
    %c0_44 = arith.constant 0 : index
    %129 = vector.load %arg10[%c0_43, %c0_44] : memref<1x2xf32, #tpu.memory_space<vmem>>, vector<1x2xf32>
    %c0_45 = arith.constant 0 : index
    %c0_46 = arith.constant 0 : index
    %130 = vector.load %arg11[%c0_45, %c0_46] : memref<1x2xf32, #tpu.memory_space<vmem>>, vector<1x2xf32>
    %c0_47 = arith.constant 0 : index
    %c0_48 = arith.constant 0 : index
    %131 = vector.load %arg12[%c0_47, %c0_48] : memref<1x64xf32, #tpu.memory_space<vmem>>, vector<1x64xf32>
    %c0_49 = arith.constant 0 : index
    %c0_50 = arith.constant 0 : index
    %132 = vector.load %arg13[%c0_49, %c0_50] : memref<64x32xf32, #tpu.memory_space<vmem>>, vector<64x32xf32>
    %cst_51 = arith.constant 0.000000e+00 : f32
    %133 = vector.broadcast %cst_51 : f32 to vector<8x1xf32>
    %134 = vector.extract_strided_slice %81 {offsets = [0, 0], sizes = [8, 1], strides = [1, 1]} : vector<8x2xf32> to vector<8x1xf32>
    %135 = vector.extract_strided_slice %129 {offsets = [0, 0], sizes = [1, 1], strides = [1, 1]} : vector<1x2xf32> to vector<1x1xf32>
    %136 = vector.broadcast %135 : vector<1x1xf32> to vector<8x1xf32>
    %137 = arith.mulf %134, %136 : vector<8x1xf32>
    %138 = vector.shape_cast %137 : vector<8x1xf32> to vector<8x1xf32>
    %139 = vector.broadcast %138 : vector<8x1xf32> to vector<8x8xf32>
    %cst_52 = arith.constant dense<0.000000e+00> : vector<8x8xf32>
    %140 = tpu.matmul %124, %139, %cst_52 {dimension_numbers = #tpu.dot_dimension_numbers<[1], [0], [0], [1], [0, 0, 1, 1], [], []>} : vector<8x8xf32>, vector<8x8xf32>, vector<8x8xf32> -> vector<8x8xf32>
    %cst_53 = arith.constant dense<0.000000e+00> : vector<8x8xf32>
    %141 = tpu.matmul %139, %127, %cst_53 {dimension_numbers = #tpu.dot_dimension_numbers<[0], [0], [1], [1], [0, 1, 1, 1], [], []>} : vector<8x8xf32>, vector<8x8xf32>, vector<8x8xf32> -> vector<8x8xf32>
    %142 = arith.subf %140, %141 : vector<8x8xf32>
    %cst_54 = arith.constant -1.000000e+30 : f32
    %143 = vector.broadcast %cst_54 : f32 to vector<8x8xf32>
    %144 = arith.select %122, %142, %143 : vector<8x8xi1>, vector<8x8xf32>
    %145 = math.exp %144 : vector<8x8xf32>
    %146 = vector.extract_strided_slice %119 {offsets = [0, 0], sizes = [8, 32], strides = [1, 1]} : vector<8x64xf32> to vector<8x32xf32>
    %147 = arith.mulf %128, %145 : vector<8x8xf32>
    %148 = vector.broadcast %134 : vector<8x1xf32> to vector<8x32xf32>
    %149 = arith.mulf %146, %148 : vector<8x32xf32>
    %cst_55 = arith.constant dense<0.000000e+00> : vector<8x32xf32>
    %150 = tpu.matmul %147, %149, %cst_55 {dimension_numbers = #tpu.dot_dimension_numbers<[1], [0], [0], [1], [0, 0, 1, 1], [], []>} : vector<8x8xf32>, vector<8x32xf32>, vector<8x32xf32> -> vector<8x32xf32>
    %151 = vector.extract_strided_slice %130 {offsets = [0, 0], sizes = [1, 1], strides = [1, 1]} : vector<1x2xf32> to vector<1x1xf32>
    %152 = vector.broadcast %151 : vector<1x1xf32> to vector<8x32xf32>
    %153 = arith.mulf %152, %146 : vector<8x32xf32>
    %154 = arith.addf %150, %153 : vector<8x32xf32>
    %155 = vector.extract_strided_slice %66 {offsets = [0, 0], sizes = [8, 32], strides = [1, 1]} : vector<8x64xf32> to vector<8x32xf32>
    %cst_56 = arith.constant 0.000000e+00 : f32
    %156 = vector.broadcast %cst_56 : f32 to vector<8x32xf32>
    %157 = arith.subf %156, %155 : vector<8x32xf32>
    %158 = math.exp %157 : vector<8x32xf32>
    %cst_57 = arith.constant 1.000000e+00 : f32
    %159 = vector.broadcast %cst_57 : f32 to vector<8x32xf32>
    %160 = arith.addf %159, %158 : vector<8x32xf32>
    %cst_58 = arith.constant 1.000000e+00 : f32
    %161 = vector.broadcast %cst_58 : f32 to vector<8x32xf32>
    %162 = arith.divf %161, %160 : vector<8x32xf32>
    %163 = arith.mulf %155, %162 : vector<8x32xf32>
    %164 = arith.mulf %154, %163 : vector<8x32xf32>
    %165 = arith.mulf %164, %164 : vector<8x32xf32>
    %cst_59 = arith.constant dense<0.000000e+00> : vector<8xf32>
    %166 = vector.multi_reduction <add>, %165, %cst_59 [1] : vector<8x32xf32> to vector<8xf32>
    %167 = vector.shape_cast %166 : vector<8xf32> to vector<8x1xf32>
    %168 = arith.addf %133, %167 : vector<8x1xf32>
    %169 = vector.extract_strided_slice %81 {offsets = [0, 1], sizes = [8, 1], strides = [1, 1]} : vector<8x2xf32> to vector<8x1xf32>
    %170 = vector.extract_strided_slice %129 {offsets = [0, 1], sizes = [1, 1], strides = [1, 1]} : vector<1x2xf32> to vector<1x1xf32>
    %171 = vector.broadcast %170 : vector<1x1xf32> to vector<8x1xf32>
    %172 = arith.mulf %169, %171 : vector<8x1xf32>
    %173 = vector.shape_cast %172 : vector<8x1xf32> to vector<8x1xf32>
    %174 = vector.broadcast %173 : vector<8x1xf32> to vector<8x8xf32>
    %cst_60 = arith.constant dense<0.000000e+00> : vector<8x8xf32>
    %175 = tpu.matmul %124, %174, %cst_60 {dimension_numbers = #tpu.dot_dimension_numbers<[1], [0], [0], [1], [0, 0, 1, 1], [], []>} : vector<8x8xf32>, vector<8x8xf32>, vector<8x8xf32> -> vector<8x8xf32>
    %cst_61 = arith.constant dense<0.000000e+00> : vector<8x8xf32>
    %176 = tpu.matmul %174, %127, %cst_61 {dimension_numbers = #tpu.dot_dimension_numbers<[0], [0], [1], [1], [0, 1, 1, 1], [], []>} : vector<8x8xf32>, vector<8x8xf32>, vector<8x8xf32> -> vector<8x8xf32>
    %177 = arith.subf %175, %176 : vector<8x8xf32>
    %cst_62 = arith.constant -1.000000e+30 : f32
    %178 = vector.broadcast %cst_62 : f32 to vector<8x8xf32>
    %179 = arith.select %122, %177, %178 : vector<8x8xi1>, vector<8x8xf32>
    %180 = math.exp %179 : vector<8x8xf32>
    %181 = vector.extract_strided_slice %119 {offsets = [0, 32], sizes = [8, 32], strides = [1, 1]} : vector<8x64xf32> to vector<8x32xf32>
    %182 = arith.mulf %128, %180 : vector<8x8xf32>
    %183 = vector.broadcast %169 : vector<8x1xf32> to vector<8x32xf32>
    %184 = arith.mulf %181, %183 : vector<8x32xf32>
    %cst_63 = arith.constant dense<0.000000e+00> : vector<8x32xf32>
    %185 = tpu.matmul %182, %184, %cst_63 {dimension_numbers = #tpu.dot_dimension_numbers<[1], [0], [0], [1], [0, 0, 1, 1], [], []>} : vector<8x8xf32>, vector<8x32xf32>, vector<8x32xf32> -> vector<8x32xf32>
    %186 = vector.extract_strided_slice %130 {offsets = [0, 1], sizes = [1, 1], strides = [1, 1]} : vector<1x2xf32> to vector<1x1xf32>
    %187 = vector.broadcast %186 : vector<1x1xf32> to vector<8x32xf32>
    %188 = arith.mulf %187, %181 : vector<8x32xf32>
    %189 = arith.addf %185, %188 : vector<8x32xf32>
    %190 = vector.extract_strided_slice %66 {offsets = [0, 32], sizes = [8, 32], strides = [1, 1]} : vector<8x64xf32> to vector<8x32xf32>
    %cst_64 = arith.constant 0.000000e+00 : f32
    %191 = vector.broadcast %cst_64 : f32 to vector<8x32xf32>
    %192 = arith.subf %191, %190 : vector<8x32xf32>
    %193 = math.exp %192 : vector<8x32xf32>
    %cst_65 = arith.constant 1.000000e+00 : f32
    %194 = vector.broadcast %cst_65 : f32 to vector<8x32xf32>
    %195 = arith.addf %194, %193 : vector<8x32xf32>
    %cst_66 = arith.constant 1.000000e+00 : f32
    %196 = vector.broadcast %cst_66 : f32 to vector<8x32xf32>
    %197 = arith.divf %196, %195 : vector<8x32xf32>
    %198 = arith.mulf %190, %197 : vector<8x32xf32>
    %199 = arith.mulf %189, %198 : vector<8x32xf32>
    %200 = arith.mulf %199, %199 : vector<8x32xf32>
    %cst_67 = arith.constant dense<0.000000e+00> : vector<8xf32>
    %201 = vector.multi_reduction <add>, %200, %cst_67 [1] : vector<8x32xf32> to vector<8xf32>
    %202 = vector.shape_cast %201 : vector<8xf32> to vector<8x1xf32>
    %203 = arith.addf %168, %202 : vector<8x1xf32>
    %cst_68 = arith.constant 1.562500e-02 : f32
    %204 = vector.broadcast %cst_68 : f32 to vector<8x1xf32>
    %205 = arith.mulf %203, %204 : vector<8x1xf32>
    %cst_69 = arith.constant 9.99999974E-6 : f32
    %206 = vector.broadcast %cst_69 : f32 to vector<8x1xf32>
    %207 = arith.addf %205, %206 : vector<8x1xf32>
    %208 = math.rsqrt %207 : vector<8x1xf32>
    %cst_70 = arith.constant 0.000000e+00 : f32
    %209 = vector.broadcast %cst_70 : f32 to vector<8x32xf32>
    %210 = vector.broadcast %208 : vector<8x1xf32> to vector<8x32xf32>
    %211 = arith.mulf %164, %210 : vector<8x32xf32>
    %212 = vector.extract_strided_slice %131 {offsets = [0, 0], sizes = [1, 32], strides = [1, 1]} : vector<1x64xf32> to vector<1x32xf32>
    %213 = vector.broadcast %212 : vector<1x32xf32> to vector<8x32xf32>
    %214 = arith.mulf %211, %213 : vector<8x32xf32>
    %215 = vector.extract_strided_slice %132 {offsets = [0, 0], sizes = [32, 32], strides = [1, 1]} : vector<64x32xf32> to vector<32x32xf32>
    %cst_71 = arith.constant dense<0.000000e+00> : vector<8x32xf32>
    %216 = tpu.matmul %214, %215, %cst_71 {dimension_numbers = #tpu.dot_dimension_numbers<[1], [0], [0], [1], [0, 0, 1, 1], [], []>} : vector<8x32xf32>, vector<32x32xf32>, vector<8x32xf32> -> vector<8x32xf32>
    %217 = arith.addf %209, %216 : vector<8x32xf32>
    %218 = vector.broadcast %208 : vector<8x1xf32> to vector<8x32xf32>
    %219 = arith.mulf %199, %218 : vector<8x32xf32>
    %220 = vector.extract_strided_slice %131 {offsets = [0, 32], sizes = [1, 32], strides = [1, 1]} : vector<1x64xf32> to vector<1x32xf32>
    %221 = vector.broadcast %220 : vector<1x32xf32> to vector<8x32xf32>
    %222 = arith.mulf %219, %221 : vector<8x32xf32>
    %223 = vector.extract_strided_slice %132 {offsets = [32, 0], sizes = [32, 32], strides = [1, 1]} : vector<64x32xf32> to vector<32x32xf32>
    %cst_72 = arith.constant dense<0.000000e+00> : vector<8x32xf32>
    %224 = tpu.matmul %222, %223, %cst_72 {dimension_numbers = #tpu.dot_dimension_numbers<[1], [0], [0], [1], [0, 0, 1, 1], [], []>} : vector<8x32xf32>, vector<32x32xf32>, vector<8x32xf32> -> vector<8x32xf32>
    %225 = arith.addf %217, %224 : vector<8x32xf32>
    %c0_73 = arith.constant 0 : index
    %c0_74 = arith.constant 0 : index
    %c0_75 = arith.constant 0 : index
    %226 = vector.load %arg18[%c0_73, %c0_74, %c0_75] : memref<1x8x32xf32, #tpu.memory_space<vmem>>, vector<1x8x32xf32>
    %227 = vector.shape_cast %226 : vector<1x8x32xf32> to vector<8x32xf32>
    %228 = vector.shape_cast %225 : vector<8x32xf32> to vector<1x8x32xf32>
    tpu.vector_store %arg18[%c0_73, %c0_74, %c0_75], %228 {strides = array<i32>} : memref<1x8x32xf32, #tpu.memory_space<vmem>>, vector<1x8x32xf32>,
    %c16_i32_76 = arith.constant 16 : i32
    %229 = vector.broadcast %c16_i32_76 : i32 to vector<8x32xi32>
    %230 = arith.cmpi slt, %55, %229 : vector<8x32xi32>
    %cst_77 = arith.constant 0.000000e+00 : f32
    %231 = vector.broadcast %cst_77 : f32 to vector<8x32xf32>
    %232 = arith.select %230, %225, %231 : vector<8x32xi1>, vector<8x32xf32>
    %c16_i32_78 = arith.constant 16 : i32
    %233 = vector.broadcast %c16_i32_78 : i32 to vector<8x32xi32>
    %234 = arith.cmpi slt, %55, %233 : vector<8x32xi32>
    %cst_79 = arith.constant 0.000000e+00 : f32
    %235 = vector.broadcast %cst_79 : f32 to vector<8x32xf32>
    %236 = arith.select %234, %235, %225 : vector<8x32xi1>, vector<8x32xf32>
    %237 = vector.extract_strided_slice %45 {offsets = [0, 0], sizes = [32, 8], strides = [1, 1]} : vector<32x16xf32> to vector<32x8xf32>
    %cst_80 = arith.constant dense<0.000000e+00> : vector<32x32xf32>
    %238 = tpu.matmul %237, %232, %cst_80 {dimension_numbers = #tpu.dot_dimension_numbers<[1], [0], [0], [1], [0, 0, 1, 1], [], []>} : vector<32x8xf32>, vector<8x32xf32>, vector<32x32xf32> -> vector<32x32xf32>
    %239 = vector.extract_strided_slice %45 {offsets = [0, 8], sizes = [32, 8], strides = [1, 1]} : vector<32x16xf32> to vector<32x8xf32>
    %cst_81 = arith.constant dense<0.000000e+00> : vector<32x32xf32>
    %240 = tpu.matmul %239, %236, %cst_81 {dimension_numbers = #tpu.dot_dimension_numbers<[1], [0], [0], [1], [0, 0, 1, 1], [], []>} : vector<32x8xf32>, vector<8x32xf32>, vector<32x32xf32> -> vector<32x32xf32>
    %241 = arith.addf %238, %240 : vector<32x32xf32>
    %c0_82 = arith.constant 0 : index
    %c0_83 = arith.constant 0 : index
    %242 = vector.load %arg14[%c0_82, %c0_83] : memref<32x16xf32, #tpu.memory_space<vmem>>, vector<32x16xf32>
    %cst_84 = arith.constant dense<0.000000e+00> : vector<32x16xf32>
    %243 = tpu.matmul %241, %242, %cst_84 {dimension_numbers = #tpu.dot_dimension_numbers<[1], [0], [0], [1], [0, 0, 1, 1], [], []>} : vector<32x32xf32>, vector<32x16xf32>, vector<32x16xf32> -> vector<32x16xf32>
    %c0_85 = arith.constant 0 : index
    %c0_86 = arith.constant 0 : index
    %244 = vector.load %arg15[%c0_85, %c0_86] : memref<1x16xf32, #tpu.memory_space<vmem>>, vector<1x16xf32>
    %245 = vector.broadcast %244 : vector<1x16xf32> to vector<32x16xf32>
    %246 = arith.addf %243, %245 : vector<32x16xf32>
    %c0_87 = arith.constant 0 : index
    %c0_88 = arith.constant 0 : index
    %c0_89 = arith.constant 0 : index
    %247 = vector.load %arg16[%c0_87, %c0_88, %c0_89] : memref<1x32x16xf32, #tpu.memory_space<vmem>>, vector<1x32x16xf32>
    %248 = vector.shape_cast %247 : vector<1x32x16xf32> to vector<32x16xf32>
    %249 = vector.shape_cast %246 : vector<32x16xf32> to vector<1x32x16xf32>
    tpu.vector_store %arg16[%c0_87, %c0_88, %c0_89], %249 {strides = array<i32>} : memref<1x32x16xf32, #tpu.memory_space<vmem>>, vector<1x32x16xf32>,
    return
  }
  func.func @transform_0(%arg0: i32) -> (i32, i32, i32) {
    %c0_i32 = arith.constant 0 : i32
    %c0_i32_0 = arith.constant 0 : i32
    %c0_i32_1 = arith.constant 0 : i32
    return %arg0, %c0_i32, %c0_i32_0 : i32, i32, i32
  }
  func.func @transform_1(%arg0: i32) -> (i32, i32) {
    %c0_i32 = arith.constant 0 : i32
    %c0_i32_0 = arith.constant 0 : i32
    %c0_i32_1 = arith.constant 0 : i32
    return %c0_i32, %c0_i32_0 : i32, i32
  }
  func.func @transform_2(%arg0: i32) -> (i32, i32) {
    %c0_i32 = arith.constant 0 : i32
    %c0_i32_0 = arith.constant 0 : i32
    %c0_i32_1 = arith.constant 0 : i32
    return %c0_i32, %c0_i32_0 : i32, i32
  }
  func.func @transform_3(%arg0: i32) -> (i32, i32) {
    %c0_i32 = arith.constant 0 : i32
    %c0_i32_0 = arith.constant 0 : i32
    %c0_i32_1 = arith.constant 0 : i32
    return %c0_i32, %c0_i32_0 : i32, i32
  }
  func.func @transform_4(%arg0: i32) -> (i32, i32) {
    %c0_i32 = arith.constant 0 : i32
    %c0_i32_0 = arith.constant 0 : i32
    %c0_i32_1 = arith.constant 0 : i32
    return %c0_i32, %c0_i32_0 : i32, i32
  }
  func.func @transform_5(%arg0: i32) -> (i32, i32) {
    %c0_i32 = arith.constant 0 : i32
    %c0_i32_0 = arith.constant 0 : i32
    %c0_i32_1 = arith.constant 0 : i32
    return %c0_i32, %c0_i32_0 : i32, i32
  }
  func.func @transform_6(%arg0: i32) -> (i32, i32) {
    %c0_i32 = arith.constant 0 : i32
    %c0_i32_0 = arith.constant 0 : i32
    %c0_i32_1 = arith.constant 0 : i32
    return %c0_i32, %c0_i32_0 : i32, i32
  }
  func.func @transform_7(%arg0: i32) -> (i32, i32) {
    %c0_i32 = arith.constant 0 : i32
    %c0_i32_0 = arith.constant 0 : i32
    %c0_i32_1 = arith.constant 0 : i32
    return %c0_i32, %c0_i32_0 : i32, i32
  }
  func.func @transform_8(%arg0: i32) -> (i32, i32) {
    %c0_i32 = arith.constant 0 : i32
    %c0_i32_0 = arith.constant 0 : i32
    %c0_i32_1 = arith.constant 0 : i32
    return %c0_i32, %c0_i32_0 : i32, i32
  }
  func.func @transform_9(%arg0: i32) -> (i32, i32) {
    %c0_i32 = arith.constant 0 : i32
    %c0_i32_0 = arith.constant 0 : i32
    %c0_i32_1 = arith.constant 0 : i32
    return %c0_i32, %c0_i32_0 : i32, i32
  }
  func.func @transform_10(%arg0: i32) -> (i32, i32) {
    %c0_i32 = arith.constant 0 : i32
    %c0_i32_0 = arith.constant 0 : i32
    %c0_i32_1 = arith.constant 0 : i32
    return %c0_i32, %c0_i32_0 : i32, i32
  }
  func.func @transform_11(%arg0: i32) -> (i32, i32) {
    %c0_i32 = arith.constant 0 : i32
    %c0_i32_0 = arith.constant 0 : i32
    %c0_i32_1 = arith.constant 0 : i32
    return %c0_i32, %c0_i32_0 : i32, i32
  }
  func.func @transform_12(%arg0: i32) -> (i32, i32) {
    %c0_i32 = arith.constant 0 : i32
    %c0_i32_0 = arith.constant 0 : i32
    %c0_i32_1 = arith.constant 0 : i32
    return %c0_i32, %c0_i32_0 : i32, i32
  }
  func.func @transform_13(%arg0: i32) -> (i32, i32) {
    %c0_i32 = arith.constant 0 : i32
    %c0_i32_0 = arith.constant 0 : i32
    %c0_i32_1 = arith.constant 0 : i32
    return %c0_i32, %c0_i32_0 : i32, i32
  }
  func.func @transform_14(%arg0: i32) -> (i32, i32) {
    %c0_i32 = arith.constant 0 : i32
    %c0_i32_0 = arith.constant 0 : i32
    %c0_i32_1 = arith.constant 0 : i32
    return %c0_i32, %c0_i32_0 : i32, i32
  }
  func.func @transform_15(%arg0: i32) -> (i32, i32, i32) {
    %c0_i32 = arith.constant 0 : i32
    %c0_i32_0 = arith.constant 0 : i32
    %c0_i32_1 = arith.constant 0 : i32
    return %arg0, %c0_i32, %c0_i32_0 : i32, i32, i32
  }
  func.func @transform_16(%arg0: i32) -> (i32, i32, i32) {
    %c0_i32 = arith.constant 0 : i32
    %c0_i32_0 = arith.constant 0 : i32
    %c0_i32_1 = arith.constant 0 : i32
    return %arg0, %c0_i32, %c0_i32_0 : i32, i32, i32
  }
  func.func @transform_17(%arg0: i32) -> (i32, i32, i32) {
    %c0_i32 = arith.constant 0 : i32
    %c0_i32_0 = arith.constant 0 : i32
    %c0_i32_1 = arith.constant 0 : i32
    return %arg0, %c0_i32, %c0_i32_0 : i32, i32, i32
  }
}

</mosaic_0001>

<llo_original>
// kernel: latent_ssm_forward.1
$region0: #{latent_ssm_forward.1}
  #allocation0 [shape = 'u32[]', space=smem, size = 0x4, offset = 0x4, fixed_abs, tag = 'smem constant byte address 0x4 - core index']
  #allocation1 [shape = 'u32[144,128]{1,0:T(1,128)}', space=vmem, size = 0x12000, scoped, tag = 'internal scratch']
  %s0 = inlined_call_operand.vmem [shape: f32[2,32,144], index: 0, kind: input, shape index: {}]
  %s1 = inlined_call_operand.vmem [shape: f32[144,64], index: 1, kind: input, shape index: {}]
  %s2 = inlined_call_operand.vmem [shape: f32[1,64], index: 2, kind: input, shape index: {}]
  %s3 = inlined_call_operand.vmem [shape: f32[32,16], index: 3, kind: input, shape index: {}]
  %s4 = inlined_call_operand.vmem [shape: f32[1,16], index: 4, kind: input, shape index: {}]
  %s5 = inlined_call_operand.vmem [shape: f32[32,258], index: 5, kind: input, shape index: {}]
  %s6 = inlined_call_operand.vmem [shape: f32[1,2], index: 6, kind: input, shape index: {}]
  %s7 = inlined_call_operand.vmem [shape: f32[3,192], index: 7, kind: input, shape index: {}]
  %s8 = inlined_call_operand.vmem [shape: f32[1,192], index: 8, kind: input, shape index: {}]
  %s9 = inlined_call_operand.vmem [shape: f32[1,2], index: 9, kind: input, shape index: {}]
  %s10 = inlined_call_operand.vmem [shape: f32[1,2], index: 10, kind: input, shape index: {}]
  %s11 = inlined_call_operand.vmem [shape: f32[1,64], index: 11, kind: input, shape index: {}]
  %s12 = inlined_call_operand.vmem [shape: f32[64,32], index: 12, kind: input, shape index: {}]
  %s13 = inlined_call_operand.vmem [shape: f32[32,16], index: 13, kind: input, shape index: {}]
  %s14 = inlined_call_operand.vmem [shape: f32[1,16], index: 14, kind: input, shape index: {}]
  %s15 = inlined_call_operand.vmem [shape: f32[2,32,16], index: 15, kind: output, shape index: {0}]
  %s16 = inlined_call_operand.vmem [shape: f32[2,8,32], index: 16, kind: output, shape index: {1}]
  %s17 = inlined_call_operand.vmem [shape: f32[2,8,32], index: 17, kind: output, shape index: {2}]
  %18 = xla_tuple %s15, %s16, %s17
  %s19 = sld [smem:[#allocation0]]
  $region109: #{latent_ssm_forward.1} parent=0
    _
  %s21 = ssub.s32 1, %s19
  %s22 = scalar_select 0, %s21, %s19
  loop: start=0, step=1, limit=4
  $region2: #{latent_ssm_forward.1} parent=0 // loop_pre_header
    _
  $region3: #{latent_ssm_forward.1} parent=0 // loop_header
    %s24 = sphi 0, %s28
    %p25 = scmp.ge.s32.totalorder %s24, 4
    %s34 = sphi 0, %s36
    %s37 = sphi 0, %s34
    %s38 = sphi 0, %s37
    %s54 = sphi 0, %s38
    %s58 = sphi 0, %s58
    %s60 = sphi 0, %s58
    %s61 = sphi 0, %s60
    %s75 = sphi 0, %s61
    %s79 = sphi 0, %s79
    %s81 = sphi 0, %s79
    %s82 = sphi 0, %s81
    %s96 = sphi 0, %s82
    %s100 = sphi 0, %s100
    %s102 = sphi 0, %s100
    %s103 = sphi 0, %s102
    %s117 = sphi 0, %s103
    %s121 = sphi 0, %s121
    %s123 = sphi 0, %s121
    %s124 = sphi 0, %s123
    %s138 = sphi 0, %s124
    %s142 = sphi 0, %s142
    %s144 = sphi 0, %s142
    %s145 = sphi 0, %s144
    %s159 = sphi 0, %s145
    %s163 = sphi 0, %s163
    %s165 = sphi 0, %s163
    %s166 = sphi 0, %s165
    %s180 = sphi 0, %s166
    %s184 = sphi 0, %s184
    %s186 = sphi 0, %s184
    %s187 = sphi 0, %s186
    %s201 = sphi 0, %s187
    %s205 = sphi 0, %s205
    %s207 = sphi 0, %s205
    %s208 = sphi 0, %s207
    %s222 = sphi 0, %s208
    %s226 = sphi 0, %s226
    %s228 = sphi 0, %s226
    %s229 = sphi 0, %s228
    %s243 = sphi 0, %s229
    %s247 = sphi 0, %s247
    %s249 = sphi 0, %s247
    %s250 = sphi 0, %s249
    %s264 = sphi 0, %s250
    %s268 = sphi 0, %s268
    %s270 = sphi 0, %s268
    %s271 = sphi 0, %s270
    %s285 = sphi 0, %s271
    %s289 = sphi 0, %s289
    %s291 = sphi 0, %s289
    %s292 = sphi 0, %s291
    %s306 = sphi 0, %s292
    %s310 = sphi 0, %s310
    %s312 = sphi 0, %s310
    %s313 = sphi 0, %s312
    %s327 = sphi 0, %s313
    %s331 = sphi 0, %s331
    %s333 = sphi 0, %s331
    %s334 = sphi 0, %s333
    %s348 = sphi 0, %s334
    %s354 = sphi 0, %s356
    %s357 = sphi 0, %s354
    %s358 = sphi 0, %s357
    %s374 = sphi 0, %s358
    %s380 = sphi 0, %s382
    %s383 = sphi 0, %s380
    %s384 = sphi 0, %s383
    %s400 = sphi 0, %s384
    %s406 = sphi 0, %s408
    %s409 = sphi 0, %s406
    %s410 = sphi 0, %s409
    %s426 = sphi 0, %s410
  $region4: #{latent_ssm_forward.1} parent=0 // loop_header_branch
    %27 = sbr.rel (%p25) target = $region8
  $region5: #{latent_ssm_forward.1} parent=0 // loop_body
    %s29 = ssub.s32 %s24, 1
    %s30 = ssub.s32 %s24, 2
    %s31 = sadd.s32 %s24, 1
    %s32 = ssub.s32 %s24, %s31
    %p33 = scmp.eq.s32.totalorder %s32, 0
    %s35 = sadd.s32 %s34, 1
    %s36 = scalar_select %p33, %s34, %s35
    %p39 = pneg %p33
    %p40 = scmp.eq.s32.totalorder %s24, 1
    %p41 = por %p39, %p40
    %p42 = scmp.ne.s32.totalorder %s34, %s37
    %p43 = scmp.eq.s32.totalorder %s24, 0
    %p44 = por %p42, %p43
    %p45 = scmp.ne.s32.totalorder %s34, %s37
    %p46 = scmp.eq.s32.totalorder %s29, 1
    %p47 = por %p45, %p46
    %p48 = scmp.ne.s32.totalorder %s37, %s38
    %p49 = scmp.eq.s32.totalorder %s29, 0
    %p50 = por %p48, %p49
    %p51 = scmp.ne.s32.totalorder %s37, %s38
    %p52 = scmp.eq.s32.totalorder %s30, 1
    %p53 = por %p51, %p52
    %p55 = scmp.ne.s32.totalorder %s38, %s54
    %p56 = scmp.eq.s32.totalorder %s30, 0
    %p57 = por %p55, %p56
    %s59 = sadd.s32 %s58, 1
    %p62 = scmp.eq.s32.totalorder %s24, 1
    %p63 = scmp.ne.s32.totalorder %s58, %s60
    %p64 = scmp.eq.s32.totalorder %s24, 0
    %p65 = por %p63, %p64
    %p66 = scmp.ne.s32.totalorder %s58, %s60
    %p67 = scmp.eq.s32.totalorder %s29, 1
    %p68 = por %p66, %p67
    %p69 = scmp.ne.s32.totalorder %s60, %s61
    %p70 = scmp.eq.s32.totalorder %s29, 0
    %p71 = por %p69, %p70
    %p72 = scmp.ne.s32.totalorder %s60, %s61
    %p73 = scmp.eq.s32.totalorder %s30, 1
    %p74 = por %p72, %p73
    %p76 = scmp.ne.s32.totalorder %s61, %s75
    %p77 = scmp.eq.s32.totalorder %s30, 0
    %p78 = por %p76, %p77
    %s80 = sadd.s32 %s79, 1
    %p83 = scmp.eq.s32.totalorder %s24, 1
    %p84 = scmp.ne.s32.totalorder %s79, %s81
    %p85 = scmp.eq.s32.totalorder %s24, 0
    %p86 = por %p84, %p85
    %p87 = scmp.ne.s32.totalorder %s79, %s81
    %p88 = scmp.eq.s32.totalorder %s29, 1
    %p89 = por %p87, %p88
    %p90 = scmp.ne.s32.totalorder %s81, %s82
    %p91 = scmp.eq.s32.totalorder %s29, 0
    %p92 = por %p90, %p91
    %p93 = scmp.ne.s32.totalorder %s81, %s82
    %p94 = scmp.eq.s32.totalorder %s30, 1
    %p95 = por %p93, %p94
    %p97 = scmp.ne.s32.totalorder %s82, %s96
    %p98 = scmp.eq.s32.totalorder %s30, 0
    %p99 = por %p97, %p98
    %s101 = sadd.s32 %s100, 1
    %p104 = scmp.eq.s32.totalorder %s24, 1
    %p105 = scmp.ne.s32.totalorder %s100, %s102
    %p106 = scmp.eq.s32.totalorder %s24, 0
    %p107 = por %p105, %p106
    %p108 = scmp.ne.s32.totalorder %s100, %s102
    %p109 = scmp.eq.s32.totalorder %s29, 1
    %p110 = por %p108, %p109
    %p111 = scmp.ne.s32.totalorder %s102, %s103
    %p112 = scmp.eq.s32.totalorder %s29, 0
    %p113 = por %p111, %p112
    %p114 = scmp.ne.s32.totalorder %s102, %s103
    %p115 = scmp.eq.s32.totalorder %s30, 1
    %p116 = por %p114, %p115
    %p118 = scmp.ne.s32.totalorder %s103, %s117
    %p119 = scmp.eq.s32.totalorder %s30, 0
    %p120 = por %p118, %p119
    %s122 = sadd.s32 %s121, 1
    %p125 = scmp.eq.s32.totalorder %s24, 1
    %p126 = scmp.ne.s32.totalorder %s121, %s123
    %p127 = scmp.eq.s32.totalorder %s24, 0
    %p128 = por %p126, %p127
    %p129 = scmp.ne.s32.totalorder %s121, %s123
    %p130 = scmp.eq.s32.totalorder %s29, 1
    %p131 = por %p129, %p130
    %p132 = scmp.ne.s32.totalorder %s123, %s124
    %p133 = scmp.eq.s32.totalorder %s29, 0
    %p134 = por %p132, %p133
    %p135 = scmp.ne.s32.totalorder %s123, %s124
    %p136 = scmp.eq.s32.totalorder %s30, 1
    %p137 = por %p135, %p136
    %p139 = scmp.ne.s32.totalorder %s124, %s138
    %p140 = scmp.eq.s32.totalorder %s30, 0
    %p141 = por %p139, %p140
    %s143 = sadd.s32 %s142, 1
    %p146 = scmp.eq.s32.totalorder %s24, 1
    %p147 = scmp.ne.s32.totalorder %s142, %s144
    %p148 = scmp.eq.s32.totalorder %s24, 0
    %p149 = por %p147, %p148
    %p150 = scmp.ne.s32.totalorder %s142, %s144
    %p151 = scmp.eq.s32.totalorder %s29, 1
    %p152 = por %p150, %p151
    %p153 = scmp.ne.s32.totalorder %s144, %s145
    %p154 = scmp.eq.s32.totalorder %s29, 0
    %p155 = por %p153, %p154
    %p156 = scmp.ne.s32.totalorder %s144, %s145
    %p157 = scmp.eq.s32.totalorder %s30, 1
    %p158 = por %p156, %p157
    %p160 = scmp.ne.s32.totalorder %s145, %s159
    %p161 = scmp.eq.s32.totalorder %s30, 0
    %p162 = por %p160, %p161
    %s164 = sadd.s32 %s163, 1
    %p167 = scmp.eq.s32.totalorder %s24, 1
    %p168 = scmp.ne.s32.totalorder %s163, %s165
    %p169 = scmp.eq.s32.totalorder %s24, 0
    %p170 = por %p168, %p169
    %p171 = scmp.ne.s32.totalorder %s163, %s165
    %p172 = scmp.eq.s32.totalorder %s29, 1
    %p173 = por %p171, %p172
    %p174 = scmp.ne.s32.totalorder %s165, %s166
    %p175 = scmp.eq.s32.totalorder %s29, 0
    %p176 = por %p174, %p175
    %p177 = scmp.ne.s32.totalorder %s165, %s166
    %p178 = scmp.eq.s32.totalorder %s30, 1
    %p179 = por %p177, %p178
    %p181 = scmp.ne.s32.totalorder %s166, %s180
    %p182 = scmp.eq.s32.totalorder %s30, 0
    %p183 = por %p181, %p182
    %s185 = sadd.s32 %s184, 1
    %p188 = scmp.eq.s32.totalorder %s24, 1
    %p189 = scmp.ne.s32.totalorder %s184, %s186
    %p190 = scmp.eq.s32.totalorder %s24, 0
    %p191 = por %p189, %p190
    %p192 = scmp.ne.s32.totalorder %s184, %s186
    %p193 = scmp.eq.s32.totalorder %s29, 1
    %p194 = por %p192, %p193
    %p195 = scmp.ne.s32.totalorder %s186, %s187
    %p196 = scmp.eq.s32.totalorder %s29, 0
    %p197 = por %p195, %p196
    %p198 = scmp.ne.s32.totalorder %s186, %s187
    %p199 = scmp.eq.s32.totalorder %s30, 1
    %p200 = por %p198, %p199
    %p202 = scmp.ne.s32.totalorder %s187, %s201
    %p203 = scmp.eq.s32.totalorder %s30, 0
    %p204 = por %p202, %p203
    %s206 = sadd.s32 %s205, 1
    %p209 = scmp.eq.s32.totalorder %s24, 1
    %p210 = scmp.ne.s32.totalorder %s205, %s207
    %p211 = scmp.eq.s32.totalorder %s24, 0
    %p212 = por %p210, %p211
    %p213 = scmp.ne.s32.totalorder %s205, %s207
    %p214 = scmp.eq.s32.totalorder %s29, 1
    %p215 = por %p213, %p214
    %p216 = scmp.ne.s32.totalorder %s207, %s208
    %p217 = scmp.eq.s32.totalorder %s29, 0
    %p218 = por %p216, %p217
    %p219 = scmp.ne.s32.totalorder %s207, %s208
    %p220 = scmp.eq.s32.totalorder %s30, 1
    %p221 = por %p219, %p220
    %p223 = scmp.ne.s32.totalorder %s208, %s222
    %p224 = scmp.eq.s32.totalorder %s30, 0
    %p225 = por %p223, %p224
    %s227 = sadd.s32 %s226, 1
    %p230 = scmp.eq.s32.totalorder %s24, 1
    %p231 = scmp.ne.s32.totalorder %s226, %s228
    %p232 = scmp.eq.s32.totalorder %s24, 0
    %p233 = por %p231, %p232
    %p234 = scmp.ne.s32.totalorder %s226, %s228
    %p235 = scmp.eq.s32.totalorder %s29, 1
    %p236 = por %p234, %p235
    %p237 = scmp.ne.s32.totalorder %s228, %s229
    %p238 = scmp.eq.s32.totalorder %s29, 0
    %p239 = por %p237, %p238
    %p240 = scmp.ne.s32.totalorder %s228, %s229
    %p241 = scmp.eq.s32.totalorder %s30, 1
    %p242 = por %p240, %p241
    %p244 = scmp.ne.s32.totalorder %s229, %s243
    %p245 = scmp.eq.s32.totalorder %s30, 0
    %p246 = por %p244, %p245
    %s248 = sadd.s32 %s247, 1
    %p251 = scmp.eq.s32.totalorder %s24, 1
    %p252 = scmp.ne.s32.totalorder %s247, %s249
    %p253 = scmp.eq.s32.totalorder %s24, 0
    %p254 = por %p252, %p253
    %p255 = scmp.ne.s32.totalorder %s247, %s249
    %p256 = scmp.eq.s32.totalorder %s29, 1
    %p257 = por %p255, %p256
    %p258 = scmp.ne.s32.totalorder %s249, %s250
    %p259 = scmp.eq.s32.totalorder %s29, 0
    %p260 = por %p258, %p259
    %p261 = scmp.ne.s32.totalorder %s249, %s250
    %p262 = scmp.eq.s32.totalorder %s30, 1
    %p263 = por %p261, %p262
    %p265 = scmp.ne.s32.totalorder %s250, %s264
    %p266 = scmp.eq.s32.totalorder %s30, 0
    %p267 = por %p265, %p266
    %s269 = sadd.s32 %s268, 1
    %p272 = scmp.eq.s32.totalorder %s24, 1
    %p273 = scmp.ne.s32.totalorder %s268, %s270
    %p274 = scmp.eq.s32.totalorder %s24, 0
    %p275 = por %p273, %p274
    %p276 = scmp.ne.s32.totalorder %s268, %s270
    %p277 = scmp.eq.s32.totalorder %s29, 1
    %p278 = por %p276, %p277
    %p279 = scmp.ne.s32.totalorder %s270, %s271
    %p280 = scmp.eq.s32.totalorder %s29, 0
    %p281 = por %p279, %p280
    %p282 = scmp.ne.s32.totalorder %s270, %s271
    %p283 = scmp.eq.s32.totalorder %s30, 1
    %p284 = por %p282, %p283
    %p286 = scmp.ne.s32.totalorder %s271, %s285
    %p287 = scmp.eq.s32.totalorder %s30, 0
    %p288 = por %p286, %p287
    %s290 = sadd.s32 %s289, 1
    %p293 = scmp.eq.s32.totalorder %s24, 1
    %p294 = scmp.ne.s32.totalorder %s289, %s291
    %p295 = scmp.eq.s32.totalorder %s24, 0
    %p296 = por %p294, %p295
    %p297 = scmp.ne.s32.totalorder %s289, %s291
    %p298 = scmp.eq.s32.totalorder %s29, 1
    %p299 = por %p297, %p298
    %p300 = scmp.ne.s32.totalorder %s291, %s292
    %p301 = scmp.eq.s32.totalorder %s29, 0
    %p302 = por %p300, %p301
    %p303 = scmp.ne.s32.totalorder %s291, %s292
    %p304 = scmp.eq.s32.totalorder %s30, 1
    %p305 = por %p303, %p304
    %p307 = scmp.ne.s32.totalorder %s292, %s306
    %p308 = scmp.eq.s32.totalorder %s30, 0
    %p309 = por %p307, %p308
    %s311 = sadd.s32 %s310, 1
    %p314 = scmp.eq.s32.totalorder %s24, 1
    %p315 = scmp.ne.s32.totalorder %s310, %s312
    %p316 = scmp.eq.s32.totalorder %s24, 0
    %p317 = por %p315, %p316
    %p318 = scmp.ne.s32.totalorder %s310, %s312
    %p319 = scmp.eq.s32.totalorder %s29, 1
    %p320 = por %p318, %p319
    %p321 = scmp.ne.s32.totalorder %s312, %s313
    %p322 = scmp.eq.s32.totalorder %s29, 0
    %p323 = por %p321, %p322
    %p324 = scmp.ne.s32.totalorder %s312, %s313
    %p325 = scmp.eq.s32.totalorder %s30, 1
    %p326 = por %p324, %p325
    %p328 = scmp.ne.s32.totalorder %s313, %s327
    %p329 = scmp.eq.s32.totalorder %s30, 0
    %p330 = por %p328, %p329
    %s332 = sadd.s32 %s331, 1
    %p335 = scmp.eq.s32.totalorder %s24, 1
    %p336 = scmp.ne.s32.totalorder %s331, %s333
    %p337 = scmp.eq.s32.totalorder %s24, 0
    %p338 = por %p336, %p337
    %p339 = scmp.ne.s32.totalorder %s331, %s333
    %p340 = scmp.eq.s32.totalorder %s29, 1
    %p341 = por %p339, %p340
    %p342 = scmp.ne.s32.totalorder %s333, %s334
    %p343 = scmp.eq.s32.totalorder %s29, 0
    %p344 = por %p342, %p343
    %p345 = scmp.ne.s32.totalorder %s333, %s334
    %p346 = scmp.eq.s32.totalorder %s30, 1
    %p347 = por %p345, %p346
    %p349 = scmp.ne.s32.totalorder %s334, %s348
    %p350 = scmp.eq.s32.totalorder %s30, 0
    %p351 = por %p349, %p350
    %s352 = ssub.s32 %s24, %s31
    %p353 = scmp.eq.s32.totalorder %s352, 0
    %s355 = sadd.s32 %s354, 1
    %s356 = scalar_select %p353, %s354, %s355
    %p359 = pneg %p353
    %p360 = scmp.eq.s32.totalorder %s24, 1
    %p361 = por %p359, %p360
    %p362 = scmp.ne.s32.totalorder %s354, %s357
    %p363 = scmp.eq.s32.totalorder %s24, 0
    %p364 = por %p362, %p363
    %p365 = scmp.ne.s32.totalorder %s354, %s357
    %p366 = scmp.eq.s32.totalorder %s29, 1
    %p367 = por %p365, %p366
    %p368 = scmp.ne.s32.totalorder %s357, %s358
    %p369 = scmp.eq.s32.totalorder %s29, 0
    %p370 = por %p368, %p369
    %p371 = scmp.ne.s32.totalorder %s357, %s358
    %p372 = scmp.eq.s32.totalorder %s30, 1
    %p373 = por %p371, %p372
    %p375 = scmp.ne.s32.totalorder %s358, %s374
    %p376 = scmp.eq.s32.totalorder %s30, 0
    %p377 = por %p375, %p376
    %s378 = ssub.s32 %s24, %s31
    %p379 = scmp.eq.s32.totalorder %s378, 0
    %s381 = sadd.s32 %s380, 1
    %s382 = scalar_select %p379, %s380, %s381
    %p385 = pneg %p379
    %p386 = scmp.eq.s32.totalorder %s24, 1
    %p387 = por %p385, %p386
    %p388 = scmp.ne.s32.totalorder %s380, %s383
    %p389 = scmp.eq.s32.totalorder %s24, 0
    %p390 = por %p388, %p389
    %p391 = scmp.ne.s32.totalorder %s380, %s383
    %p392 = scmp.eq.s32.totalorder %s29, 1
    %p393 = por %p391, %p392
    %p394 = scmp.ne.s32.totalorder %s383, %s384
    %p395 = scmp.eq.s32.totalorder %s29, 0
    %p396 = por %p394, %p395
    %p397 = scmp.ne.s32.totalorder %s383, %s384
    %p398 = scmp.eq.s32.totalorder %s30, 1
    %p399 = por %p397, %p398
    %p401 = scmp.ne.s32.totalorder %s384, %s400
    %p402 = scmp.eq.s32.totalorder %s30, 0
    %p403 = por %p401, %p402
    %s404 = ssub.s32 %s24, %s31
    %p405 = scmp.eq.s32.totalorder %s404, 0
    %s407 = sadd.s32 %s406, 1
    %s408 = scalar_select %p405, %s406, %s407
    %p411 = pneg %p405
    %p412 = scmp.eq.s32.totalorder %s24, 1
    %p413 = por %p411, %p412
    %p414 = scmp.ne.s32.totalorder %s406, %s409
    %p415 = scmp.eq.s32.totalorder %s24, 0
    %p416 = por %p414, %p415
    %p417 = scmp.ne.s32.totalorder %s406, %s409
    %p418 = scmp.eq.s32.totalorder %s29, 1
    %p419 = por %p417, %p418
    %p420 = scmp.ne.s32.totalorder %s409, %s410
    %p421 = scmp.eq.s32.totalorder %s29, 0
    %p422 = por %p420, %p421
    %p423 = scmp.ne.s32.totalorder %s409, %s410
    %p424 = scmp.eq.s32.totalorder %s30, 1
    %p425 = por %p423, %p424
    %p427 = scmp.ne.s32.totalorder %s410, %s426
    %p428 = scmp.eq.s32.totalorder %s30, 0
    %p429 = por %p427, %p428
    %p430 = scmp.le.s32.totalorder 1, %s24
    %p431 = scmp.lt.s32.totalorder %s24, 3
    %p432 = pnand %p430, %p431
    %p433 = pneg %p432
    // Predicated region
    $region9: #{latent_ssm_forward.1} parent=5 // pred_check
      _
    $region10: #{latent_ssm_forward.1} parent=5 // pred_check_branch
      %435 = sbr.rel (%p432) target = $region12
    $region11: #{latent_ssm_forward.1} parent=5 // pred_region
      %s436 = ssub.s32 %s24, 1
      // Predicated region
      $region13: #{latent_ssm_forward.1} parent=11 // pred_check
        %p437 = pneg %p71
      $region14: #{latent_ssm_forward.1} parent=11 // pred_check_branch
        %439 = sbr.rel (%p437) target = $region16
      $region15: #{latent_ssm_forward.1} parent=11 // pred_region
        _
      $region16: #{latent_ssm_forward.1} parent=11 // pred_fallthru
        _
      // Predicated region
      $region17: #{latent_ssm_forward.1} parent=11 // pred_check
        %p440 = pneg %p92
      $region18: #{latent_ssm_forward.1} parent=11 // pred_check_branch
        %442 = sbr.rel (%p440) target = $region20
      $region19: #{latent_ssm_forward.1} parent=11 // pred_region
        _
      $region20: #{latent_ssm_forward.1} parent=11 // pred_fallthru
        _
      // Predicated region
      $region21: #{latent_ssm_forward.1} parent=11 // pred_check
        %p443 = pneg %p113
      $region22: #{latent_ssm_forward.1} parent=11 // pred_check_branch
        %445 = sbr.rel (%p443) target = $region24
      $region23: #{latent_ssm_forward.1} parent=11 // pred_region
        _
      $region24: #{latent_ssm_forward.1} parent=11 // pred_fallthru
        _
      // Predicated region
      $region25: #{latent_ssm_forward.1} parent=11 // pred_check
        %p446 = pneg %p134
      $region26: #{latent_ssm_forward.1} parent=11 // pred_check_branch
        %448 = sbr.rel (%p446) target = $region28
      $region27: #{latent_ssm_forward.1} parent=11 // pred_region
        _
      $region28: #{latent_ssm_forward.1} parent=11 // pred_fallthru
        _
      // Predicated region
      $region29: #{latent_ssm_forward.1} parent=11 // pred_check
        %p449 = pneg %p155
      $region30: #{latent_ssm_forward.1} parent=11 // pred_check_branch
        %451 = sbr.rel (%p449) target = $region32
      $region31: #{latent_ssm_forward.1} parent=11 // pred_region
        _
      $region32: #{latent_ssm_forward.1} parent=11 // pred_fallthru
        _
      // Predicated region
      $region33: #{latent_ssm_forward.1} parent=11 // pred_check
        %p452 = pneg %p176
      $region34: #{latent_ssm_forward.1} parent=11 // pred_check_branch
        %454 = sbr.rel (%p452) target = $region36
      $region35: #{latent_ssm_forward.1} parent=11 // pred_region
        _
      $region36: #{latent_ssm_forward.1} parent=11 // pred_fallthru
        _
      // Predicated region
      $region37: #{latent_ssm_forward.1} parent=11 // pred_check
        %p455 = pneg %p197
      $region38: #{latent_ssm_forward.1} parent=11 // pred_check_branch
        %457 = sbr.rel (%p455) target = $region40
      $region39: #{latent_ssm_forward.1} parent=11 // pred_region
        _
      $region40: #{latent_ssm_forward.1} parent=11 // pred_fallthru
        _
      // Predicated region
      $region41: #{latent_ssm_forward.1} parent=11 // pred_check
        %p458 = pneg %p218
      $region42: #{latent_ssm_forward.1} parent=11 // pred_check_branch
        %460 = sbr.rel (%p458) target = $region44
      $region43: #{latent_ssm_forward.1} parent=11 // pred_region
        _
      $region44: #{latent_ssm_forward.1} parent=11 // pred_fallthru
        _
      // Predicated region
      $region45: #{latent_ssm_forward.1} parent=11 // pred_check
        %p461 = pneg %p239
      $region46: #{latent_ssm_forward.1} parent=11 // pred_check_branch
        %463 = sbr.rel (%p461) target = $region48
      $region47: #{latent_ssm_forward.1} parent=11 // pred_region
        _
      $region48: #{latent_ssm_forward.1} parent=11 // pred_fallthru
        _
      // Predicated region
      $region49: #{latent_ssm_forward.1} parent=11 // pred_check
        %p464 = pneg %p260
      $region50: #{latent_ssm_forward.1} parent=11 // pred_check_branch
        %466 = sbr.rel (%p464) target = $region52
      $region51: #{latent_ssm_forward.1} parent=11 // pred_region
        _
      $region52: #{latent_ssm_forward.1} parent=11 // pred_fallthru
        _
      // Predicated region
      $region53: #{latent_ssm_forward.1} parent=11 // pred_check
        %p467 = pneg %p281
      $region54: #{latent_ssm_forward.1} parent=11 // pred_check_branch
        %469 = sbr.rel (%p467) target = $region56
      $region55: #{latent_ssm_forward.1} parent=11 // pred_region
        _
      $region56: #{latent_ssm_forward.1} parent=11 // pred_fallthru
        _
      // Predicated region
      $region57: #{latent_ssm_forward.1} parent=11 // pred_check
        %p470 = pneg %p302
      $region58: #{latent_ssm_forward.1} parent=11 // pred_check_branch
        %472 = sbr.rel (%p470) target = $region60
      $region59: #{latent_ssm_forward.1} parent=11 // pred_region
        _
      $region60: #{latent_ssm_forward.1} parent=11 // pred_fallthru
        _
      // Predicated region
      $region61: #{latent_ssm_forward.1} parent=11 // pred_check
        %p473 = pneg %p323
      $region62: #{latent_ssm_forward.1} parent=11 // pred_check_branch
        %475 = sbr.rel (%p473) target = $region64
      $region63: #{latent_ssm_forward.1} parent=11 // pred_region
        _
      $region64: #{latent_ssm_forward.1} parent=11 // pred_fallthru
        _
      // Predicated region
      $region65: #{latent_ssm_forward.1} parent=11 // pred_check
        %p476 = pneg %p344
      $region66: #{latent_ssm_forward.1} parent=11 // pred_check_branch
        %478 = sbr.rel (%p476) target = $region68
      $region67: #{latent_ssm_forward.1} parent=11 // pred_region
        _
      $region68: #{latent_ssm_forward.1} parent=11 // pred_fallthru
        _
    $region12: #{latent_ssm_forward.1} parent=5 // pred_fallthru
      _
    %p479 = scmp.lt.s32.totalorder %s24, 2
    // Predicated region
    $region69: #{latent_ssm_forward.1} parent=5 // pred_check
      %p480 = pneg %p479
    $region70: #{latent_ssm_forward.1} parent=5 // pred_check_branch
      %482 = sbr.rel (%p480) target = $region72
    $region71: #{latent_ssm_forward.1} parent=5 // pred_region
      // Predicated region
      $region73: #{latent_ssm_forward.1} parent=71 // pred_check
        %p483 = pneg %p44
      $region74: #{latent_ssm_forward.1} parent=71 // pred_check_branch
        %485 = sbr.rel (%p483) target = $region76
      $region75: #{latent_ssm_forward.1} parent=71 // pred_region
        %p486 = scmp.lt.s32.totalorder %s24, 1
        %s487 = scalar_select %p486, %s24, 1
        %s488 = smul.addr %s487, 8
        %s489 = smul.addr %s488, 8
        %s490 = scalar_lea.vmem %s0, %s489
      $region76: #{latent_ssm_forward.1} parent=71 // pred_fallthru
        _
    $region72: #{latent_ssm_forward.1} parent=5 // pred_fallthru
      _
    %p491 = scmp.le.s32.totalorder 1, %s24
    %p492 = scmp.lt.s32.totalorder %s24, 3
    %p493 = pnand %p491, %p492
    %p494 = pneg %p493
    // Predicated region
    $region77: #{latent_ssm_forward.1} parent=5 // pred_check
      _
    $region78: #{latent_ssm_forward.1} parent=5 // pred_check_branch
      %496 = sbr.rel (%p493) target = $region80
    $region79: #{latent_ssm_forward.1} parent=5 // pred_region
      %s497 = ssub.s32 %s24, 1
      %p498 = scmp.lt.s32.totalorder %s29, 1
      %s499 = scalar_select %p498, %s29, 1
      %s500 = smul.addr %s499, 8
      %s501 = smul.addr %s500, 8
      %s502 = scalar_lea.vmem %s0, %s501
      %p503 = pneg %p50
      %p504 = pneg %p47
      %p505 = pneg %p71
      %p506 = pneg %p68
      %p507 = pneg %p92
      %p508 = pneg %p89
      %p509 = pneg %p113
      %p510 = pneg %p110
      %p511 = pneg %p134
      %p512 = pneg %p131
      %p513 = pneg %p155
      %p514 = pneg %p152
      %p515 = pneg %p176
      %p516 = pneg %p173
      %p517 = pneg %p197
      %p518 = pneg %p194
      %p519 = pneg %p218
      %p520 = pneg %p215
      %p521 = pneg %p239
      %p522 = pneg %p236
      %p523 = pneg %p260
      %p524 = pneg %p257
      %p525 = pneg %p281
      %p526 = pneg %p278
      %p527 = pneg %p302
      %p528 = pneg %p299
      %p529 = pneg %p323
      %p530 = pneg %p320
      %p531 = pneg %p344
      %p532 = pneg %p341
      %p533 = pneg %p370
      %p534 = pneg %p367
      %p535 = scmp.lt.s32.totalorder %s29, 1
      %s536 = scalar_select %p535, %s29, 1
      %s537 = smul.addr %s536, 4
      %s538 = smul.addr %s537, 8
      %s539 = scalar_lea.vmem %s15, %s538
      %p540 = pneg %p396
      %p541 = pneg %p393
      %p542 = scmp.lt.s32.totalorder %s29, 1
      %s543 = scalar_select %p542, %s29, 1
      %s544 = smul.addr %s543, 8
      %s545 = scalar_lea.vmem %s16, %s544
      %p546 = pneg %p422
      %p547 = pneg %p419
      %p548 = scmp.lt.s32.totalorder %s29, 1
      %s549 = scalar_select %p548, %s29, 1
      %s550 = smul.addr %s549, 8
      %s551 = scalar_lea.vmem %s17, %s550
      %p552 = scmp.lt.s32.totalorder %s29, 1
      %s553 = scalar_select %p552, %s29, 1
      %s554 = smul.addr %s553, 8
      %s555 = smul.addr %s554, 8
      %s556 = scalar_lea.vmem %s0, %s555
      %p557 = scmp.lt.s32.totalorder %s29, 1
      %s558 = scalar_select %p557, %s29, 1
      %s559 = smul.addr %s558, 4
      %s560 = smul.addr %s559, 8
      %s561 = scalar_lea.vmem %s15, %s560
      %p562 = scmp.lt.s32.totalorder %s29, 1
      %s563 = scalar_select %p562, %s29, 1
      %s564 = smul.addr %s563, 8
      %s565 = scalar_lea.vmem %s16, %s564
      %p566 = scmp.lt.s32.totalorder %s29, 1
      %s567 = scalar_select %p566, %s29, 1
      %s568 = smul.addr %s567, 8
      %s569 = scalar_lea.vmem %s17, %s568
      %v570 = vld [vmem:[%s556] sm:$0xff]
      %v571 = vld [vmem:[%s556 + $0x8] sm:$0xff]
      %v572 = vld [vmem:[%s556 + $0x10] sm:$0xff]
      %v573 = vld [vmem:[%s556 + $0x18] sm:$0xff]
      %v574 = vld [vmem:[%s556 + $0x20] sm:$0xff]
      %v575 = vld [vmem:[%s556 + $0x28] sm:$0xff]
      %v576 = vld [vmem:[%s556 + $0x30] sm:$0xff]
      %v577 = vld [vmem:[%s556 + $0x38] sm:$0xff]
      %v578 = vld [vmem:[%s1] sm:$0xff]
      %v579 = vld [vmem:[%s1 + $0x8] sm:$0xff]
      %v580 = vld [vmem:[%s1 + $0x10] sm:$0xff]
      %v581 = vld [vmem:[%s1 + $0x18] sm:$0xff]
      %v582 = vld [vmem:[%s1 + $0x20] sm:$0xff]
      %v583 = vld [vmem:[%s1 + $0x28] sm:$0xff]
      %v584 = vld [vmem:[%s1 + $0x30] sm:$0xff]
      %v585 = vld [vmem:[%s1 + $0x38] sm:$0xff]
      %v586 = vld [vmem:[%s1 + $0x40] sm:$0xff]
      %v587 = vld [vmem:[%s1 + $0x48] sm:$0xff]
      %v588 = vld [vmem:[%s1 + $0x50] sm:$0xff]
      %v589 = vld [vmem:[%s1 + $0x58] sm:$0xff]
      %v590 = vld [vmem:[%s1 + $0x60] sm:$0xff]
      %v591 = vld [vmem:[%s1 + $0x68] sm:$0xff]
      %v592 = vld [vmem:[%s1 + $0x70] sm:$0xff]
      %v593 = vld [vmem:[%s1 + $0x78] sm:$0xff]
      %v594 = vld [vmem:[%s1 + $0x80] sm:$0xff]
      %v595 = vld [vmem:[%s1 + $0x88] sm:$0xff]
      %v596 = vld [vmem:[%s2] sm:$0x1]
      %v598 = vlaneseq
      %v599 = vshrl.u32 %v598, 7
      %v600 = vsub.s32 0, %v599
      %v601 = vrot.slane %v596, %v600
      %vm603 = vcmask 130048
      %v605 = vsel %vm603, %v571, 0
      %v608 = vsel %vm603, %v573, 0
      %v611 = vsel %vm603, %v575, 0
      %v614 = vsel %vm603, %v577, 0
      %616 = vmatprep.subr.mxu0 0.0
      %617 = vmatpush1.msra.mxu0 %v578
      %618 = vmatprep.subr.mxu0 0.0
      %619 = vmatpush1.msra.mxu0 %v579
      %620 = vmatprep.subr.mxu0 0.0
      %621 = vmatpush1.msra.mxu0 %v580
      %622 = vmatprep.subr.mxu0 0.0
      %623 = vmatpush1.msra.mxu0 %v581
      %624 = vmatprep.subr.mxu0 0.0
      %625 = vmatpush1.msra.mxu0 %v582
      %626 = vmatprep.subr.mxu0 0.0
      %627 = vmatpush1.msra.mxu0 %v583
      %628 = vmatprep.subr.mxu0 0.0
      %629 = vmatpush1.msra.mxu0 %v584
      %630 = vmatprep.subr.mxu0 0.0
      %631 = vmatpush1.msra.mxu0 %v585
      %632 = vmatprep.subr.mxu0 0.0
      %633 = vmatpush1.msra.mxu0 %v586
      %634 = vmatprep.subr.mxu0 0.0
      %635 = vmatpush1.msra.mxu0 %v587
      %636 = vmatprep.subr.mxu0 0.0
      %637 = vmatpush1.msra.mxu0 %v588
      %638 = vmatprep.subr.mxu0 0.0
      %639 = vmatpush1.msra.mxu0 %v589
      %640 = vmatprep.subr.mxu0 0.0
      %641 = vmatpush1.msra.mxu0 %v590
      %642 = vmatprep.subr.mxu0 0.0
      %643 = vmatpush1.msra.mxu0 %v591
      %644 = vmatprep.subr.mxu0 0.0
      %645 = vmatpush1.msra.mxu0 %v592
      %646 = vmatprep.subr.mxu0 0.0
      %647 = vmatpush1.msra.mxu0 %v593
      %648 = vmatprep.subr.mxu0 0.0
      %649 = vmatpush1.msra.mxu0 %v594
      %650 = vmatprep.subr.mxu0 0.0
      %651 = vmatpush1.msra.mxu0 %v595
      %652 = vmatprep.subr.mxu0 0.0
      %653 = vmatpush1.msra.mxu0 0.0
      %654 = vmatprep.subr.mxu0 0.0
      %655 = vmatpush1.msra.mxu0 0.0
      %656 = vmatprep.subr.mxu0 0.0
      %657 = vmatpush1.msra.mxu0 0.0
      %658 = vmatprep.subr.mxu0 0.0
      %659 = vmatpush1.msra.mxu0 0.0
      %660 = vmatprep.subr.mxu0 0.0
      %661 = vmatpush1.msra.mxu0 0.0
      %662 = vmatprep.subr.mxu0 0.0
      %663 = vmatpush1.msra.mxu0 0.0
      %664 = vmatprep.subr.mxu0 0.0
      %665 = vmatpush1.msra.mxu0 0.0
      %666 = vmatprep.subr.mxu0 0.0
      %667 = vmatpush1.msra.mxu0 0.0
      %668 = vmatprep.subr.mxu0 0.0
      %669 = vmatpush1.msra.mxu0 0.0
      %670 = vmatprep.subr.mxu0 0.0
      %671 = vmatpush1.msra.mxu0 0.0
      %672 = vmatprep.subr.mxu0 0.0
      %673 = vmatpush1.msra.mxu0 0.0
      %674 = vmatprep.subr.mxu0 0.0
      %675 = vmatpush1.msra.mxu0 0.0
      %676 = vmatprep.subr.mxu0 0.0
      %677 = vmatpush1.msra.mxu0 0.0
      %678 = vmatprep.subr.mxu0 0.0
      %679 = vmatpush1.msra.mxu0 0.0
      %680 = vmatprep.mubr.f32.mxu0 %v605
      %681 = vmatmul.mubr.f32.gmra.mrb[0].mxu0 %v570
      %v682 = vpop.f32.mrb[0].mxu0
      %v683 = vadd.f32 %v601, %v682
      %v684 = vpop.f32.mrb[0].mxu0
      %685 = vmatprep.mubr.f32.mxu0 %v608
      %686 = vmatmul.mubr.f32.gmra.mrb[0].mxu0 %v572
      %v687 = vpop.f32.mrb[0].mxu0
      %v688 = vadd.f32 %v601, %v687
      %v689 = vpop.f32.mrb[0].mxu0
      %690 = vmatprep.mubr.f32.mxu0 %v611
      %691 = vmatmul.mubr.f32.gmra.mrb[0].mxu0 %v574
      %v692 = vpop.f32.mrb[0].mxu0
      %v693 = vadd.f32 %v601, %v692
      %v694 = vpop.f32.mrb[0].mxu0
      %695 = vmatprep.mubr.f32.mxu0 %v614
      %696 = vmatmul.mubr.f32.gmra.mrb[0].mxu0 %v576
      %v697 = vpop.f32.mrb[0].mxu0
      %v698 = vadd.f32 %v601, %v697
      %v699 = vpop.f32.mrb[0].mxu0
      %700 = vdwg.mxu0
      %v701 = vld [vmem:[%s3] sm:$0xff]
      %v702 = vld [vmem:[%s3 + $0x8] sm:$0xff]
      %v703 = vld [vmem:[%s3 + $0x10] sm:$0xff]
      %v704 = vld [vmem:[%s3 + $0x18] sm:$0xff]
      %v705 = vld [vmem:[%s4] sm:$0x1]
      %v707 = vlaneseq
      %v708 = vshrl.u32 %v707, 7
      %v709 = vsub.s32 0, %v708
      %v710 = vrot.slane %v705, %v709
      %716 = vrot.lane.b32.xlu0 %v683, 96
      %v717 = vpop.permute.xlu0 %716
      %718 = vrot.lane.b32.xlu0 %v688, 96
      %v719 = vpop.permute.xlu0 %718
      %720 = vrot.lane.b32.xlu0 %v693, 96
      %v721 = vpop.permute.xlu0 %720
      %722 = vrot.lane.b32.xlu0 %v698, 96
      %v723 = vpop.permute.xlu0 %722
      %vm724 = vcmask 261120
      %v725 = vsel %vm724, %v717, 0
      %v727 = vsel %vm724, %v719, 0
      %v729 = vsel %vm724, %v721, 0
      %v731 = vsel %vm724, %v723, 0
      %733 = vmatprep.subr.mxu0 0.0
      %734 = vmatpush1.msra.mxu0 %v701
      %735 = vmatprep.subr.mxu0 0.0
      %736 = vmatpush1.msra.mxu0 %v702
      %737 = vmatprep.subr.mxu0 0.0
      %738 = vmatpush1.msra.mxu0 %v703
      %739 = vmatprep.subr.mxu0 0.0
      %740 = vmatpush1.msra.mxu0 %v704
      %741 = vmatprep.subr.mxu0 0.0
      %742 = vmatpush1.msra.mxu0 0.0
      %743 = vmatprep.subr.mxu0 0.0
      %744 = vmatpush1.msra.mxu0 0.0
      %745 = vmatprep.subr.mxu0 0.0
      %746 = vmatpush1.msra.mxu0 0.0
      %747 = vmatprep.subr.mxu0 0.0
      %748 = vmatpush1.msra.mxu0 0.0
      %749 = vmatprep.subr.mxu0 0.0
      %750 = vmatpush1.msra.mxu0 0.0
      %751 = vmatprep.subr.mxu0 0.0
      %752 = vmatpush1.msra.mxu0 0.0
      %753 = vmatprep.subr.mxu0 0.0
      %754 = vmatpush1.msra.mxu0 0.0
      %755 = vmatprep.subr.mxu0 0.0
      %756 = vmatpush1.msra.mxu0 0.0
      %757 = vmatprep.subr.mxu0 0.0
      %758 = vmatpush1.msra.mxu0 0.0
      %759 = vmatprep.subr.mxu0 0.0
      %760 = vmatpush1.msra.mxu0 0.0
      %761 = vmatprep.subr.mxu0 0.0
      %762 = vmatpush1.msra.mxu0 0.0
      %763 = vmatprep.subr.mxu0 0.0
      %764 = vmatpush1.msra.mxu0 0.0
      %765 = vmatprep.subr.mxu0 0.0
      %766 = vmatpush1.msra.mxu0 0.0
      %767 = vmatprep.subr.mxu0 0.0
      %768 = vmatpush1.msra.mxu0 0.0
      %769 = vmatprep.subr.mxu0 0.0
      %770 = vmatpush1.msra.mxu0 0.0
      %771 = vmatprep.subr.mxu0 0.0
      %772 = vmatpush1.msra.mxu0 0.0
      %773 = vmatprep.subr.mxu0 0.0
      %774 = vmatpush1.msra.mxu0 0.0
      %775 = vmatprep.subr.mxu0 0.0
      %776 = vmatpush1.msra.mxu0 0.0
      %777 = vmatprep.subr.mxu0 0.0
      %778 = vmatpush1.msra.mxu0 0.0
      %779 = vmatprep.subr.mxu0 0.0
      %780 = vmatpush1.msra.mxu0 0.0
      %781 = vmatprep.subr.mxu0 0.0
      %782 = vmatpush1.msra.mxu0 0.0
      %783 = vmatprep.subr.mxu0 0.0
      %784 = vmatpush1.msra.mxu0 0.0
      %785 = vmatprep.subr.mxu0 0.0
      %786 = vmatpush1.msra.mxu0 0.0
      %787 = vmatprep.subr.mxu0 0.0
      %788 = vmatpush1.msra.mxu0 0.0
      %789 = vmatprep.subr.mxu0 0.0
      %790 = vmatpush1.msra.mxu0 0.0
      %791 = vmatprep.subr.mxu0 0.0
      %792 = vmatpush1.msra.mxu0 0.0
      %793 = vmatprep.subr.mxu0 0.0
      %794 = vmatpush1.msra.mxu0 0.0
      %795 = vmatprep.subr.mxu0 0.0
      %796 = vmatpush1.msra.mxu0 0.0
      %797 = vmatprep.mubr.f32.mxu0 0.0
      %798 = vmatmul.mubr.f32.gmra.mrb[0].mxu0 %v725
      %v799 = vpop.f32.mrb[0].mxu0
      %v800 = vadd.f32 %v710, %v799
      %v801 = vpop.f32.mrb[0].mxu0
      %802 = vmatprep.mubr.f32.mxu0 0.0
      %803 = vmatmul.mubr.f32.gmra.mrb[0].mxu0 %v727
      %v804 = vpop.f32.mrb[0].mxu0
      %v805 = vadd.f32 %v710, %v804
      %v806 = vpop.f32.mrb[0].mxu0
      %807 = vmatprep.mubr.f32.mxu0 0.0
      %808 = vmatmul.mubr.f32.gmra.mrb[0].mxu0 %v729
      %v809 = vpop.f32.mrb[0].mxu0
      %v810 = vadd.f32 %v710, %v809
      %v811 = vpop.f32.mrb[0].mxu0
      %812 = vmatprep.mubr.f32.mxu0 0.0
      %813 = vmatmul.mubr.f32.gmra.mrb[0].mxu0 %v731
      %v814 = vpop.f32.mrb[0].mxu0
      %v815 = vadd.f32 %v710, %v814
      %v816 = vpop.f32.mrb[0].mxu0
      %817 = vdwg.mxu0
      %v818 = vlaneseq
      %v819 = vand.u32 %v818, 127
      %vm820 = vcmp.lt.s32.totalorder %v819, 8
      %v821 = vsel %vm820, %v800, -1e+30
      %v822 = vsel %vm820, %v805, -1e+30
      %v823 = vsel %vm820, %v810, -1e+30
      %v824 = vsel %vm820, %v815, -1e+30
      %v825 = vsel %vm603, %v821, -inf
      %826 = vmax.xlane.f32.xlu0 %v825
      %v827 = vpop.xlane.xlu0 %826
      %v828 = vsel %vm603, %v822, -inf
      %829 = vmax.xlane.f32.xlu0 %v828
      %v830 = vpop.xlane.xlu0 %829
      %v831 = vsel %vm603, %v823, -inf
      %832 = vmax.xlane.f32.xlu0 %v831
      %v833 = vpop.xlane.xlu0 %832
      %v834 = vsel %vm603, %v824, -inf
      %835 = vmax.xlane.f32.xlu0 %v834
      %v836 = vpop.xlane.xlu0 %835
      %v837 = vsel %vm820, -1e+30, %v800
      %v838 = vsel %vm820, -1e+30, %v805
      %v839 = vsel %vm820, -1e+30, %v810
      %v840 = vsel %vm820, -1e+30, %v815
      %v841 = vsel %vm603, %v837, -inf
      %842 = vmax.xlane.f32.xlu0 %v841
      %v843 = vpop.xlane.xlu0 %842
      %v844 = vsel %vm603, %v838, -inf
      %845 = vmax.xlane.f32.xlu0 %v844
      %v846 = vpop.xlane.xlu0 %845
      %v847 = vsel %vm603, %v839, -inf
      %848 = vmax.xlane.f32.xlu0 %v847
      %v849 = vpop.xlane.xlu0 %848
      %v850 = vsel %vm603, %v840, -inf
      %851 = vmax.xlane.f32.xlu0 %v850
      %v852 = vpop.xlane.xlu0 %851
      %v853 = vsel %vm820, %v827, %v843
      %v854 = vsel %vm820, %v830, %v846
      %v855 = vsel %vm820, %v833, %v849
      %v856 = vsel %vm820, %v836, %v852
      %v857 = vsub.f32 %v800, %v853
      %v858 = vsub.f32 %v805, %v854
      %v859 = vsub.f32 %v810, %v855
      %v860 = vsub.f32 %v815, %v856
      %v861 = vmul.f32 %v857, 1.442695
      %v862 = vpow.pop %v861
      %v863 = vmul.f32 %v858, 1.442695
      %v864 = vpow.pop %v863
      %v865 = vmul.f32 %v859, 1.442695
      %v866 = vpow.pop %v865
      %v867 = vmul.f32 %v860, 1.442695
      %v868 = vpow.pop %v867
      %v869 = vsel %vm820, %v862, 0.0
      %v870 = vsel %vm820, %v864, 0.0
      %v871 = vsel %vm820, %v866, 0.0
      %v872 = vsel %vm820, %v868, 0.0
      %v873 = vsel %vm603, %v869, 0.0
      %874 = vadd.xlane.f32.xlu0 %v873
      %v875 = vpop.xlane.xlu0 %874
      %v876 = vsel %vm603, %v870, 0.0
      %877 = vadd.xlane.f32.xlu0 %v876
      %v878 = vpop.xlane.xlu0 %877
      %v879 = vsel %vm603, %v871, 0.0
      %880 = vadd.xlane.f32.xlu0 %v879
      %v881 = vpop.xlane.xlu0 %880
      %v882 = vsel %vm603, %v872, 0.0
      %883 = vadd.xlane.f32.xlu0 %v882
      %v884 = vpop.xlane.xlu0 %883
      %v885 = vsel %vm820, 0.0, %v862
      %v886 = vsel %vm820, 0.0, %v864
      %v887 = vsel %vm820, 0.0, %v866
      %v888 = vsel %vm820, 0.0, %v868
      %v889 = vsel %vm603, %v885, 0.0
      %890 = vadd.xlane.f32.xlu0 %v889
      %v891 = vpop.xlane.xlu0 %890
      %v892 = vsel %vm603, %v886, 0.0
      %893 = vadd.xlane.f32.xlu0 %v892
      %v894 = vpop.xlane.xlu0 %893
      %v895 = vsel %vm603, %v887, 0.0
      %896 = vadd.xlane.f32.xlu0 %v895
      %v897 = vpop.xlane.xlu0 %896
      %v898 = vsel %vm603, %v888, 0.0
      %899 = vadd.xlane.f32.xlu0 %v898
      %v900 = vpop.xlane.xlu0 %899
      %v901 = vsel %vm820, %v875, %v891
      %v902 = vsel %vm820, %v878, %v894
      %v903 = vsel %vm820, %v881, %v897
      %v904 = vsel %vm820, %v884, %v900
      %v905 = vrcp.pop %v901
      %v906 = vrcp.pop %v902
      %v907 = vrcp.pop %v903
      %v908 = vrcp.pop %v904
      %v909 = vmul.f32 %v862, %v905
      %v910 = vmul.f32 %v864, %v906
      %v911 = vmul.f32 %v866, %v907
      %v912 = vmul.f32 %v868, %v908
      %913 = vxpose.xlu0.b32.start [1/16] %v909, 128
      %914 = vxpose.xlu0.b32.cont [2/16] %v910, 128
      %915 = vxpose.xlu0.b32.cont [3/16] %v911, 128
      %916 = vxpose.xlu0.b32.cont [4/16] %v912, 128
      %917 = vxpose.xlu0.b32.cont [5/16] 0.0, 128
      %918 = vxpose.xlu0.b32.cont [6/16] 0.0, 128
      %919 = vxpose.xlu0.b32.cont [7/16] 0.0, 128
      %920 = vxpose.xlu0.b32.cont [8/16] 0.0, 128
      %921 = vxpose.xlu0.b32.cont [9/16] 0.0, 128
      %922 = vxpose.xlu0.b32.cont [10/16] 0.0, 128
      %923 = vxpose.xlu0.b32.cont [11/16] 0.0, 128
      %924 = vxpose.xlu0.b32.cont [12/16] 0.0, 128
      %925 = vxpose.xlu0.b32.cont [13/16] 0.0, 128
      %926 = vxpose.xlu0.b32.cont [14/16] 0.0, 128
      %927 = vxpose.xlu0.b32.cont [15/16] 0.0, 128
      %928 = vxpose.xlu0.b32.end [16/16] 0.0, 128
      %v929 = vpop.trf.xlu0
      %v930 = vpop.trf.xlu0
      %v931 = vpop.trf.xlu0
      %v932 = vpop.trf.xlu0
      %v933 = vpop.trf.xlu0
      %v934 = vpop.trf.xlu0
      %v935 = vpop.trf.xlu0
      %v936 = vpop.trf.xlu0
      %v937 = vpop.trf.xlu0
      %v938 = vpop.trf.xlu0
      %v939 = vpop.trf.xlu0
      %v940 = vpop.trf.xlu0
      %v941 = vpop.trf.xlu0
      %v942 = vpop.trf.xlu0
      %v943 = vpop.trf.xlu0
      %v944 = vpop.trf.xlu0
      %v946 = vsel %vm724, %v929, 0
      %v949 = vsel %vm724, %v930, 0
      %951 = vmatprep.subr.mxu0 0.0
      %952 = vmatpush1.msra.mxu0 %v683
      %953 = vmatprep.subr.mxu0 0.0
      %954 = vmatpush1.msra.mxu0 %v688
      %955 = vmatprep.subr.mxu0 0.0
      %956 = vmatpush1.msra.mxu0 %v693
      %957 = vmatprep.subr.mxu0 0.0
      %958 = vmatpush1.msra.mxu0 %v698
      %959 = vmatprep.subr.mxu0 0.0
      %960 = vmatpush1.msra.mxu0 0.0
      %961 = vmatprep.subr.mxu0 0.0
      %962 = vmatpush1.msra.mxu0 0.0
      %963 = vmatprep.subr.mxu0 0.0
      %964 = vmatpush1.msra.mxu0 0.0
      %965 = vmatprep.subr.mxu0 0.0
      %966 = vmatpush1.msra.mxu0 0.0
      %967 = vmatprep.subr.mxu0 0.0
      %968 = vmatpush1.msra.mxu0 0.0
      %969 = vmatprep.subr.mxu0 0.0
      %970 = vmatpush1.msra.mxu0 0.0
      %971 = vmatprep.subr.mxu0 0.0
      %972 = vmatpush1.msra.mxu0 0.0
      %973 = vmatprep.subr.mxu0 0.0
      %974 = vmatpush1.msra.mxu0 0.0
      %975 = vmatprep.subr.mxu0 0.0
      %976 = vmatpush1.msra.mxu0 0.0
      %977 = vmatprep.subr.mxu0 0.0
      %978 = vmatpush1.msra.mxu0 0.0
      %979 = vmatprep.subr.mxu0 0.0
      %980 = vmatpush1.msra.mxu0 0.0
      %981 = vmatprep.subr.mxu0 0.0
      %982 = vmatpush1.msra.mxu0 0.0
      %983 = vmatprep.subr.mxu0 0.0
      %984 = vmatpush1.msra.mxu0 0.0
      %985 = vmatprep.subr.mxu0 0.0
      %986 = vmatpush1.msra.mxu0 0.0
      %987 = vmatprep.subr.mxu0 0.0
      %988 = vmatpush1.msra.mxu0 0.0
      %989 = vmatprep.subr.mxu0 0.0
      %990 = vmatpush1.msra.mxu0 0.0
      %991 = vmatprep.subr.mxu0 0.0
      %992 = vmatpush1.msra.mxu0 0.0
      %993 = vmatprep.subr.mxu0 0.0
      %994 = vmatpush1.msra.mxu0 0.0
      %995 = vmatprep.subr.mxu0 0.0
      %996 = vmatpush1.msra.mxu0 0.0
      %997 = vmatprep.subr.mxu0 0.0
      %998 = vmatpush1.msra.mxu0 0.0
      %999 = vmatprep.subr.mxu0 0.0
      %1000 = vmatpush1.msra.mxu0 0.0
      %1001 = vmatprep.subr.mxu0 0.0
      %1002 = vmatpush1.msra.mxu0 0.0
      %1003 = vmatprep.subr.mxu0 0.0
      %1004 = vmatpush1.msra.mxu0 0.0
      %1005 = vmatprep.subr.mxu0 0.0
      %1006 = vmatpush1.msra.mxu0 0.0
      %1007 = vmatprep.subr.mxu0 0.0
      %1008 = vmatpush1.msra.mxu0 0.0
      %1009 = vmatprep.subr.mxu0 0.0
      %1010 = vmatpush1.msra.mxu0 0.0
      %1011 = vmatprep.subr.mxu0 0.0
      %1012 = vmatpush1.msra.mxu0 0.0
      %1013 = vmatprep.subr.mxu0 0.0
      %1014 = vmatpush1.msra.mxu0 0.0
      %1015 = vmatprep.mubr.f32.mxu0 0.0
      %1016 = vmatmul.mubr.f32.gmra.mrb[0].mxu0 %v946
      %v1017 = vpop.f32.mrb[0].mxu0
      %v1018 = vadd.f32 0.0, %v1017
      %v1019 = vpop.f32.mrb[0].mxu0
      %1020 = vmatprep.mubr.f32.mxu0 0.0
      %1021 = vmatmul.mubr.f32.gmra.mrb[0].mxu0 %v949
      %v1022 = vpop.f32.mrb[0].mxu0
      %v1023 = vadd.f32 0.0, %v1022
      %v1024 = vpop.f32.mrb[0].mxu0
      %1025 = vdwg.mxu0
      %1026 = vmatprep.subr.mxu0 0.0
      %1027 = vmatpush1.msra.mxu0 1.0
      %1028 = vmatprep.subr.mxu0 0.0
      %1029 = vmatpush1.msra.mxu0 1.0
      %1030 = vmatprep.subr.mxu0 0.0
      %1031 = vmatpush1.msra.mxu0 1.0
      %1032 = vmatprep.subr.mxu0 0.0
      %1033 = vmatpush1.msra.mxu0 1.0
      %1034 = vmatprep.subr.mxu0 0.0
      %1035 = vmatpush1.msra.mxu0 0.0
      %1036 = vmatprep.subr.mxu0 0.0
      %1037 = vmatpush1.msra.mxu0 0.0
      %1038 = vmatprep.subr.mxu0 0.0
      %1039 = vmatpush1.msra.mxu0 0.0
      %1040 = vmatprep.subr.mxu0 0.0
      %1041 = vmatpush1.msra.mxu0 0.0
      %1042 = vmatprep.subr.mxu0 0.0
      %1043 = vmatpush1.msra.mxu0 0.0
      %1044 = vmatprep.subr.mxu0 0.0
      %1045 = vmatpush1.msra.mxu0 0.0
      %1046 = vmatprep.subr.mxu0 0.0
      %1047 = vmatpush1.msra.mxu0 0.0
      %1048 = vmatprep.subr.mxu0 0.0
      %1049 = vmatpush1.msra.mxu0 0.0
      %1050 = vmatprep.subr.mxu0 0.0
      %1051 = vmatpush1.msra.mxu0 0.0
      %1052 = vmatprep.subr.mxu0 0.0
      %1053 = vmatpush1.msra.mxu0 0.0
      %1054 = vmatprep.subr.mxu0 0.0
      %1055 = vmatpush1.msra.mxu0 0.0
      %1056 = vmatprep.subr.mxu0 0.0
      %1057 = vmatpush1.msra.mxu0 0.0
      %1058 = vmatprep.subr.mxu0 0.0
      %1059 = vmatpush1.msra.mxu0 0.0
      %1060 = vmatprep.subr.mxu0 0.0
      %1061 = vmatpush1.msra.mxu0 0.0
      %1062 = vmatprep.subr.mxu0 0.0
      %1063 = vmatpush1.msra.mxu0 0.0
      %1064 = vmatprep.subr.mxu0 0.0
      %1065 = vmatpush1.msra.mxu0 0.0
      %1066 = vmatprep.subr.mxu0 0.0
      %1067 = vmatpush1.msra.mxu0 0.0
      %1068 = vmatprep.subr.mxu0 0.0
      %1069 = vmatpush1.msra.mxu0 0.0
      %1070 = vmatprep.subr.mxu0 0.0
      %1071 = vmatpush1.msra.mxu0 0.0
      %1072 = vmatprep.subr.mxu0 0.0
      %1073 = vmatpush1.msra.mxu0 0.0
      %1074 = vmatprep.subr.mxu0 0.0
      %1075 = vmatpush1.msra.mxu0 0.0
      %1076 = vmatprep.subr.mxu0 0.0
      %1077 = vmatpush1.msra.mxu0 0.0
      %1078 = vmatprep.subr.mxu0 0.0
      %1079 = vmatpush1.msra.mxu0 0.0
      %1080 = vmatprep.subr.mxu0 0.0
      %1081 = vmatpush1.msra.mxu0 0.0
      %1082 = vmatprep.subr.mxu0 0.0
      %1083 = vmatpush1.msra.mxu0 0.0
      %1084 = vmatprep.subr.mxu0 0.0
      %1085 = vmatpush1.msra.mxu0 0.0
      %1086 = vmatprep.subr.mxu0 0.0
      %1087 = vmatpush1.msra.mxu0 0.0
      %1088 = vmatprep.subr.mxu0 0.0
      %1089 = vmatpush1.msra.mxu0 0.0
      %1090 = vmatprep.mubr.f32.mxu0 0.0
      %1091 = vmatmul.mubr.f32.gmra.mrb[0].mxu0 %v946
      %v1092 = vpop.f32.mrb[0].mxu0
      %v1093 = vadd.f32 0.0, %v1092
      %v1094 = vpop.f32.mrb[0].mxu0
      %1095 = vmatprep.mubr.f32.mxu0 0.0
      %1096 = vmatmul.mubr.f32.gmra.mrb[0].mxu0 %v949
      %v1097 = vpop.f32.mrb[0].mxu0
      %v1098 = vadd.f32 0.0, %v1097
      %v1099 = vpop.f32.mrb[0].mxu0
      %1100 = vdwg.mxu0
      %v1101 = vadd.f32 %v1093, 1e-05
      %v1102 = vadd.f32 %v1098, 1e-05
      %v1103 = vrcp.pop %v1101
      %v1104 = vrcp.pop %v1102
      %1106 = vset.pattern.permute.xlu0 0
      %1107 = vperm.xlu0 %1106, %v1103
      %v1108 = vpop.permute.xlu0 %1107
      %1111 = vset.pattern.permute.xlu0 0
      %1112 = vperm.xlu0 %1111, %v1104
      %v1113 = vpop.permute.xlu0 %1112
      %v1115 = vmul.f32 %v1018, %v1108
      %v1116 = vmul.f32 %v1023, %v1113
      %vm1117 = vcmp.lt.s32.totalorder %v819, 16
      %v1118 = vsel %vm1117, %v1115, %v1116
      %1119 = vst.msk [vmem:[%s565] sm:$0xff] %vm724, %v1118
      %v1120 = vld [vmem:[%s5] sm:$0xff]
      %v1121 = vld [vmem:[%s5 + $0x8] sm:$0xff]
      %v1122 = vld [vmem:[%s5 + $0x10] sm:$0xff]
      %v1123 = vld [vmem:[%s5 + $0x18] sm:$0xff]
      %v1124 = vld [vmem:[%s5 + $0x20] sm:$0xff]
      %v1125 = vld [vmem:[%s5 + $0x28] sm:$0xff]
      %v1126 = vld [vmem:[%s5 + $0x30] sm:$0xff]
      %v1127 = vld [vmem:[%s5 + $0x38] sm:$0xff]
      %v1128 = vld [vmem:[%s5 + $0x40] sm:$0xff]
      %v1129 = vld [vmem:[%s5 + $0x48] sm:$0xff]
      %v1130 = vld [vmem:[%s5 + $0x50] sm:$0xff]
      %v1131 = vld [vmem:[%s5 + $0x58] sm:$0xff]
      %v1133 = vsel %vm724, %v1118, 0
      %1135 = vmatprep.subr.mxu0 %v1121
      %1136 = vmatpush1.msra.mxu0 %v1120
      %1137 = vmatprep.subr.mxu0 %v1124
      %1138 = vmatpush1.msra.mxu0 %v1123
      %1139 = vmatprep.subr.mxu0 %v1127
      %1140 = vmatpush1.msra.mxu0 %v1126
      %1141 = vmatprep.subr.mxu0 %v1130
      %1142 = vmatpush1.msra.mxu0 %v1129
      %1143 = vmatprep.subr.mxu0 0.0
      %1144 = vmatpush1.msra.mxu0 0.0
      %1145 = vmatprep.subr.mxu0 0.0
      %1146 = vmatpush1.msra.mxu0 0.0
      %1147 = vmatprep.subr.mxu0 0.0
      %1148 = vmatpush1.msra.mxu0 0.0
      %1149 = vmatprep.subr.mxu0 0.0
      %1150 = vmatpush1.msra.mxu0 0.0
      %1151 = vmatprep.subr.mxu0 0.0
      %1152 = vmatpush1.msra.mxu0 0.0
      %1153 = vmatprep.subr.mxu0 0.0
      %1154 = vmatpush1.msra.mxu0 0.0
      %1155 = vmatprep.subr.mxu0 0.0
      %1156 = vmatpush1.msra.mxu0 0.0
      %1157 = vmatprep.subr.mxu0 0.0
      %1158 = vmatpush1.msra.mxu0 0.0
      %1159 = vmatprep.subr.mxu0 0.0
      %1160 = vmatpush1.msra.mxu0 0.0
      %1161 = vmatprep.subr.mxu0 0.0
      %1162 = vmatpush1.msra.mxu0 0.0
      %1163 = vmatprep.subr.mxu0 0.0
      %1164 = vmatpush1.msra.mxu0 0.0
      %1165 = vmatprep.subr.mxu0 0.0
      %1166 = vmatpush1.msra.mxu0 0.0
      %1167 = vmatprep.subr.mxu0 0.0
      %1168 = vmatpush1.msra.mxu0 0.0
      %1169 = vmatprep.subr.mxu0 0.0
      %1170 = vmatpush1.msra.mxu0 0.0
      %1171 = vmatprep.subr.mxu0 0.0
      %1172 = vmatpush1.msra.mxu0 0.0
      %1173 = vmatprep.subr.mxu0 0.0
      %1174 = vmatpush1.msra.mxu0 0.0
      %1175 = vmatprep.subr.mxu0 0.0
      %1176 = vmatpush1.msra.mxu0 0.0
      %1177 = vmatprep.subr.mxu0 0.0
      %1178 = vmatpush1.msra.mxu0 0.0
      %1179 = vmatprep.subr.mxu0 0.0
      %1180 = vmatpush1.msra.mxu0 0.0
      %1181 = vmatprep.subr.mxu0 0.0
      %1182 = vmatpush1.msra.mxu0 0.0
      %1183 = vmatprep.subr.mxu0 0.0
      %1184 = vmatpush1.msra.mxu0 0.0
      %1185 = vmatprep.subr.mxu0 0.0
      %1186 = vmatpush1.msra.mxu0 0.0
      %1187 = vmatprep.subr.mxu0 0.0
      %1188 = vmatpush1.msra.mxu0 0.0
      %1189 = vmatprep.subr.mxu0 0.0
      %1190 = vmatpush1.msra.mxu0 0.0
      %1191 = vmatprep.subr.mxu0 0.0
      %1192 = vmatpush1.msra.mxu0 0.0
      %1193 = vmatprep.subr.mxu0 0.0
      %1194 = vmatpush1.msra.mxu0 0.0
      %1195 = vmatprep.subr.mxu0 0.0
      %1196 = vmatpush1.msra.mxu0 0.0
      %1197 = vmatprep.subr.mxu0 0.0
      %1198 = vmatpush1.msra.mxu0 0.0
      %1199 = vmatprep.mubr.f32.mxu0 0.0
      %1200 = vmatmul.mubr.f32.gmra.mrb[0].mxu0 %v1133
      %v1201 = vpop.f32.mrb[0].mxu0
      %v1202 = vadd.f32 0.0, %v1201
      %v1203 = vpop.f32.mrb[0].mxu0
      %v1204 = vadd.f32 0.0, %v1203
      %1205 = vdwg.mxu0
      %1206 = vmatprep.subr.mxu0 0.0
      %1207 = vmatpush1.msra.mxu0 %v1122
      %1208 = vmatprep.subr.mxu0 0.0
      %1209 = vmatpush1.msra.mxu0 %v1125
      %1210 = vmatprep.subr.mxu0 0.0
      %1211 = vmatpush1.msra.mxu0 %v1128
      %1212 = vmatprep.subr.mxu0 0.0
      %1213 = vmatpush1.msra.mxu0 %v1131
      %1214 = vmatprep.subr.mxu0 0.0
      %1215 = vmatpush1.msra.mxu0 0.0
      %1216 = vmatprep.subr.mxu0 0.0
      %1217 = vmatpush1.msra.mxu0 0.0
      %1218 = vmatprep.subr.mxu0 0.0
      %1219 = vmatpush1.msra.mxu0 0.0
      %1220 = vmatprep.subr.mxu0 0.0
      %1221 = vmatpush1.msra.mxu0 0.0
      %1222 = vmatprep.subr.mxu0 0.0
      %1223 = vmatpush1.msra.mxu0 0.0
      %1224 = vmatprep.subr.mxu0 0.0
      %1225 = vmatpush1.msra.mxu0 0.0
      %1226 = vmatprep.subr.mxu0 0.0
      %1227 = vmatpush1.msra.mxu0 0.0
      %1228 = vmatprep.subr.mxu0 0.0
      %1229 = vmatpush1.msra.mxu0 0.0
      %1230 = vmatprep.subr.mxu0 0.0
      %1231 = vmatpush1.msra.mxu0 0.0
      %1232 = vmatprep.subr.mxu0 0.0
      %1233 = vmatpush1.msra.mxu0 0.0
      %1234 = vmatprep.subr.mxu0 0.0
      %1235 = vmatpush1.msra.mxu0 0.0
      %1236 = vmatprep.subr.mxu0 0.0
      %1237 = vmatpush1.msra.mxu0 0.0
      %1238 = vmatprep.subr.mxu0 0.0
      %1239 = vmatpush1.msra.mxu0 0.0
      %1240 = vmatprep.subr.mxu0 0.0
      %1241 = vmatpush1.msra.mxu0 0.0
      %1242 = vmatprep.subr.mxu0 0.0
      %1243 = vmatpush1.msra.mxu0 0.0
      %1244 = vmatprep.subr.mxu0 0.0
      %1245 = vmatpush1.msra.mxu0 0.0
      %1246 = vmatprep.subr.mxu0 0.0
      %1247 = vmatpush1.msra.mxu0 0.0
      %1248 = vmatprep.subr.mxu0 0.0
      %1249 = vmatpush1.msra.mxu0 0.0
      %1250 = vmatprep.subr.mxu0 0.0
      %1251 = vmatpush1.msra.mxu0 0.0
      %1252 = vmatprep.subr.mxu0 0.0
      %1253 = vmatpush1.msra.mxu0 0.0
      %1254 = vmatprep.subr.mxu0 0.0
      %1255 = vmatpush1.msra.mxu0 0.0
      %1256 = vmatprep.subr.mxu0 0.0
      %1257 = vmatpush1.msra.mxu0 0.0
      %1258 = vmatprep.subr.mxu0 0.0
      %1259 = vmatpush1.msra.mxu0 0.0
      %1260 = vmatprep.subr.mxu0 0.0
      %1261 = vmatpush1.msra.mxu0 0.0
      %1262 = vmatprep.subr.mxu0 0.0
      %1263 = vmatpush1.msra.mxu0 0.0
      %1264 = vmatprep.subr.mxu0 0.0
      %1265 = vmatpush1.msra.mxu0 0.0
      %1266 = vmatprep.subr.mxu0 0.0
      %1267 = vmatpush1.msra.mxu0 0.0
      %1268 = vmatprep.subr.mxu0 0.0
      %1269 = vmatpush1.msra.mxu0 0.0
      %1270 = vmatprep.mubr.f32.mxu0 0.0
      %1271 = vmatmul.mubr.f32.gmra.mrb[0].mxu0 %v1133
      %v1272 = vpop.f32.mrb[0].mxu0
      %v1273 = vadd.f32 0.0, %v1272
      %v1274 = vpop.f32.mrb[0].mxu0
      %1275 = vdwg.mxu0
      %v1276 = vld [vmem:[%s6] sm:$0x1]
      %v1278 = vlaneseq
      %v1279 = vshrl.u32 %v1278, 7
      %v1280 = vsub.s32 0, %v1279
      %v1281 = vrot.slane %v1276, %v1280
      %v1283 = vadd.f32 %v1273, %v1281
      %v1284 = vmax.f32 %v1283, 0.0
      %v1285 = vand.u32 2147483647, %v1283
      %v1286 = vsub.f32 0.0, %v1285
      %v1287 = vmul.f32 %v1286, 1.442695
      %v1288 = vpow.pop %v1287
      %v1289 = vadd.f32 %v1288, 1.0
      %v1290 = vlog2.pop %v1289
      %v1291 = vmul.f32 %v1290, 0.6931472
      %v1292 = vadd.f32 %v1284, %v1291
      %v1293 = vlaneseq
      %v1294 = vshrl.u32 %v1293, 7
      %v1295 = vsub.s32 %v1294, 1
      %vm1296 = vcmp.eq.s32.totalorder %v819, %v1295
      %v1297 = vsel %vm1296, 1, 0
      %v1298 = vcvt.s32.f32 %v1297
      %v1299 = vsub.s32 %v1294, 2
      %vm1300 = vcmp.eq.s32.totalorder %v819, %v1299
      %v1301 = vsel %vm1300, 1, 0
      %v1302 = vcvt.s32.f32 %v1301
      %v1303 = vld [vmem:[%s7] sm:$0x77]
      %v1305 = vlaneseq
      %v1306 = vshrl.u32 %v1305, 7
      %v1307 = vsub.s32 2, %v1306
      %v1308 = vrot.slane %v1303, %v1307
      %v1309 = vlaneseq
      %v1310 = vshrl.u32 %v1309, 7
      %v1311 = vsub.s32 6, %v1310
      %v1312 = vrot.slane %v1303, %v1311
      %v1315 = vlaneseq
      %v1316 = vshrl.u32 %v1315, 7
      %v1317 = vsub.s32 2, %v1316
      %v1318 = vrot.slane %v1308, %v1317
      %v1319 = vlaneseq
      %v1320 = vshrl.u32 %v1319, 7
      %v1321 = vsub.s32 2, %v1320
      %v1322 = vrot.slane %v1312, %v1321
      %1325 = vrot.lane.b32.xlu0 %v1318, 64
      %v1326 = vpop.permute.xlu0 %1325
      %1327 = vrot.lane.b32.xlu0 %v1322, 64
      %v1328 = vpop.permute.xlu0 %1327
      %vm1329 = vcmask 523264
      %v1330 = vsel %vm1329, %v1326, %v1328
      %v1333 = vmul.f32 %v1202, %v1326
      %v1334 = vmul.f32 %v1204, %v1330
      %1337 = vrot.lane.b32.xlu0 %v1202, 64
      %v1338 = vpop.permute.xlu0 %1337
      %1339 = vrot.lane.b32.xlu0 %v1204, 64
      %v1340 = vpop.permute.xlu0 %1339
      %v1341 = vsel %vm1329, %v1338, %v1340
      %vm1344 = vcmask 64512
      %v1346 = vsel %vm1344, %v1298, 0
      %1348 = vmatprep.subr.mxu0 %v1340
      %1349 = vmatpush1.msra.mxu0 %v1341
      %1350 = vmatprep.subr.mxu0 0.0
      %1351 = vmatpush1.msra.mxu0 0.0
      %1352 = vmatprep.subr.mxu0 0.0
      %1353 = vmatpush1.msra.mxu0 0.0
      %1354 = vmatprep.subr.mxu0 0.0
      %1355 = vmatpush1.msra.mxu0 0.0
      %1356 = vmatprep.subr.mxu0 0.0
      %1357 = vmatpush1.msra.mxu0 0.0
      %1358 = vmatprep.subr.mxu0 0.0
      %1359 = vmatpush1.msra.mxu0 0.0
      %1360 = vmatprep.subr.mxu0 0.0
      %1361 = vmatpush1.msra.mxu0 0.0
      %1362 = vmatprep.subr.mxu0 0.0
      %1363 = vmatpush1.msra.mxu0 0.0
      %1364 = vmatprep.subr.mxu0 0.0
      %1365 = vmatpush1.msra.mxu0 0.0
      %1366 = vmatprep.subr.mxu0 0.0
      %1367 = vmatpush1.msra.mxu0 0.0
      %1368 = vmatprep.subr.mxu0 0.0
      %1369 = vmatpush1.msra.mxu0 0.0
      %1370 = vmatprep.subr.mxu0 0.0
      %1371 = vmatpush1.msra.mxu0 0.0
      %1372 = vmatprep.subr.mxu0 0.0
      %1373 = vmatpush1.msra.mxu0 0.0
      %1374 = vmatprep.subr.mxu0 0.0
      %1375 = vmatpush1.msra.mxu0 0.0
      %1376 = vmatprep.subr.mxu0 0.0
      %1377 = vmatpush1.msra.mxu0 0.0
      %1378 = vmatprep.subr.mxu0 0.0
      %1379 = vmatpush1.msra.mxu0 0.0
      %1380 = vmatprep.subr.mxu0 0.0
      %1381 = vmatpush1.msra.mxu0 0.0
      %1382 = vmatprep.subr.mxu0 0.0
      %1383 = vmatpush1.msra.mxu0 0.0
      %1384 = vmatprep.subr.mxu0 0.0
      %1385 = vmatpush1.msra.mxu0 0.0
      %1386 = vmatprep.subr.mxu0 0.0
      %1387 = vmatpush1.msra.mxu0 0.0
      %1388 = vmatprep.subr.mxu0 0.0
      %1389 = vmatpush1.msra.mxu0 0.0
      %1390 = vmatprep.subr.mxu0 0.0
      %1391 = vmatpush1.msra.mxu0 0.0
      %1392 = vmatprep.subr.mxu0 0.0
      %1393 = vmatpush1.msra.mxu0 0.0
      %1394 = vmatprep.subr.mxu0 0.0
      %1395 = vmatpush1.msra.mxu0 0.0
      %1396 = vmatprep.subr.mxu0 0.0
      %1397 = vmatpush1.msra.mxu0 0.0
      %1398 = vmatprep.subr.mxu0 0.0
      %1399 = vmatpush1.msra.mxu0 0.0
      %1400 = vmatprep.subr.mxu0 0.0
      %1401 = vmatpush1.msra.mxu0 0.0
      %1402 = vmatprep.subr.mxu0 0.0
      %1403 = vmatpush1.msra.mxu0 0.0
      %1404 = vmatprep.subr.mxu0 0.0
      %1405 = vmatpush1.msra.mxu0 0.0
      %1406 = vmatprep.subr.mxu0 0.0
      %1407 = vmatpush1.msra.mxu0 0.0
      %1408 = vmatprep.subr.mxu0 0.0
      %1409 = vmatpush1.msra.mxu0 0.0
      %1410 = vmatprep.subr.mxu0 0.0
      %1411 = vmatpush1.msra.mxu0 0.0
      %1412 = vmatprep.mubr.f32.mxu0 0.0
      %1413 = vmatmul.mubr.f32.gmra.mrb[0].mxu0 %v1346
      %v1414 = vpop.f32.mrb[0].mxu0
      %v1415 = vadd.f32 0.0, %v1414
      %v1416 = vpop.f32.mrb[0].mxu0
      %v1417 = vadd.f32 0.0, %v1416
      %1418 = vdwg.mxu0
      %v1419 = vlaneseq
      %v1420 = vshrl.u32 %v1419, 7
      %v1421 = vsub.s32 1, %v1420
      %v1422 = vrot.slane %v1303, %v1421
      %v1423 = vlaneseq
      %v1424 = vshrl.u32 %v1423, 7
      %v1425 = vsub.s32 5, %v1424
      %v1426 = vrot.slane %v1303, %v1425
      %v1429 = vlaneseq
      %v1430 = vshrl.u32 %v1429, 7
      %v1431 = vsub.s32 1, %v1430
      %v1432 = vrot.slane %v1422, %v1431
      %v1433 = vlaneseq
      %v1434 = vshrl.u32 %v1433, 7
      %v1435 = vsub.s32 1, %v1434
      %v1436 = vrot.slane %v1426, %v1435
      %v1437 = vmul.f32 %v1415, %v1432
      %v1438 = vmul.f32 %v1417, %v1436
      %1441 = vrot.lane.b32.xlu0 %v1437, 64
      %v1442 = vpop.permute.xlu0 %1441
      %1443 = vrot.lane.b32.xlu0 %v1438, 64
      %v1444 = vpop.permute.xlu0 %1443
      %v1445 = vsel %vm1329, %v1442, %v1444
      %v1448 = vadd.f32 %v1333, %v1442
      %v1449 = vadd.f32 %v1334, %v1445
      %v1451 = vsel %vm1344, %v1302, 0
      %1453 = vmatprep.subr.mxu0 %v1340
      %1454 = vmatpush1.msra.mxu0 %v1341
      %1455 = vmatprep.subr.mxu0 0.0
      %1456 = vmatpush1.msra.mxu0 0.0
      %1457 = vmatprep.subr.mxu0 0.0
      %1458 = vmatpush1.msra.mxu0 0.0
      %1459 = vmatprep.subr.mxu0 0.0
      %1460 = vmatpush1.msra.mxu0 0.0
      %1461 = vmatprep.subr.mxu0 0.0
      %1462 = vmatpush1.msra.mxu0 0.0
      %1463 = vmatprep.subr.mxu0 0.0
      %1464 = vmatpush1.msra.mxu0 0.0
      %1465 = vmatprep.subr.mxu0 0.0
      %1466 = vmatpush1.msra.mxu0 0.0
      %1467 = vmatprep.subr.mxu0 0.0
      %1468 = vmatpush1.msra.mxu0 0.0
      %1469 = vmatprep.subr.mxu0 0.0
      %1470 = vmatpush1.msra.mxu0 0.0
      %1471 = vmatprep.subr.mxu0 0.0
      %1472 = vmatpush1.msra.mxu0 0.0
      %1473 = vmatprep.subr.mxu0 0.0
      %1474 = vmatpush1.msra.mxu0 0.0
      %1475 = vmatprep.subr.mxu0 0.0
      %1476 = vmatpush1.msra.mxu0 0.0
      %1477 = vmatprep.subr.mxu0 0.0
      %1478 = vmatpush1.msra.mxu0 0.0
      %1479 = vmatprep.subr.mxu0 0.0
      %1480 = vmatpush1.msra.mxu0 0.0
      %1481 = vmatprep.subr.mxu0 0.0
      %1482 = vmatpush1.msra.mxu0 0.0
      %1483 = vmatprep.subr.mxu0 0.0
      %1484 = vmatpush1.msra.mxu0 0.0
      %1485 = vmatprep.subr.mxu0 0.0
      %1486 = vmatpush1.msra.mxu0 0.0
      %1487 = vmatprep.subr.mxu0 0.0
      %1488 = vmatpush1.msra.mxu0 0.0
      %1489 = vmatprep.subr.mxu0 0.0
      %1490 = vmatpush1.msra.mxu0 0.0
      %1491 = vmatprep.subr.mxu0 0.0
      %1492 = vmatpush1.msra.mxu0 0.0
      %1493 = vmatprep.subr.mxu0 0.0
      %1494 = vmatpush1.msra.mxu0 0.0
      %1495 = vmatprep.subr.mxu0 0.0
      %1496 = vmatpush1.msra.mxu0 0.0
      %1497 = vmatprep.subr.mxu0 0.0
      %1498 = vmatpush1.msra.mxu0 0.0
      %1499 = vmatprep.subr.mxu0 0.0
      %1500 = vmatpush1.msra.mxu0 0.0
      %1501 = vmatprep.subr.mxu0 0.0
      %1502 = vmatpush1.msra.mxu0 0.0
      %1503 = vmatprep.subr.mxu0 0.0
      %1504 = vmatpush1.msra.mxu0 0.0
      %1505 = vmatprep.subr.mxu0 0.0
      %1506 = vmatpush1.msra.mxu0 0.0
      %1507 = vmatprep.subr.mxu0 0.0
      %1508 = vmatpush1.msra.mxu0 0.0
      %1509 = vmatprep.subr.mxu0 0.0
      %1510 = vmatpush1.msra.mxu0 0.0
      %1511 = vmatprep.subr.mxu0 0.0
      %1512 = vmatpush1.msra.mxu0 0.0
      %1513 = vmatprep.subr.mxu0 0.0
      %1514 = vmatpush1.msra.mxu0 0.0
      %1515 = vmatprep.subr.mxu0 0.0
      %1516 = vmatpush1.msra.mxu0 0.0
      %1517 = vmatprep.mubr.f32.mxu0 0.0
      %1518 = vmatmul.mubr.f32.gmra.mrb[0].mxu0 %v1451
      %v1519 = vpop.f32.mrb[0].mxu0
      %v1520 = vadd.f32 0.0, %v1519
      %v1521 = vpop.f32.mrb[0].mxu0
      %v1522 = vadd.f32 0.0, %v1521
      %1523 = vdwg.mxu0
      %v1524 = vlaneseq
      %v1525 = vshrl.u32 %v1524, 7
      %v1526 = vsub.s32 0, %v1525
      %v1527 = vrot.slane %v1303, %v1526
      %v1528 = vlaneseq
      %v1529 = vshrl.u32 %v1528, 7
      %v1530 = vsub.s32 4, %v1529
      %v1531 = vrot.slane %v1303, %v1530
      %v1534 = vlaneseq
      %v1535 = vshrl.u32 %v1534, 7
      %v1536 = vsub.s32 0, %v1535
      %v1537 = vrot.slane %v1527, %v1536
      %v1538 = vlaneseq
      %v1539 = vshrl.u32 %v1538, 7
      %v1540 = vsub.s32 0, %v1539
      %v1541 = vrot.slane %v1531, %v1540
      %v1542 = vmul.f32 %v1520, %v1537
      %v1543 = vmul.f32 %v1522, %v1541
      %1546 = vrot.lane.b32.xlu0 %v1542, 64
      %v1547 = vpop.permute.xlu0 %1546
      %1548 = vrot.lane.b32.xlu0 %v1543, 64
      %v1549 = vpop.permute.xlu0 %1548
      %v1550 = vsel %vm1329, %v1547, %v1549
      %v1553 = vadd.f32 %v1448, %v1547
      %v1554 = vadd.f32 %v1449, %v1550
      %v1555 = vld [vmem:[%s8] sm:$0x3]
      %v1557 = vlaneseq
      %v1558 = vshrl.u32 %v1557, 7
      %v1559 = vsub.s32 0, %v1558
      %v1560 = vrot.slane %v1555, %v1559
      %v1561 = vlaneseq
      %v1562 = vshrl.u32 %v1561, 7
      %v1563 = vsub.s32 1, %v1562
      %v1564 = vrot.slane %v1555, %v1563
      %1565 = vrot.lane.b32.xlu0 %v1560, 64
      %v1566 = vpop.permute.xlu0 %1565
      %1567 = vrot.lane.b32.xlu0 %v1564, 64
      %v1568 = vpop.permute.xlu0 %1567
      %v1569 = vsel %vm1329, %v1566, %v1568
      %v1572 = vadd.f32 %v1553, %v1566
      %v1573 = vadd.f32 %v1554, %v1569
      %v1574 = vsub.f32 0.0, %v1572
      %v1575 = vsub.f32 0.0, %v1573
      %v1576 = vmul.f32 %v1574, 1.442695
      %v1577 = vpow.pop %v1576
      %v1578 = vmul.f32 %v1575, 1.442695
      %v1579 = vpow.pop %v1578
      %v1580 = vadd.f32 %v1577, 1.0
      %v1581 = vadd.f32 %v1579, 1.0
      %v1582 = vrcp.pop %v1580
      %v1583 = vmul.f32 1.0, %v1582
      %v1584 = vrcp.pop %v1581
      %v1585 = vmul.f32 1.0, %v1584
      %v1586 = vmul.f32 %v1572, %v1583
      %v1587 = vmul.f32 %v1573, %v1585
      %vm1588 = vcmp.le.s32.totalorder %v819, %v1294
      %v1589 = vsel %vm1588, 1, 0
      %v1590 = vcvt.s32.f32 %v1589
      %vm1591 = vcmp.le.s32.totalorder %v1294, %v819
      %v1592 = vsel %vm1591, 1, 0
      %v1593 = vcvt.s32.f32 %v1592
      %1595 = vrot.lane.b32.xlu0 %v1587, 64
      %v1596 = vpop.permute.xlu0 %1595
      %v1597 = vsel %vm1329, %v1596, 0
      %v1599 = vsel %vm1329, %v1587, 0
      %1601 = vmatprep.subr.mxu0 0.0
      %1602 = vmatpush1.xpose.msra.mxu0 %v1599
      %1603 = vmatprep.subr.mxu0 0.0
      %1604 = vmatpush1.xpose.msra.mxu0 0.0
      %1605 = vmatprep.subr.mxu0 0.0
      %1606 = vmatpush1.xpose.msra.mxu0 0.0
      %1607 = vmatprep.subr.mxu0 0.0
      %1608 = vmatpush1.xpose.msra.mxu0 0.0
      %1609 = vmatprep.subr.mxu0 0.0
      %1610 = vmatpush1.xpose.msra.mxu0 0.0
      %1611 = vmatprep.subr.mxu0 0.0
      %1612 = vmatpush1.xpose.msra.mxu0 0.0
      %1613 = vmatprep.subr.mxu0 0.0
      %1614 = vmatpush1.xpose.msra.mxu0 0.0
      %1615 = vmatprep.subr.mxu0 0.0
      %1616 = vmatpush1.xpose.msra.mxu0 0.0
      %1617 = vmatprep.subr.mxu0 0.0
      %1618 = vmatpush1.xpose.msra.mxu0 0.0
      %1619 = vmatprep.subr.mxu0 0.0
      %1620 = vmatpush1.xpose.msra.mxu0 0.0
      %1621 = vmatprep.subr.mxu0 0.0
      %1622 = vmatpush1.xpose.msra.mxu0 0.0
      %1623 = vmatprep.subr.mxu0 0.0
      %1624 = vmatpush1.xpose.msra.mxu0 0.0
      %1625 = vmatprep.subr.mxu0 0.0
      %1626 = vmatpush1.xpose.msra.mxu0 0.0
      %1627 = vmatprep.subr.mxu0 0.0
      %1628 = vmatpush1.xpose.msra.mxu0 0.0
      %1629 = vmatprep.subr.mxu0 0.0
      %1630 = vmatpush1.xpose.msra.mxu0 0.0
      %1631 = vmatprep.subr.mxu0 0.0
      %1632 = vmatpush1.xpose.msra.mxu0 0.0
      %1633 = vmatprep.subr.mxu0 0.0
      %1634 = vmatpush1.xpose.msra.mxu0 0.0
      %1635 = vmatprep.subr.mxu0 0.0
      %1636 = vmatpush1.xpose.msra.mxu0 0.0
      %1637 = vmatprep.subr.mxu0 0.0
      %1638 = vmatpush1.xpose.msra.mxu0 0.0
      %1639 = vmatprep.subr.mxu0 0.0
      %1640 = vmatpush1.xpose.msra.mxu0 0.0
      %1641 = vmatprep.subr.mxu0 0.0
      %1642 = vmatpush1.xpose.msra.mxu0 0.0
      %1643 = vmatprep.subr.mxu0 0.0
      %1644 = vmatpush1.xpose.msra.mxu0 0.0
      %1645 = vmatprep.subr.mxu0 0.0
      %1646 = vmatpush1.xpose.msra.mxu0 0.0
      %1647 = vmatprep.subr.mxu0 0.0
      %1648 = vmatpush1.xpose.msra.mxu0 0.0
      %1649 = vmatprep.subr.mxu0 0.0
      %1650 = vmatpush1.xpose.msra.mxu0 0.0
      %1651 = vmatprep.subr.mxu0 0.0
      %1652 = vmatpush1.xpose.msra.mxu0 0.0
      %1653 = vmatprep.subr.mxu0 0.0
      %1654 = vmatpush1.xpose.msra.mxu0 0.0
      %1655 = vmatprep.subr.mxu0 0.0
      %1656 = vmatpush1.xpose.msra.mxu0 0.0
      %1657 = vmatprep.subr.mxu0 0.0
      %1658 = vmatpush1.xpose.msra.mxu0 0.0
      %1659 = vmatprep.subr.mxu0 0.0
      %1660 = vmatpush1.xpose.msra.mxu0 0.0
      %1661 = vmatprep.subr.mxu0 0.0
      %1662 = vmatpush1.xpose.msra.mxu0 0.0
      %1663 = vmatprep.subr.mxu0 0.0
      %1664 = vmatpush1.xpose.msra.mxu0 0.0
      %1665 = vmatprep.mubr.f32.mxu0 0.0
      %1666 = vmatmul.mubr.f32.gmra.mrb[0].mxu0 %v1597
      %v1667 = vpop.f32.mrb[0].mxu0
      %v1668 = vadd.f32 0.0, %v1667
      %v1669 = vpop.f32.mrb[0].mxu0
      %1670 = vdwg.mxu0
      %v1671 = vld [vmem:[%s9] sm:$0x1]
      %v1672 = vld [vmem:[%s10] sm:$0x1]
      %v1673 = vld [vmem:[%s11] sm:$0x1]
      %v1674 = vld [vmem:[%s12] sm:$0xff]
      %v1675 = vld [vmem:[%s12 + $0x8] sm:$0xff]
      %v1676 = vld [vmem:[%s12 + $0x10] sm:$0xff]
      %v1677 = vld [vmem:[%s12 + $0x18] sm:$0xff]
      %v1678 = vld [vmem:[%s12 + $0x20] sm:$0xff]
      %v1679 = vld [vmem:[%s12 + $0x28] sm:$0xff]
      %v1680 = vld [vmem:[%s12 + $0x30] sm:$0xff]
      %v1681 = vld [vmem:[%s12 + $0x38] sm:$0xff]
      %v1683 = vlaneseq
      %v1684 = vshrl.u32 %v1683, 7
      %v1685 = vsub.s32 0, %v1684
      %v1686 = vrot.slane %v1671, %v1685
      %v1688 = vmul.f32 %v1292, %v1686
      %1690 = vset.pattern.permute.xlu0 0
      %1691 = vperm.xlu0 %1690, %v1688
      %v1692 = vpop.permute.xlu0 %1691
      %v1695 = vsel %vm1344, %v1590, 0
      %1697 = vmatprep.subr.mxu0 0.0
      %1698 = vmatpush1.msra.mxu0 %v1692
      %1699 = vmatprep.subr.mxu0 0.0
      %1700 = vmatpush1.msra.mxu0 0.0
      %1701 = vmatprep.subr.mxu0 0.0
      %1702 = vmatpush1.msra.mxu0 0.0
      %1703 = vmatprep.subr.mxu0 0.0
      %1704 = vmatpush1.msra.mxu0 0.0
      %1705 = vmatprep.subr.mxu0 0.0
      %1706 = vmatpush1.msra.mxu0 0.0
      %1707 = vmatprep.subr.mxu0 0.0
      %1708 = vmatpush1.msra.mxu0 0.0
      %1709 = vmatprep.subr.mxu0 0.0
      %1710 = vmatpush1.msra.mxu0 0.0
      %1711 = vmatprep.subr.mxu0 0.0
      %1712 = vmatpush1.msra.mxu0 0.0
      %1713 = vmatprep.subr.mxu0 0.0
      %1714 = vmatpush1.msra.mxu0 0.0
      %1715 = vmatprep.subr.mxu0 0.0
      %1716 = vmatpush1.msra.mxu0 0.0
      %1717 = vmatprep.subr.mxu0 0.0
      %1718 = vmatpush1.msra.mxu0 0.0
      %1719 = vmatprep.subr.mxu0 0.0
      %1720 = vmatpush1.msra.mxu0 0.0
      %1721 = vmatprep.subr.mxu0 0.0
      %1722 = vmatpush1.msra.mxu0 0.0
      %1723 = vmatprep.subr.mxu0 0.0
      %1724 = vmatpush1.msra.mxu0 0.0
      %1725 = vmatprep.subr.mxu0 0.0
      %1726 = vmatpush1.msra.mxu0 0.0
      %1727 = vmatprep.subr.mxu0 0.0
      %1728 = vmatpush1.msra.mxu0 0.0
      %1729 = vmatprep.subr.mxu0 0.0
      %1730 = vmatpush1.msra.mxu0 0.0
      %1731 = vmatprep.subr.mxu0 0.0
      %1732 = vmatpush1.msra.mxu0 0.0
      %1733 = vmatprep.subr.mxu0 0.0
      %1734 = vmatpush1.msra.mxu0 0.0
      %1735 = vmatprep.subr.mxu0 0.0
      %1736 = vmatpush1.msra.mxu0 0.0
      %1737 = vmatprep.subr.mxu0 0.0
      %1738 = vmatpush1.msra.mxu0 0.0
      %1739 = vmatprep.subr.mxu0 0.0
      %1740 = vmatpush1.msra.mxu0 0.0
      %1741 = vmatprep.subr.mxu0 0.0
      %1742 = vmatpush1.msra.mxu0 0.0
      %1743 = vmatprep.subr.mxu0 0.0
      %1744 = vmatpush1.msra.mxu0 0.0
      %1745 = vmatprep.subr.mxu0 0.0
      %1746 = vmatpush1.msra.mxu0 0.0
      %1747 = vmatprep.subr.mxu0 0.0
      %1748 = vmatpush1.msra.mxu0 0.0
      %1749 = vmatprep.subr.mxu0 0.0
      %1750 = vmatpush1.msra.mxu0 0.0
      %1751 = vmatprep.subr.mxu0 0.0
      %1752 = vmatpush1.msra.mxu0 0.0
      %1753 = vmatprep.subr.mxu0 0.0
      %1754 = vmatpush1.msra.mxu0 0.0
      %1755 = vmatprep.subr.mxu0 0.0
      %1756 = vmatpush1.msra.mxu0 0.0
      %1757 = vmatprep.subr.mxu0 0.0
      %1758 = vmatpush1.msra.mxu0 0.0
      %1759 = vmatprep.subr.mxu0 0.0
      %1760 = vmatpush1.msra.mxu0 0.0
      %1761 = vmatprep.mubr.f32.mxu0 0.0
      %1762 = vmatmul.mubr.f32.gmra.mrb[0].mxu0 %v1695
      %v1763 = vpop.f32.mrb[0].mxu0
      %v1764 = vadd.f32 0.0, %v1763
      %v1765 = vpop.f32.mrb[0].mxu0
      %1766 = vdwg.mxu0
      %1767 = vxpose.xlu0.b32.start [1/16] %v1692, 128
      %1768 = vxpose.xlu0.b32.cont [2/16] 0.0, 128
      %1769 = vxpose.xlu0.b32.cont [3/16] 0.0, 128
      %1770 = vxpose.xlu0.b32.cont [4/16] 0.0, 128
      %1771 = vxpose.xlu0.b32.cont [5/16] 0.0, 128
      %1772 = vxpose.xlu0.b32.cont [6/16] 0.0, 128
      %1773 = vxpose.xlu0.b32.cont [7/16] 0.0, 128
      %1774 = vxpose.xlu0.b32.cont [8/16] 0.0, 128
      %1775 = vxpose.xlu0.b32.cont [9/16] 0.0, 128
      %1776 = vxpose.xlu0.b32.cont [10/16] 0.0, 128
      %1777 = vxpose.xlu0.b32.cont [11/16] 0.0, 128
      %1778 = vxpose.xlu0.b32.cont [12/16] 0.0, 128
      %1779 = vxpose.xlu0.b32.cont [13/16] 0.0, 128
      %1780 = vxpose.xlu0.b32.cont [14/16] 0.0, 128
      %1781 = vxpose.xlu0.b32.cont [15/16] 0.0, 128
      %1782 = vxpose.xlu0.b32.end [16/16] 0.0, 128
      %v1783 = vpop.trf.xlu0
      %v1784 = vpop.trf.xlu0
      %v1785 = vpop.trf.xlu0
      %v1786 = vpop.trf.xlu0
      %v1787 = vpop.trf.xlu0
      %v1788 = vpop.trf.xlu0
      %v1789 = vpop.trf.xlu0
      %v1790 = vpop.trf.xlu0
      %v1791 = vpop.trf.xlu0
      %v1792 = vpop.trf.xlu0
      %v1793 = vpop.trf.xlu0
      %v1794 = vpop.trf.xlu0
      %v1795 = vpop.trf.xlu0
      %v1796 = vpop.trf.xlu0
      %v1797 = vpop.trf.xlu0
      %v1798 = vpop.trf.xlu0
      %v1800 = vsel %vm1344, %v1783, 0
      %1802 = vmatprep.subr.mxu0 0.0
      %1803 = vmatpush1.msra.mxu0 %v1593
      %1804 = vmatprep.subr.mxu0 0.0
      %1805 = vmatpush1.msra.mxu0 0.0
      %1806 = vmatprep.subr.mxu0 0.0
      %1807 = vmatpush1.msra.mxu0 0.0
      %1808 = vmatprep.subr.mxu0 0.0
      %1809 = vmatpush1.msra.mxu0 0.0
      %1810 = vmatprep.subr.mxu0 0.0
      %1811 = vmatpush1.msra.mxu0 0.0
      %1812 = vmatprep.subr.mxu0 0.0
      %1813 = vmatpush1.msra.mxu0 0.0
      %1814 = vmatprep.subr.mxu0 0.0
      %1815 = vmatpush1.msra.mxu0 0.0
      %1816 = vmatprep.subr.mxu0 0.0
      %1817 = vmatpush1.msra.mxu0 0.0
      %1818 = vmatprep.subr.mxu0 0.0
      %1819 = vmatpush1.msra.mxu0 0.0
      %1820 = vmatprep.subr.mxu0 0.0
      %1821 = vmatpush1.msra.mxu0 0.0
      %1822 = vmatprep.subr.mxu0 0.0
      %1823 = vmatpush1.msra.mxu0 0.0
      %1824 = vmatprep.subr.mxu0 0.0
      %1825 = vmatpush1.msra.mxu0 0.0
      %1826 = vmatprep.subr.mxu0 0.0
      %1827 = vmatpush1.msra.mxu0 0.0
      %1828 = vmatprep.subr.mxu0 0.0
      %1829 = vmatpush1.msra.mxu0 0.0
      %1830 = vmatprep.subr.mxu0 0.0
      %1831 = vmatpush1.msra.mxu0 0.0
      %1832 = vmatprep.subr.mxu0 0.0
      %1833 = vmatpush1.msra.mxu0 0.0
      %1834 = vmatprep.subr.mxu0 0.0
      %1835 = vmatpush1.msra.mxu0 0.0
      %1836 = vmatprep.subr.mxu0 0.0
      %1837 = vmatpush1.msra.mxu0 0.0
      %1838 = vmatprep.subr.mxu0 0.0
      %1839 = vmatpush1.msra.mxu0 0.0
      %1840 = vmatprep.subr.mxu0 0.0
      %1841 = vmatpush1.msra.mxu0 0.0
      %1842 = vmatprep.subr.mxu0 0.0
      %1843 = vmatpush1.msra.mxu0 0.0
      %1844 = vmatprep.subr.mxu0 0.0
      %1845 = vmatpush1.msra.mxu0 0.0
      %1846 = vmatprep.subr.mxu0 0.0
      %1847 = vmatpush1.msra.mxu0 0.0
      %1848 = vmatprep.subr.mxu0 0.0
      %1849 = vmatpush1.msra.mxu0 0.0
      %1850 = vmatprep.subr.mxu0 0.0
      %1851 = vmatpush1.msra.mxu0 0.0
      %1852 = vmatprep.subr.mxu0 0.0
      %1853 = vmatpush1.msra.mxu0 0.0
      %1854 = vmatprep.subr.mxu0 0.0
      %1855 = vmatpush1.msra.mxu0 0.0
      %1856 = vmatprep.subr.mxu0 0.0
      %1857 = vmatpush1.msra.mxu0 0.0
      %1858 = vmatprep.subr.mxu0 0.0
      %1859 = vmatpush1.msra.mxu0 0.0
      %1860 = vmatprep.subr.mxu0 0.0
      %1861 = vmatpush1.msra.mxu0 0.0
      %1862 = vmatprep.subr.mxu0 0.0
      %1863 = vmatpush1.msra.mxu0 0.0
      %1864 = vmatprep.subr.mxu0 0.0
      %1865 = vmatpush1.msra.mxu0 0.0
      %1866 = vmatprep.mubr.f32.mxu0 0.0
      %1867 = vmatmul.mubr.f32.gmra.mrb[0].mxu0 %v1800
      %v1868 = vpop.f32.mrb[0].mxu0
      %v1869 = vadd.f32 0.0, %v1868
      %v1870 = vpop.f32.mrb[0].mxu0
      %1871 = vdwg.mxu0
      %v1872 = vsub.f32 %v1764, %v1869
      %v1873 = vsel %vm1588, %v1872, -1e+30
      %v1874 = vmul.f32 %v1873, 1.442695
      %v1875 = vpow.pop %v1874
      %v1876 = vmul.f32 %v1668, %v1875
      %1878 = vset.pattern.permute.xlu0 0
      %1879 = vperm.xlu0 %1878, %v1292
      %v1880 = vpop.permute.xlu0 %1879
      %v1882 = vmul.f32 %v1586, %v1880
      %v1884 = vlaneseq
      %v1885 = vshrl.u32 %v1884, 7
      %v1886 = vsub.s32 0, %v1885
      %v1887 = vrot.slane %v1672, %v1886
      %1888 = vset.pattern.permute.xlu0 0
      %1889 = vperm.xlu0 %1888, %v1887
      %v1890 = vpop.permute.xlu0 %1889
      %v1892 = vmul.f32 %v1890, %v1586
      %1894 = vrot.lane.b32.xlu0 %v1882, 64
      %v1895 = vpop.permute.xlu0 %1894
      %1898 = vrot.lane.b32.xlu0 %v1892, 64
      %v1899 = vpop.permute.xlu0 %1898
      %v1902 = vsel %vm1344, %v1876, 0
      %1904 = vmatprep.subr.mxu0 0.0
      %1905 = vmatpush1.msra.mxu0 %v1895
      %1906 = vmatprep.subr.mxu0 0.0
      %1907 = vmatpush1.msra.mxu0 0.0
      %1908 = vmatprep.subr.mxu0 0.0
      %1909 = vmatpush1.msra.mxu0 0.0
      %1910 = vmatprep.subr.mxu0 0.0
      %1911 = vmatpush1.msra.mxu0 0.0
      %1912 = vmatprep.subr.mxu0 0.0
      %1913 = vmatpush1.msra.mxu0 0.0
      %1914 = vmatprep.subr.mxu0 0.0
      %1915 = vmatpush1.msra.mxu0 0.0
      %1916 = vmatprep.subr.mxu0 0.0
      %1917 = vmatpush1.msra.mxu0 0.0
      %1918 = vmatprep.subr.mxu0 0.0
      %1919 = vmatpush1.msra.mxu0 0.0
      %1920 = vmatprep.subr.mxu0 0.0
      %1921 = vmatpush1.msra.mxu0 0.0
      %1922 = vmatprep.subr.mxu0 0.0
      %1923 = vmatpush1.msra.mxu0 0.0
      %1924 = vmatprep.subr.mxu0 0.0
      %1925 = vmatpush1.msra.mxu0 0.0
      %1926 = vmatprep.subr.mxu0 0.0
      %1927 = vmatpush1.msra.mxu0 0.0
      %1928 = vmatprep.subr.mxu0 0.0
      %1929 = vmatpush1.msra.mxu0 0.0
      %1930 = vmatprep.subr.mxu0 0.0
      %1931 = vmatpush1.msra.mxu0 0.0
      %1932 = vmatprep.subr.mxu0 0.0
      %1933 = vmatpush1.msra.mxu0 0.0
      %1934 = vmatprep.subr.mxu0 0.0
      %1935 = vmatpush1.msra.mxu0 0.0
      %1936 = vmatprep.subr.mxu0 0.0
      %1937 = vmatpush1.msra.mxu0 0.0
      %1938 = vmatprep.subr.mxu0 0.0
      %1939 = vmatpush1.msra.mxu0 0.0
      %1940 = vmatprep.subr.mxu0 0.0
      %1941 = vmatpush1.msra.mxu0 0.0
      %1942 = vmatprep.subr.mxu0 0.0
      %1943 = vmatpush1.msra.mxu0 0.0
      %1944 = vmatprep.subr.mxu0 0.0
      %1945 = vmatpush1.msra.mxu0 0.0
      %1946 = vmatprep.subr.mxu0 0.0
      %1947 = vmatpush1.msra.mxu0 0.0
      %1948 = vmatprep.subr.mxu0 0.0
      %1949 = vmatpush1.msra.mxu0 0.0
      %1950 = vmatprep.subr.mxu0 0.0
      %1951 = vmatpush1.msra.mxu0 0.0
      %1952 = vmatprep.subr.mxu0 0.0
      %1953 = vmatpush1.msra.mxu0 0.0
      %1954 = vmatprep.subr.mxu0 0.0
      %1955 = vmatpush1.msra.mxu0 0.0
      %1956 = vmatprep.subr.mxu0 0.0
      %1957 = vmatpush1.msra.mxu0 0.0
      %1958 = vmatprep.subr.mxu0 0.0
      %1959 = vmatpush1.msra.mxu0 0.0
      %1960 = vmatprep.subr.mxu0 0.0
      %1961 = vmatpush1.msra.mxu0 0.0
      %1962 = vmatprep.subr.mxu0 0.0
      %1963 = vmatpush1.msra.mxu0 0.0
      %1964 = vmatprep.subr.mxu0 0.0
      %1965 = vmatpush1.msra.mxu0 0.0
      %1966 = vmatprep.subr.mxu0 0.0
      %1967 = vmatpush1.msra.mxu0 0.0
      %1968 = vmatprep.mubr.f32.mxu0 0.0
      %1969 = vmatmul.mubr.f32.gmra.mrb[0].mxu0 %v1902
      %v1970 = vpop.f32.mrb[0].mxu0
      %v1971 = vadd.f32 %v1899, %v1970
      %v1972 = vpop.f32.mrb[0].mxu0
      %1973 = vdwg.mxu0
      %v1974 = vsub.f32 0.0, %v1202
      %v1975 = vmul.f32 %v1974, 1.442695
      %v1976 = vpow.pop %v1975
      %v1977 = vadd.f32 %v1976, 1.0
      %v1978 = vrcp.pop %v1977
      %v1979 = vmul.f32 1.0, %v1978
      %v1980 = vmul.f32 %v1202, %v1979
      %v1981 = vmul.f32 %v1971, %v1980
      %v1982 = vmul.f32 %v1981, %v1981
      %v1983 = vsel %vm724, %v1982, 0.0
      %1984 = vadd.xlane.f32.xlu0 %v1983
      %v1985 = vpop.xlane.xlu0 %1984
      %v1986 = vadd.f32 %v1985, 0.0
      %1987 = vset.pattern.permute.xlu0 1
      %1988 = vperm.xlu0 %1987, %v1688
      %v1989 = vpop.permute.xlu0 %1988
      %1991 = vmatprep.subr.mxu0 0.0
      %1992 = vmatpush1.msra.mxu0 %v1989
      %1993 = vmatprep.subr.mxu0 0.0
      %1994 = vmatpush1.msra.mxu0 0.0
      %1995 = vmatprep.subr.mxu0 0.0
      %1996 = vmatpush1.msra.mxu0 0.0
      %1997 = vmatprep.subr.mxu0 0.0
      %1998 = vmatpush1.msra.mxu0 0.0
      %1999 = vmatprep.subr.mxu0 0.0
      %2000 = vmatpush1.msra.mxu0 0.0
      %2001 = vmatprep.subr.mxu0 0.0
      %2002 = vmatpush1.msra.mxu0 0.0
      %2003 = vmatprep.subr.mxu0 0.0
      %2004 = vmatpush1.msra.mxu0 0.0
      %2005 = vmatprep.subr.mxu0 0.0
      %2006 = vmatpush1.msra.mxu0 0.0
      %2007 = vmatprep.subr.mxu0 0.0
      %2008 = vmatpush1.msra.mxu0 0.0
      %2009 = vmatprep.subr.mxu0 0.0
      %2010 = vmatpush1.msra.mxu0 0.0
      %2011 = vmatprep.subr.mxu0 0.0
      %2012 = vmatpush1.msra.mxu0 0.0
      %2013 = vmatprep.subr.mxu0 0.0
      %2014 = vmatpush1.msra.mxu0 0.0
      %2015 = vmatprep.subr.mxu0 0.0
      %2016 = vmatpush1.msra.mxu0 0.0
      %2017 = vmatprep.subr.mxu0 0.0
      %2018 = vmatpush1.msra.mxu0 0.0
      %2019 = vmatprep.subr.mxu0 0.0
      %2020 = vmatpush1.msra.mxu0 0.0
      %2021 = vmatprep.subr.mxu0 0.0
      %2022 = vmatpush1.msra.mxu0 0.0
      %2023 = vmatprep.subr.mxu0 0.0
      %2024 = vmatpush1.msra.mxu0 0.0
      %2025 = vmatprep.subr.mxu0 0.0
      %2026 = vmatpush1.msra.mxu0 0.0
      %2027 = vmatprep.subr.mxu0 0.0
      %2028 = vmatpush1.msra.mxu0 0.0
      %2029 = vmatprep.subr.mxu0 0.0
      %2030 = vmatpush1.msra.mxu0 0.0
      %2031 = vmatprep.subr.mxu0 0.0
      %2032 = vmatpush1.msra.mxu0 0.0
      %2033 = vmatprep.subr.mxu0 0.0
      %2034 = vmatpush1.msra.mxu0 0.0
      %2035 = vmatprep.subr.mxu0 0.0
      %2036 = vmatpush1.msra.mxu0 0.0
      %2037 = vmatprep.subr.mxu0 0.0
      %2038 = vmatpush1.msra.mxu0 0.0
      %2039 = vmatprep.subr.mxu0 0.0
      %2040 = vmatpush1.msra.mxu0 0.0
      %2041 = vmatprep.subr.mxu0 0.0
      %2042 = vmatpush1.msra.mxu0 0.0
      %2043 = vmatprep.subr.mxu0 0.0
      %2044 = vmatpush1.msra.mxu0 0.0
      %2045 = vmatprep.subr.mxu0 0.0
      %2046 = vmatpush1.msra.mxu0 0.0
      %2047 = vmatprep.subr.mxu0 0.0
      %2048 = vmatpush1.msra.mxu0 0.0
      %2049 = vmatprep.subr.mxu0 0.0
      %2050 = vmatpush1.msra.mxu0 0.0
      %2051 = vmatprep.subr.mxu0 0.0
      %2052 = vmatpush1.msra.mxu0 0.0
      %2053 = vmatprep.subr.mxu0 0.0
      %2054 = vmatpush1.msra.mxu0 0.0
      %2055 = vmatprep.mubr.f32.mxu0 0.0
      %2056 = vmatmul.mubr.f32.gmra.mrb[0].mxu0 %v1695
      %v2057 = vpop.f32.mrb[0].mxu0
      %v2058 = vadd.f32 0.0, %v2057
      %v2059 = vpop.f32.mrb[0].mxu0
      %2060 = vdwg.mxu0
      %2061 = vxpose.xlu0.b32.start [1/16] %v1989, 128
      %2062 = vxpose.xlu0.b32.cont [2/16] 0.0, 128
      %2063 = vxpose.xlu0.b32.cont [3/16] 0.0, 128
      %2064 = vxpose.xlu0.b32.cont [4/16] 0.0, 128
      %2065 = vxpose.xlu0.b32.cont [5/16] 0.0, 128
      %2066 = vxpose.xlu0.b32.cont [6/16] 0.0, 128
      %2067 = vxpose.xlu0.b32.cont [7/16] 0.0, 128
      %2068 = vxpose.xlu0.b32.cont [8/16] 0.0, 128
      %2069 = vxpose.xlu0.b32.cont [9/16] 0.0, 128
      %2070 = vxpose.xlu0.b32.cont [10/16] 0.0, 128
      %2071 = vxpose.xlu0.b32.cont [11/16] 0.0, 128
      %2072 = vxpose.xlu0.b32.cont [12/16] 0.0, 128
      %2073 = vxpose.xlu0.b32.cont [13/16] 0.0, 128
      %2074 = vxpose.xlu0.b32.cont [14/16] 0.0, 128
      %2075 = vxpose.xlu0.b32.cont [15/16] 0.0, 128
      %2076 = vxpose.xlu0.b32.end [16/16] 0.0, 128
      %v2077 = vpop.trf.xlu0
      %v2078 = vpop.trf.xlu0
      %v2079 = vpop.trf.xlu0
      %v2080 = vpop.trf.xlu0
      %v2081 = vpop.trf.xlu0
      %v2082 = vpop.trf.xlu0
      %v2083 = vpop.trf.xlu0
      %v2084 = vpop.trf.xlu0
      %v2085 = vpop.trf.xlu0
      %v2086 = vpop.trf.xlu0
      %v2087 = vpop.trf.xlu0
      %v2088 = vpop.trf.xlu0
      %v2089 = vpop.trf.xlu0
      %v2090 = vpop.trf.xlu0
      %v2091 = vpop.trf.xlu0
      %v2092 = vpop.trf.xlu0
      %v2094 = vsel %vm1344, %v2077, 0
      %2096 = vmatprep.subr.mxu0 0.0
      %2097 = vmatpush1.msra.mxu0 %v1593
      %2098 = vmatprep.subr.mxu0 0.0
      %2099 = vmatpush1.msra.mxu0 0.0
      %2100 = vmatprep.subr.mxu0 0.0
      %2101 = vmatpush1.msra.mxu0 0.0
      %2102 = vmatprep.subr.mxu0 0.0
      %2103 = vmatpush1.msra.mxu0 0.0
      %2104 = vmatprep.subr.mxu0 0.0
      %2105 = vmatpush1.msra.mxu0 0.0
      %2106 = vmatprep.subr.mxu0 0.0
      %2107 = vmatpush1.msra.mxu0 0.0
      %2108 = vmatprep.subr.mxu0 0.0
      %2109 = vmatpush1.msra.mxu0 0.0
      %2110 = vmatprep.subr.mxu0 0.0
      %2111 = vmatpush1.msra.mxu0 0.0
      %2112 = vmatprep.subr.mxu0 0.0
      %2113 = vmatpush1.msra.mxu0 0.0
      %2114 = vmatprep.subr.mxu0 0.0
      %2115 = vmatpush1.msra.mxu0 0.0
      %2116 = vmatprep.subr.mxu0 0.0
      %2117 = vmatpush1.msra.mxu0 0.0
      %2118 = vmatprep.subr.mxu0 0.0
      %2119 = vmatpush1.msra.mxu0 0.0
      %2120 = vmatprep.subr.mxu0 0.0
      %2121 = vmatpush1.msra.mxu0 0.0
      %2122 = vmatprep.subr.mxu0 0.0
      %2123 = vmatpush1.msra.mxu0 0.0
      %2124 = vmatprep.subr.mxu0 0.0
      %2125 = vmatpush1.msra.mxu0 0.0
      %2126 = vmatprep.subr.mxu0 0.0
      %2127 = vmatpush1.msra.mxu0 0.0
      %2128 = vmatprep.subr.mxu0 0.0
      %2129 = vmatpush1.msra.mxu0 0.0
      %2130 = vmatprep.subr.mxu0 0.0
      %2131 = vmatpush1.msra.mxu0 0.0
      %2132 = vmatprep.subr.mxu0 0.0
      %2133 = vmatpush1.msra.mxu0 0.0
      %2134 = vmatprep.subr.mxu0 0.0
      %2135 = vmatpush1.msra.mxu0 0.0
      %2136 = vmatprep.subr.mxu0 0.0
      %2137 = vmatpush1.msra.mxu0 0.0
      %2138 = vmatprep.subr.mxu0 0.0
      %2139 = vmatpush1.msra.mxu0 0.0
      %2140 = vmatprep.subr.mxu0 0.0
      %2141 = vmatpush1.msra.mxu0 0.0
      %2142 = vmatprep.subr.mxu0 0.0
      %2143 = vmatpush1.msra.mxu0 0.0
      %2144 = vmatprep.subr.mxu0 0.0
      %2145 = vmatpush1.msra.mxu0 0.0
      %2146 = vmatprep.subr.mxu0 0.0
      %2147 = vmatpush1.msra.mxu0 0.0
      %2148 = vmatprep.subr.mxu0 0.0
      %2149 = vmatpush1.msra.mxu0 0.0
      %2150 = vmatprep.subr.mxu0 0.0
      %2151 = vmatpush1.msra.mxu0 0.0
      %2152 = vmatprep.subr.mxu0 0.0
      %2153 = vmatpush1.msra.mxu0 0.0
      %2154 = vmatprep.subr.mxu0 0.0
      %2155 = vmatpush1.msra.mxu0 0.0
      %2156 = vmatprep.subr.mxu0 0.0
      %2157 = vmatpush1.msra.mxu0 0.0
      %2158 = vmatprep.subr.mxu0 0.0
      %2159 = vmatpush1.msra.mxu0 0.0
      %2160 = vmatprep.mubr.f32.mxu0 0.0
      %2161 = vmatmul.mubr.f32.gmra.mrb[0].mxu0 %v2094
      %v2162 = vpop.f32.mrb[0].mxu0
      %v2163 = vadd.f32 0.0, %v2162
      %v2164 = vpop.f32.mrb[0].mxu0
      %2165 = vdwg.mxu0
      %v2166 = vsub.f32 %v2058, %v2163
      %v2167 = vsel %vm1588, %v2166, -1e+30
      %v2168 = vmul.f32 %v2167, 1.442695
      %v2169 = vpow.pop %v2168
      %v2170 = vmul.f32 %v1668, %v2169
      %2171 = vset.pattern.permute.xlu0 1
      %2172 = vperm.xlu0 %2171, %v1292
      %v2173 = vpop.permute.xlu0 %2172
      %v2175 = vmul.f32 %v1586, %v2173
      %2176 = vset.pattern.permute.xlu0 1
      %2177 = vperm.xlu0 %2176, %v1887
      %v2178 = vpop.permute.xlu0 %2177
      %v2180 = vmul.f32 %v2178, %v1586
      %2182 = vrot.lane.b32.xlu0 %v2175, 32
      %v2183 = vpop.permute.xlu0 %2182
      %2186 = vrot.lane.b32.xlu0 %v2180, 32
      %v2187 = vpop.permute.xlu0 %2186
      %v2190 = vsel %vm1344, %v2170, 0
      %2192 = vmatprep.subr.mxu0 0.0
      %2193 = vmatpush1.msra.mxu0 %v2183
      %2194 = vmatprep.subr.mxu0 0.0
      %2195 = vmatpush1.msra.mxu0 0.0
      %2196 = vmatprep.subr.mxu0 0.0
      %2197 = vmatpush1.msra.mxu0 0.0
      %2198 = vmatprep.subr.mxu0 0.0
      %2199 = vmatpush1.msra.mxu0 0.0
      %2200 = vmatprep.subr.mxu0 0.0
      %2201 = vmatpush1.msra.mxu0 0.0
      %2202 = vmatprep.subr.mxu0 0.0
      %2203 = vmatpush1.msra.mxu0 0.0
      %2204 = vmatprep.subr.mxu0 0.0
      %2205 = vmatpush1.msra.mxu0 0.0
      %2206 = vmatprep.subr.mxu0 0.0
      %2207 = vmatpush1.msra.mxu0 0.0
      %2208 = vmatprep.subr.mxu0 0.0
      %2209 = vmatpush1.msra.mxu0 0.0
      %2210 = vmatprep.subr.mxu0 0.0
      %2211 = vmatpush1.msra.mxu0 0.0
      %2212 = vmatprep.subr.mxu0 0.0
      %2213 = vmatpush1.msra.mxu0 0.0
      %2214 = vmatprep.subr.mxu0 0.0
      %2215 = vmatpush1.msra.mxu0 0.0
      %2216 = vmatprep.subr.mxu0 0.0
      %2217 = vmatpush1.msra.mxu0 0.0
      %2218 = vmatprep.subr.mxu0 0.0
      %2219 = vmatpush1.msra.mxu0 0.0
      %2220 = vmatprep.subr.mxu0 0.0
      %2221 = vmatpush1.msra.mxu0 0.0
      %2222 = vmatprep.subr.mxu0 0.0
      %2223 = vmatpush1.msra.mxu0 0.0
      %2224 = vmatprep.subr.mxu0 0.0
      %2225 = vmatpush1.msra.mxu0 0.0
      %2226 = vmatprep.subr.mxu0 0.0
      %2227 = vmatpush1.msra.mxu0 0.0
      %2228 = vmatprep.subr.mxu0 0.0
      %2229 = vmatpush1.msra.mxu0 0.0
      %2230 = vmatprep.subr.mxu0 0.0
      %2231 = vmatpush1.msra.mxu0 0.0
      %2232 = vmatprep.subr.mxu0 0.0
      %2233 = vmatpush1.msra.mxu0 0.0
      %2234 = vmatprep.subr.mxu0 0.0
      %2235 = vmatpush1.msra.mxu0 0.0
      %2236 = vmatprep.subr.mxu0 0.0
      %2237 = vmatpush1.msra.mxu0 0.0
      %2238 = vmatprep.subr.mxu0 0.0
      %2239 = vmatpush1.msra.mxu0 0.0
      %2240 = vmatprep.subr.mxu0 0.0
      %2241 = vmatpush1.msra.mxu0 0.0
      %2242 = vmatprep.subr.mxu0 0.0
      %2243 = vmatpush1.msra.mxu0 0.0
      %2244 = vmatprep.subr.mxu0 0.0
      %2245 = vmatpush1.msra.mxu0 0.0
      %2246 = vmatprep.subr.mxu0 0.0
      %2247 = vmatpush1.msra.mxu0 0.0
      %2248 = vmatprep.subr.mxu0 0.0
      %2249 = vmatpush1.msra.mxu0 0.0
      %2250 = vmatprep.subr.mxu0 0.0
      %2251 = vmatpush1.msra.mxu0 0.0
      %2252 = vmatprep.subr.mxu0 0.0
      %2253 = vmatpush1.msra.mxu0 0.0
      %2254 = vmatprep.subr.mxu0 0.0
      %2255 = vmatpush1.msra.mxu0 0.0
      %2256 = vmatprep.mubr.f32.mxu0 0.0
      %2257 = vmatmul.mubr.f32.gmra.mrb[0].mxu0 %v2190
      %v2258 = vpop.f32.mrb[0].mxu0
      %v2259 = vadd.f32 %v2187, %v2258
      %v2260 = vpop.f32.mrb[0].mxu0
      %2261 = vdwg.mxu0
      %2263 = vrot.lane.b32.xlu0 %v1980, 96
      %v2264 = vpop.permute.xlu0 %2263
      %v2266 = vmul.f32 %v2259, %v2264
      %v2267 = vmul.f32 %v2266, %v2266
      %v2268 = vsel %vm724, %v2267, 0.0
      %2269 = vadd.xlane.f32.xlu0 %v2268
      %v2270 = vpop.xlane.xlu0 %2269
      %v2271 = vadd.f32 %v1986, %v2270
      %v2272 = vmul.f32 %v2271, 0.015625
      %v2273 = vadd.f32 %v2272, 1e-05
      %v2274 = vrsqrt.pop %v2273
      %v2275 = vmul.f32 %v1981, %v2274
      %v2277 = vlaneseq
      %v2278 = vshrl.u32 %v2277, 7
      %v2279 = vsub.s32 0, %v2278
      %v2280 = vrot.slane %v1673, %v2279
      %v2282 = vmul.f32 %v2275, %v2280
      %v2283 = vmul.f32 %v2266, %v2274
      %2284 = vrot.lane.b32.xlu0 %v2280, 96
      %v2285 = vpop.permute.xlu0 %2284
      %v2287 = vmul.f32 %v2283, %v2285
      %v2289 = vsel %vm724, %v2287, 0
      %2291 = vmatprep.subr.mxu0 0.0
      %2292 = vmatpush1.msra.mxu0 %v1678
      %2293 = vmatprep.subr.mxu0 0.0
      %2294 = vmatpush1.msra.mxu0 %v1679
      %2295 = vmatprep.subr.mxu0 0.0
      %2296 = vmatpush1.msra.mxu0 %v1680
      %2297 = vmatprep.subr.mxu0 0.0
      %2298 = vmatpush1.msra.mxu0 %v1681
      %2299 = vmatprep.subr.mxu0 0.0
      %2300 = vmatpush1.msra.mxu0 0.0
      %2301 = vmatprep.subr.mxu0 0.0
      %2302 = vmatpush1.msra.mxu0 0.0
      %2303 = vmatprep.subr.mxu0 0.0
      %2304 = vmatpush1.msra.mxu0 0.0
      %2305 = vmatprep.subr.mxu0 0.0
      %2306 = vmatpush1.msra.mxu0 0.0
      %2307 = vmatprep.subr.mxu0 0.0
      %2308 = vmatpush1.msra.mxu0 0.0
      %2309 = vmatprep.subr.mxu0 0.0
      %2310 = vmatpush1.msra.mxu0 0.0
      %2311 = vmatprep.subr.mxu0 0.0
      %2312 = vmatpush1.msra.mxu0 0.0
      %2313 = vmatprep.subr.mxu0 0.0
      %2314 = vmatpush1.msra.mxu0 0.0
      %2315 = vmatprep.subr.mxu0 0.0
      %2316 = vmatpush1.msra.mxu0 0.0
      %2317 = vmatprep.subr.mxu0 0.0
      %2318 = vmatpush1.msra.mxu0 0.0
      %2319 = vmatprep.subr.mxu0 0.0
      %2320 = vmatpush1.msra.mxu0 0.0
      %2321 = vmatprep.subr.mxu0 0.0
      %2322 = vmatpush1.msra.mxu0 0.0
      %2323 = vmatprep.subr.mxu0 0.0
      %2324 = vmatpush1.msra.mxu0 0.0
      %2325 = vmatprep.subr.mxu0 0.0
      %2326 = vmatpush1.msra.mxu0 0.0
      %2327 = vmatprep.subr.mxu0 0.0
      %2328 = vmatpush1.msra.mxu0 0.0
      %2329 = vmatprep.subr.mxu0 0.0
      %2330 = vmatpush1.msra.mxu0 0.0
      %2331 = vmatprep.subr.mxu0 0.0
      %2332 = vmatpush1.msra.mxu0 0.0
      %2333 = vmatprep.subr.mxu0 0.0
      %2334 = vmatpush1.msra.mxu0 0.0
      %2335 = vmatprep.subr.mxu0 0.0
      %2336 = vmatpush1.msra.mxu0 0.0
      %2337 = vmatprep.subr.mxu0 0.0
      %2338 = vmatpush1.msra.mxu0 0.0
      %2339 = vmatprep.subr.mxu0 0.0
      %2340 = vmatpush1.msra.mxu0 0.0
      %2341 = vmatprep.subr.mxu0 0.0
      %2342 = vmatpush1.msra.mxu0 0.0
      %2343 = vmatprep.subr.mxu0 0.0
      %2344 = vmatpush1.msra.mxu0 0.0
      %2345 = vmatprep.subr.mxu0 0.0
      %2346 = vmatpush1.msra.mxu0 0.0
      %2347 = vmatprep.subr.mxu0 0.0
      %2348 = vmatpush1.msra.mxu0 0.0
      %2349 = vmatprep.subr.mxu0 0.0
      %2350 = vmatpush1.msra.mxu0 0.0
      %2351 = vmatprep.subr.mxu0 0.0
      %2352 = vmatpush1.msra.mxu0 0.0
      %2353 = vmatprep.subr.mxu0 0.0
      %2354 = vmatpush1.msra.mxu0 0.0
      %2355 = vmatprep.mubr.f32.mxu0 0.0
      %2356 = vmatmul.mubr.f32.gmra.mrb[0].mxu0 %v2289
      %v2357 = vpop.f32.mrb[0].mxu0
      %v2358 = vadd.f32 0.0, %v2357
      %v2359 = vpop.f32.mrb[0].mxu0
      %2360 = vdwg.mxu0
      %v2362 = vsel %vm724, %v2282, 0
      %2364 = vmatprep.subr.mxu0 0.0
      %2365 = vmatpush1.msra.mxu0 %v1674
      %2366 = vmatprep.subr.mxu0 0.0
      %2367 = vmatpush1.msra.mxu0 %v1675
      %2368 = vmatprep.subr.mxu0 0.0
      %2369 = vmatpush1.msra.mxu0 %v1676
      %2370 = vmatprep.subr.mxu0 0.0
      %2371 = vmatpush1.msra.mxu0 %v1677
      %2372 = vmatprep.subr.mxu0 0.0
      %2373 = vmatpush1.msra.mxu0 0.0
      %2374 = vmatprep.subr.mxu0 0.0
      %2375 = vmatpush1.msra.mxu0 0.0
      %2376 = vmatprep.subr.mxu0 0.0
      %2377 = vmatpush1.msra.mxu0 0.0
      %2378 = vmatprep.subr.mxu0 0.0
      %2379 = vmatpush1.msra.mxu0 0.0
      %2380 = vmatprep.subr.mxu0 0.0
      %2381 = vmatpush1.msra.mxu0 0.0
      %2382 = vmatprep.subr.mxu0 0.0
      %2383 = vmatpush1.msra.mxu0 0.0
      %2384 = vmatprep.subr.mxu0 0.0
      %2385 = vmatpush1.msra.mxu0 0.0
      %2386 = vmatprep.subr.mxu0 0.0
      %2387 = vmatpush1.msra.mxu0 0.0
      %2388 = vmatprep.subr.mxu0 0.0
      %2389 = vmatpush1.msra.mxu0 0.0
      %2390 = vmatprep.subr.mxu0 0.0
      %2391 = vmatpush1.msra.mxu0 0.0
      %2392 = vmatprep.subr.mxu0 0.0
      %2393 = vmatpush1.msra.mxu0 0.0
      %2394 = vmatprep.subr.mxu0 0.0
      %2395 = vmatpush1.msra.mxu0 0.0
      %2396 = vmatprep.subr.mxu0 0.0
      %2397 = vmatpush1.msra.mxu0 0.0
      %2398 = vmatprep.subr.mxu0 0.0
      %2399 = vmatpush1.msra.mxu0 0.0
      %2400 = vmatprep.subr.mxu0 0.0
      %2401 = vmatpush1.msra.mxu0 0.0
      %2402 = vmatprep.subr.mxu0 0.0
      %2403 = vmatpush1.msra.mxu0 0.0
      %2404 = vmatprep.subr.mxu0 0.0
      %2405 = vmatpush1.msra.mxu0 0.0
      %2406 = vmatprep.subr.mxu0 0.0
      %2407 = vmatpush1.msra.mxu0 0.0
      %2408 = vmatprep.subr.mxu0 0.0
      %2409 = vmatpush1.msra.mxu0 0.0
      %2410 = vmatprep.subr.mxu0 0.0
      %2411 = vmatpush1.msra.mxu0 0.0
      %2412 = vmatprep.subr.mxu0 0.0
      %2413 = vmatpush1.msra.mxu0 0.0
      %2414 = vmatprep.subr.mxu0 0.0
      %2415 = vmatpush1.msra.mxu0 0.0
      %2416 = vmatprep.subr.mxu0 0.0
      %2417 = vmatpush1.msra.mxu0 0.0
      %2418 = vmatprep.subr.mxu0 0.0
      %2419 = vmatpush1.msra.mxu0 0.0
      %2420 = vmatprep.subr.mxu0 0.0
      %2421 = vmatpush1.msra.mxu0 0.0
      %2422 = vmatprep.subr.mxu0 0.0
      %2423 = vmatpush1.msra.mxu0 0.0
      %2424 = vmatprep.subr.mxu0 0.0
      %2425 = vmatpush1.msra.mxu0 0.0
      %2426 = vmatprep.subr.mxu0 0.0
      %2427 = vmatpush1.msra.mxu0 0.0
      %2428 = vmatprep.mubr.f32.mxu0 0.0
      %2429 = vmatmul.mubr.f32.gmra.mrb[0].mxu0 %v2362
      %v2430 = vpop.f32.mrb[0].mxu0
      %v2431 = vadd.f32 %v2358, %v2430
      %v2432 = vpop.f32.mrb[0].mxu0
      %2433 = vdwg.mxu0
      %2434 = vst.msk [vmem:[%s569] sm:$0xff] %vm724, %v2431
      %v2435 = vsel %vm1117, %v2431, 0.0
      %v2436 = vsel %vm1117, 0.0, %v2431
      %2441 = vrot.lane.b32.xlu0 %v909, 120
      %v2442 = vpop.permute.xlu0 %2441
      %2443 = vrot.lane.b32.xlu0 %v910, 120
      %v2444 = vpop.permute.xlu0 %2443
      %2445 = vrot.lane.b32.xlu0 %v911, 120
      %v2446 = vpop.permute.xlu0 %2445
      %2447 = vrot.lane.b32.xlu0 %v912, 120
      %v2448 = vpop.permute.xlu0 %2447
      %v2449 = vsel %vm1344, %v2442, 0
      %v2451 = vsel %vm1344, %v2444, 0
      %v2453 = vsel %vm1344, %v2446, 0
      %v2455 = vsel %vm1344, %v2448, 0
      %2457 = vmatprep.subr.mxu0 0.0
      %2458 = vmatpush1.msra.mxu0 %v2436
      %2459 = vmatprep.subr.mxu0 0.0
      %2460 = vmatpush1.msra.mxu0 0.0
      %2461 = vmatprep.subr.mxu0 0.0
      %2462 = vmatpush1.msra.mxu0 0.0
      %2463 = vmatprep.subr.mxu0 0.0
      %2464 = vmatpush1.msra.mxu0 0.0
      %2465 = vmatprep.subr.mxu0 0.0
      %2466 = vmatpush1.msra.mxu0 0.0
      %2467 = vmatprep.subr.mxu0 0.0
      %2468 = vmatpush1.msra.mxu0 0.0
      %2469 = vmatprep.subr.mxu0 0.0
      %2470 = vmatpush1.msra.mxu0 0.0
      %2471 = vmatprep.subr.mxu0 0.0
      %2472 = vmatpush1.msra.mxu0 0.0
      %2473 = vmatprep.subr.mxu0 0.0
      %2474 = vmatpush1.msra.mxu0 0.0
      %2475 = vmatprep.subr.mxu0 0.0
      %2476 = vmatpush1.msra.mxu0 0.0
      %2477 = vmatprep.subr.mxu0 0.0
      %2478 = vmatpush1.msra.mxu0 0.0
      %2479 = vmatprep.subr.mxu0 0.0
      %2480 = vmatpush1.msra.mxu0 0.0
      %2481 = vmatprep.subr.mxu0 0.0
      %2482 = vmatpush1.msra.mxu0 0.0
      %2483 = vmatprep.subr.mxu0 0.0
      %2484 = vmatpush1.msra.mxu0 0.0
      %2485 = vmatprep.subr.mxu0 0.0
      %2486 = vmatpush1.msra.mxu0 0.0
      %2487 = vmatprep.subr.mxu0 0.0
      %2488 = vmatpush1.msra.mxu0 0.0
      %2489 = vmatprep.subr.mxu0 0.0
      %2490 = vmatpush1.msra.mxu0 0.0
      %2491 = vmatprep.subr.mxu0 0.0
      %2492 = vmatpush1.msra.mxu0 0.0
      %2493 = vmatprep.subr.mxu0 0.0
      %2494 = vmatpush1.msra.mxu0 0.0
      %2495 = vmatprep.subr.mxu0 0.0
      %2496 = vmatpush1.msra.mxu0 0.0
      %2497 = vmatprep.subr.mxu0 0.0
      %2498 = vmatpush1.msra.mxu0 0.0
      %2499 = vmatprep.subr.mxu0 0.0
      %2500 = vmatpush1.msra.mxu0 0.0
      %2501 = vmatprep.subr.mxu0 0.0
      %2502 = vmatpush1.msra.mxu0 0.0
      %2503 = vmatprep.subr.mxu0 0.0
      %2504 = vmatpush1.msra.mxu0 0.0
      %2505 = vmatprep.subr.mxu0 0.0
      %2506 = vmatpush1.msra.mxu0 0.0
      %2507 = vmatprep.subr.mxu0 0.0
      %2508 = vmatpush1.msra.mxu0 0.0
      %2509 = vmatprep.subr.mxu0 0.0
      %2510 = vmatpush1.msra.mxu0 0.0
      %2511 = vmatprep.subr.mxu0 0.0
      %2512 = vmatpush1.msra.mxu0 0.0
      %2513 = vmatprep.subr.mxu0 0.0
      %2514 = vmatpush1.msra.mxu0 0.0
      %2515 = vmatprep.subr.mxu0 0.0
      %2516 = vmatpush1.msra.mxu0 0.0
      %2517 = vmatprep.subr.mxu0 0.0
      %2518 = vmatpush1.msra.mxu0 0.0
      %2519 = vmatprep.subr.mxu0 0.0
      %2520 = vmatpush1.msra.mxu0 0.0
      %2521 = vmatprep.mubr.f32.mxu0 0.0
      %2522 = vmatmul.mubr.f32.gmra.mrb[0].mxu0 %v2449
      %v2523 = vpop.f32.mrb[0].mxu0
      %v2524 = vadd.f32 0.0, %v2523
      %v2525 = vpop.f32.mrb[0].mxu0
      %2526 = vmatprep.mubr.f32.mxu0 0.0
      %2527 = vmatmul.mubr.f32.gmra.mrb[0].mxu0 %v2451
      %v2528 = vpop.f32.mrb[0].mxu0
      %v2529 = vadd.f32 0.0, %v2528
      %v2530 = vpop.f32.mrb[0].mxu0
      %2531 = vmatprep.mubr.f32.mxu0 0.0
      %2532 = vmatmul.mubr.f32.gmra.mrb[0].mxu0 %v2453
      %v2533 = vpop.f32.mrb[0].mxu0
      %v2534 = vadd.f32 0.0, %v2533
      %v2535 = vpop.f32.mrb[0].mxu0
      %2536 = vmatprep.mubr.f32.mxu0 0.0
      %2537 = vmatmul.mubr.f32.gmra.mrb[0].mxu0 %v2455
      %v2538 = vpop.f32.mrb[0].mxu0
      %v2539 = vadd.f32 0.0, %v2538
      %v2540 = vpop.f32.mrb[0].mxu0
      %2541 = vdwg.mxu0
      %v2542 = vsel %vm1344, %v909, 0
      %v2544 = vsel %vm1344, %v910, 0
      %v2546 = vsel %vm1344, %v911, 0
      %v2548 = vsel %vm1344, %v912, 0
      %2550 = vmatprep.subr.mxu0 0.0
      %2551 = vmatpush1.msra.mxu0 %v2435
      %2552 = vmatprep.subr.mxu0 0.0
      %2553 = vmatpush1.msra.mxu0 0.0
      %2554 = vmatprep.subr.mxu0 0.0
      %2555 = vmatpush1.msra.mxu0 0.0
      %2556 = vmatprep.subr.mxu0 0.0
      %2557 = vmatpush1.msra.mxu0 0.0
      %2558 = vmatprep.subr.mxu0 0.0
      %2559 = vmatpush1.msra.mxu0 0.0
      %2560 = vmatprep.subr.mxu0 0.0
      %2561 = vmatpush1.msra.mxu0 0.0
      %2562 = vmatprep.subr.mxu0 0.0
      %2563 = vmatpush1.msra.mxu0 0.0
      %2564 = vmatprep.subr.mxu0 0.0
      %2565 = vmatpush1.msra.mxu0 0.0
      %2566 = vmatprep.subr.mxu0 0.0
      %2567 = vmatpush1.msra.mxu0 0.0
      %2568 = vmatprep.subr.mxu0 0.0
      %2569 = vmatpush1.msra.mxu0 0.0
      %2570 = vmatprep.subr.mxu0 0.0
      %2571 = vmatpush1.msra.mxu0 0.0
      %2572 = vmatprep.subr.mxu0 0.0
      %2573 = vmatpush1.msra.mxu0 0.0
      %2574 = vmatprep.subr.mxu0 0.0
      %2575 = vmatpush1.msra.mxu0 0.0
      %2576 = vmatprep.subr.mxu0 0.0
      %2577 = vmatpush1.msra.mxu0 0.0
      %2578 = vmatprep.subr.mxu0 0.0
      %2579 = vmatpush1.msra.mxu0 0.0
      %2580 = vmatprep.subr.mxu0 0.0
      %2581 = vmatpush1.msra.mxu0 0.0
      %2582 = vmatprep.subr.mxu0 0.0
      %2583 = vmatpush1.msra.mxu0 0.0
      %2584 = vmatprep.subr.mxu0 0.0
      %2585 = vmatpush1.msra.mxu0 0.0
      %2586 = vmatprep.subr.mxu0 0.0
      %2587 = vmatpush1.msra.mxu0 0.0
      %2588 = vmatprep.subr.mxu0 0.0
      %2589 = vmatpush1.msra.mxu0 0.0
      %2590 = vmatprep.subr.mxu0 0.0
      %2591 = vmatpush1.msra.mxu0 0.0
      %2592 = vmatprep.subr.mxu0 0.0
      %2593 = vmatpush1.msra.mxu0 0.0
      %2594 = vmatprep.subr.mxu0 0.0
      %2595 = vmatpush1.msra.mxu0 0.0
      %2596 = vmatprep.subr.mxu0 0.0
      %2597 = vmatpush1.msra.mxu0 0.0
      %2598 = vmatprep.subr.mxu0 0.0
      %2599 = vmatpush1.msra.mxu0 0.0
      %2600 = vmatprep.subr.mxu0 0.0
      %2601 = vmatpush1.msra.mxu0 0.0
      %2602 = vmatprep.subr.mxu0 0.0
      %2603 = vmatpush1.msra.mxu0 0.0
      %2604 = vmatprep.subr.mxu0 0.0
      %2605 = vmatpush1.msra.mxu0 0.0
      %2606 = vmatprep.subr.mxu0 0.0
      %2607 = vmatpush1.msra.mxu0 0.0
      %2608 = vmatprep.subr.mxu0 0.0
      %2609 = vmatpush1.msra.mxu0 0.0
      %2610 = vmatprep.subr.mxu0 0.0
      %2611 = vmatpush1.msra.mxu0 0.0
      %2612 = vmatprep.subr.mxu0 0.0
      %2613 = vmatpush1.msra.mxu0 0.0
      %2614 = vmatprep.mubr.f32.mxu0 0.0
      %2615 = vmatmul.mubr.f32.gmra.mrb[0].mxu0 %v2542
      %v2616 = vpop.f32.mrb[0].mxu0
      %v2617 = vadd.f32 %v2524, %v2616
      %v2618 = vpop.f32.mrb[0].mxu0
      %2619 = vmatprep.mubr.f32.mxu0 0.0
      %2620 = vmatmul.mubr.f32.gmra.mrb[0].mxu0 %v2544
      %v2621 = vpop.f32.mrb[0].mxu0
      %v2622 = vadd.f32 %v2529, %v2621
      %v2623 = vpop.f32.mrb[0].mxu0
      %2624 = vmatprep.mubr.f32.mxu0 0.0
      %2625 = vmatmul.mubr.f32.gmra.mrb[0].mxu0 %v2546
      %v2626 = vpop.f32.mrb[0].mxu0
      %v2627 = vadd.f32 %v2534, %v2626
      %v2628 = vpop.f32.mrb[0].mxu0
      %2629 = vmatprep.mubr.f32.mxu0 0.0
      %2630 = vmatmul.mubr.f32.gmra.mrb[0].mxu0 %v2548
      %v2631 = vpop.f32.mrb[0].mxu0
      %v2632 = vadd.f32 %v2539, %v2631
      %v2633 = vpop.f32.mrb[0].mxu0
      %2634 = vdwg.mxu0
      %v2635 = vld [vmem:[%s13] sm:$0xff]
      %v2636 = vld [vmem:[%s13 + $0x8] sm:$0xff]
      %v2637 = vld [vmem:[%s13 + $0x10] sm:$0xff]
      %v2638 = vld [vmem:[%s13 + $0x18] sm:$0xff]
      %v2639 = vld [vmem:[%s14] sm:$0x1]
      %v2641 = vlaneseq
      %v2642 = vshrl.u32 %v2641, 7
      %v2643 = vsub.s32 0, %v2642
      %v2644 = vrot.slane %v2639, %v2643
      %v2647 = vsel %vm724, %v2617, 0
      %v2650 = vsel %vm724, %v2622, 0
      %v2653 = vsel %vm724, %v2627, 0
      %v2656 = vsel %vm724, %v2632, 0
      %2658 = vmatprep.subr.mxu0 0.0
      %2659 = vmatpush1.msra.mxu0 %v2635
      %2660 = vmatprep.subr.mxu0 0.0
      %2661 = vmatpush1.msra.mxu0 %v2636
      %2662 = vmatprep.subr.mxu0 0.0
      %2663 = vmatpush1.msra.mxu0 %v2637
      %2664 = vmatprep.subr.mxu0 0.0
      %2665 = vmatpush1.msra.mxu0 %v2638
      %2666 = vmatprep.subr.mxu0 0.0
      %2667 = vmatpush1.msra.mxu0 0.0
      %2668 = vmatprep.subr.mxu0 0.0
      %2669 = vmatpush1.msra.mxu0 0.0
      %2670 = vmatprep.subr.mxu0 0.0
      %2671 = vmatpush1.msra.mxu0 0.0
      %2672 = vmatprep.subr.mxu0 0.0
      %2673 = vmatpush1.msra.mxu0 0.0
      %2674 = vmatprep.subr.mxu0 0.0
      %2675 = vmatpush1.msra.mxu0 0.0
      %2676 = vmatprep.subr.mxu0 0.0
      %2677 = vmatpush1.msra.mxu0 0.0
      %2678 = vmatprep.subr.mxu0 0.0
      %2679 = vmatpush1.msra.mxu0 0.0
      %2680 = vmatprep.subr.mxu0 0.0
      %2681 = vmatpush1.msra.mxu0 0.0
      %2682 = vmatprep.subr.mxu0 0.0
      %2683 = vmatpush1.msra.mxu0 0.0
      %2684 = vmatprep.subr.mxu0 0.0
      %2685 = vmatpush1.msra.mxu0 0.0
      %2686 = vmatprep.subr.mxu0 0.0
      %2687 = vmatpush1.msra.mxu0 0.0
      %2688 = vmatprep.subr.mxu0 0.0
      %2689 = vmatpush1.msra.mxu0 0.0
      %2690 = vmatprep.subr.mxu0 0.0
      %2691 = vmatpush1.msra.mxu0 0.0
      %2692 = vmatprep.subr.mxu0 0.0
      %2693 = vmatpush1.msra.mxu0 0.0
      %2694 = vmatprep.subr.mxu0 0.0
      %2695 = vmatpush1.msra.mxu0 0.0
      %2696 = vmatprep.subr.mxu0 0.0
      %2697 = vmatpush1.msra.mxu0 0.0
      %2698 = vmatprep.subr.mxu0 0.0
      %2699 = vmatpush1.msra.mxu0 0.0
      %2700 = vmatprep.subr.mxu0 0.0
      %2701 = vmatpush1.msra.mxu0 0.0
      %2702 = vmatprep.subr.mxu0 0.0
      %2703 = vmatpush1.msra.mxu0 0.0
      %2704 = vmatprep.subr.mxu0 0.0
      %2705 = vmatpush1.msra.mxu0 0.0
      %2706 = vmatprep.subr.mxu0 0.0
      %2707 = vmatpush1.msra.mxu0 0.0
      %2708 = vmatprep.subr.mxu0 0.0
      %2709 = vmatpush1.msra.mxu0 0.0
      %2710 = vmatprep.subr.mxu0 0.0
      %2711 = vmatpush1.msra.mxu0 0.0
      %2712 = vmatprep.subr.mxu0 0.0
      %2713 = vmatpush1.msra.mxu0 0.0
      %2714 = vmatprep.subr.mxu0 0.0
      %2715 = vmatpush1.msra.mxu0 0.0
      %2716 = vmatprep.subr.mxu0 0.0
      %2717 = vmatpush1.msra.mxu0 0.0
      %2718 = vmatprep.subr.mxu0 0.0
      %2719 = vmatpush1.msra.mxu0 0.0
      %2720 = vmatprep.subr.mxu0 0.0
      %2721 = vmatpush1.msra.mxu0 0.0
      %2722 = vmatprep.mubr.f32.mxu0 0.0
      %2723 = vmatmul.mubr.f32.gmra.mrb[0].mxu0 %v2647
      %v2724 = vpop.f32.mrb[0].mxu0
      %v2725 = vadd.f32 %v2644, %v2724
      %v2726 = vpop.f32.mrb[0].mxu0
      %2727 = vmatprep.mubr.f32.mxu0 0.0
      %2728 = vmatmul.mubr.f32.gmra.mrb[0].mxu0 %v2650
      %v2729 = vpop.f32.mrb[0].mxu0
      %v2730 = vadd.f32 %v2644, %v2729
      %v2731 = vpop.f32.mrb[0].mxu0
      %2732 = vmatprep.mubr.f32.mxu0 0.0
      %2733 = vmatmul.mubr.f32.gmra.mrb[0].mxu0 %v2653
      %v2734 = vpop.f32.mrb[0].mxu0
      %v2735 = vadd.f32 %v2644, %v2734
      %v2736 = vpop.f32.mrb[0].mxu0
      %2737 = vmatprep.mubr.f32.mxu0 0.0
      %2738 = vmatmul.mubr.f32.gmra.mrb[0].mxu0 %v2656
      %v2739 = vpop.f32.mrb[0].mxu0
      %v2740 = vadd.f32 %v2644, %v2739
      %v2741 = vpop.f32.mrb[0].mxu0
      %2742 = vdwg.mxu0
      %2743 = vst.msk [vmem:[%s561] sm:$0xff] %vm603, %v2725
      %2744 = vst.msk [vmem:[%s561 + $0x8] sm:$0xff] %vm603, %v2730
      %2745 = vst.msk [vmem:[%s561 + $0x10] sm:$0xff] %vm603, %v2735
      %2746 = vst.msk [vmem:[%s561 + $0x18] sm:$0xff] %vm603, %v2740
      %p2747 = scmp.lt.s32.totalorder %s29, 1
      %s2748 = scalar_select %p2747, %s29, 1
      %s2749 = smul.addr %s2748, 4
      %s2750 = smul.addr %s2749, 8
      %s2751 = scalar_lea.vmem %s15, %s2750
      %p2752 = scmp.lt.s32.totalorder %s29, 1
      %s2753 = scalar_select %p2752, %s29, 1
      %s2754 = smul.addr %s2753, 8
      %s2755 = scalar_lea.vmem %s16, %s2754
      %p2756 = scmp.lt.s32.totalorder %s29, 1
      %s2757 = scalar_select %p2756, %s29, 1
      %s2758 = smul.addr %s2757, 8
      %s2759 = scalar_lea.vmem %s17, %s2758
      // Predicated region
      $region81: #{latent_ssm_forward.1} parent=79 // pred_check
        %p2760 = pneg %p367
      $region82: #{latent_ssm_forward.1} parent=79 // pred_check_branch
        %2762 = sbr.rel (%p2760) target = $region84
      $region83: #{latent_ssm_forward.1} parent=79 // pred_region
        _
      $region84: #{latent_ssm_forward.1} parent=79 // pred_fallthru
        _
      // Predicated region
      $region85: #{latent_ssm_forward.1} parent=79 // pred_check
        %p2763 = pneg %p393
      $region86: #{latent_ssm_forward.1} parent=79 // pred_check_branch
        %2765 = sbr.rel (%p2763) target = $region88
      $region87: #{latent_ssm_forward.1} parent=79 // pred_region
        _
      $region88: #{latent_ssm_forward.1} parent=79 // pred_fallthru
        _
      // Predicated region
      $region89: #{latent_ssm_forward.1} parent=79 // pred_check
        %p2766 = pneg %p419
      $region90: #{latent_ssm_forward.1} parent=79 // pred_check_branch
        %2768 = sbr.rel (%p2766) target = $region92
      $region91: #{latent_ssm_forward.1} parent=79 // pred_region
        _
      $region92: #{latent_ssm_forward.1} parent=79 // pred_fallthru
        _
    $region80: #{latent_ssm_forward.1} parent=5 // pred_fallthru
      _
    %p2769 = scmp.le.s32.totalorder 2, %s24
    // Predicated region
    $region93: #{latent_ssm_forward.1} parent=5 // pred_check
      %p2770 = pneg %p2769
    $region94: #{latent_ssm_forward.1} parent=5 // pred_check_branch
      %2772 = sbr.rel (%p2770) target = $region96
    $region95: #{latent_ssm_forward.1} parent=5 // pred_region
      %s2773 = ssub.s32 %s24, 2
      // Predicated region
      $region97: #{latent_ssm_forward.1} parent=95 // pred_check
        %p2774 = pneg %p373
      $region98: #{latent_ssm_forward.1} parent=95 // pred_check_branch
        %2776 = sbr.rel (%p2774) target = $region100
      $region99: #{latent_ssm_forward.1} parent=95 // pred_region
        %p2777 = scmp.lt.s32.totalorder %s30, 1
        %s2778 = scalar_select %p2777, %s30, 1
        %s2779 = smul.addr %s2778, 4
        %s2780 = smul.addr %s2779, 8
        %s2781 = scalar_lea.vmem %s15, %s2780
      $region100: #{latent_ssm_forward.1} parent=95 // pred_fallthru
        _
      // Predicated region
      $region101: #{latent_ssm_forward.1} parent=95 // pred_check
        %p2782 = pneg %p399
      $region102: #{latent_ssm_forward.1} parent=95 // pred_check_branch
        %2784 = sbr.rel (%p2782) target = $region104
      $region103: #{latent_ssm_forward.1} parent=95 // pred_region
        %p2785 = scmp.lt.s32.totalorder %s30, 1
        %s2786 = scalar_select %p2785, %s30, 1
        %s2787 = smul.addr %s2786, 8
        %s2788 = scalar_lea.vmem %s16, %s2787
      $region104: #{latent_ssm_forward.1} parent=95 // pred_fallthru
        _
      // Predicated region
      $region105: #{latent_ssm_forward.1} parent=95 // pred_check
        %p2789 = pneg %p425
      $region106: #{latent_ssm_forward.1} parent=95 // pred_check_branch
        %2791 = sbr.rel (%p2789) target = $region108
      $region107: #{latent_ssm_forward.1} parent=95 // pred_region
        %p2792 = scmp.lt.s32.totalorder %s30, 1
        %s2793 = scalar_select %p2792, %s30, 1
        %s2794 = smul.addr %s2793, 8
        %s2795 = scalar_lea.vmem %s17, %s2794
      $region108: #{latent_ssm_forward.1} parent=95 // pred_fallthru
        _
    $region96: #{latent_ssm_forward.1} parent=5 // pred_fallthru
      _
  $region6: #{latent_ssm_forward.1} parent=0 // loop_footer
    %s28 = sadd.s32 1, %s24
  $region7: #{latent_ssm_forward.1} parent=0 // loop_footer_branch
    %23 = sbr.rel target = $region3
  $region8: #{latent_ssm_forward.1} parent=0 // loop_exit
    _

</llo_original>
